<compile_context>
chip_gen: v7x
topology: tpu7x:2x2x1
jax: 0.10.0
libtpu: 0.0.40
codegen_flags: <defaults>
</compile_context>

<pallas_src>
import functools
import math

import numpy as np
import jax
import jax.numpy as jnp
from jax.experimental import pallas as pl
from jax.experimental.pallas import tpu as pltpu

# ----------------------------------------------------------------------------
# Scaled-down ViTPose config (original: img 256x192, embed 768, depth 12, ...)
# ----------------------------------------------------------------------------
TGT_H, TGT_W = 64, 48          # model input size (keeps 4:3 aspect of 256x192)
PATCH = 16
EMBED = 32
DEPTH = 2
HEADS = 4
DH = EMBED // HEADS
MLP_DIM = 4 * EMBED
DECONV_FILTERS = (32, 32)      # original (256, 256)
OUT_CH = 17
HP, WP = TGT_H // PATCH, TGT_W // PATCH       # patch grid 4 x 3
NP_TOK = HP * WP
HEAT_H, HEAT_W = HP * 4, WP * 4               # heatmap 16 x 12 (orig 64 x 48)
PATCH_DIM = 3 * PATCH * PATCH

MEAN = np.array([0.485, 0.456, 0.406], np.float32) * 255.0
STD = np.array([0.229, 0.224, 0.225], np.float32) * 255.0


# ----------------------------------------------------------------------------
# small in-kernel helpers (operate on VMEM-resident values)
# ----------------------------------------------------------------------------
def _ln(x, g, b, eps=1e-6):
    mean = jnp.mean(x, axis=-1, keepdims=True)
    xc = x - mean
    var = jnp.mean(xc * xc, axis=-1, keepdims=True)
    return xc * jax.lax.rsqrt(var + eps) * g + b


def _gelu(x):
    # TODO(synk): torch nn.GELU uses the exact erf form; tanh approximation
    # used here for a Mosaic-safe (EUP tanh) lowering.
    c = jnp.float32(0.7978845608028654)  # sqrt(2/pi)
    return 0.5 * x * (1.0 + jnp.tanh(c * (x + 0.044715 * x * x * x)))


def _bf16(x):
    return x.astype(jnp.bfloat16)


def _full_spec(a):
    nd = a.ndim
    return pl.BlockSpec(a.shape, lambda *_: (0,) * nd)


# ----------------------------------------------------------------------------
# Pallas kernel 1: fused ViT backbone (one grid step per image)
# ----------------------------------------------------------------------------
def _backbone_kernel(tok_ref, pw_ref, pb_ref, pos_ref,
                     ln1g_ref, ln1b_ref, qkvw_ref, qkvb_ref,
                     projw_ref, projb_ref, ln2g_ref, ln2b_ref,
                     fc1w_ref, fc1b_ref, fc2w_ref, fc2b_ref,
                     lnfg_ref, lnfb_ref, out_ref):
    scale = jnp.float32(1.0 / math.sqrt(DH))
    tok = _bf16(tok_ref[0])                                   # (Np, 768) bf16
    x = jnp.dot(tok, pw_ref[...], preferred_element_type=jnp.float32)
    x = x + pb_ref[...] + pos_ref[...]                        # (Np, EMBED) f32

    for d in range(DEPTH):
        # --- attention ---
        h = _ln(x, ln1g_ref[d], ln1b_ref[d])
        qkv = jnp.dot(_bf16(h), qkvw_ref[d],
                      preferred_element_type=jnp.float32) + qkvb_ref[d]
        heads_out = []
        for hd in range(HEADS):
            q = qkv[:, hd * DH:(hd + 1) * DH] * scale
            k = qkv[:, EMBED + hd * DH:EMBED + (hd + 1) * DH]
            v = qkv[:, 2 * EMBED + hd * DH:2 * EMBED + (hd + 1) * DH]
            s = jax.lax.dot_general(q, k, (((1,), (1,)), ((), ())),
                                    preferred_element_type=jnp.float32)
            s = s - jnp.max(s, axis=-1, keepdims=True)
            p = jnp.exp(s)
            p = p / jnp.sum(p, axis=-1, keepdims=True)
            heads_out.append(jnp.dot(p, v, preferred_element_type=jnp.float32))
        o = jnp.concatenate(heads_out, axis=-1)               # (Np, EMBED)
        attn = jnp.dot(_bf16(o), projw_ref[d],
                       preferred_element_type=jnp.float32) + projb_ref[d]
        x = x + attn

        # --- MLP ---
        h = _ln(x, ln2g_ref[d], ln2b_ref[d])
        h = _gelu(jnp.dot(_bf16(h), fc1w_ref[d],
                          preferred_element_type=jnp.float32) + fc1b_ref[d])
        h = jnp.dot(_bf16(h), fc2w_ref[d],
                    preferred_element_type=jnp.float32) + fc2b_ref[d]
        x = x + h

    out_ref[0] = _ln(x, lnfg_ref[...], lnfb_ref[...])


def backbone_call(tok, prm):
    B = tok.shape[0]
    args = [tok, prm["patch_w"], prm["patch_b"], prm["pos"],
            prm["ln1_g"], prm["ln1_b"], prm["qkv_w"], prm["qkv_b"],
            prm["proj_w"], prm["proj_b"], prm["ln2_g"], prm["ln2_b"],
            prm["fc1_w"], prm["fc1_b"], prm["fc2_w"], prm["fc2_b"],
            prm["lnf_g"], prm["lnf_b"]]
    in_specs = [pl.BlockSpec((1, NP_TOK, PATCH_DIM), lambda i: (i, 0, 0))]
    in_specs += [_full_spec(a) for a in args[1:]]
    return pl.pallas_call(
        _backbone_kernel,
        out_shape=jax.ShapeDtypeStruct((B, NP_TOK, EMBED), jnp.float32),
        grid=(B,),
        in_specs=in_specs,
        out_specs=pl.BlockSpec((1, NP_TOK, EMBED), lambda i: (i, 0, 0)),
        compiler_params=pltpu.CompilerParams(dimension_semantics=("parallel",)),
    )(*args)


# ----------------------------------------------------------------------------
# Pallas kernels 2 & 3: deconv (+BN+ReLU) as sub-pixel matmuls, final 1x1 fused
# ----------------------------------------------------------------------------
def _deconv_kernel(p_ref, w_ref, shift_ref, o_ref):
    y = jnp.dot(_bf16(p_ref[...]), w_ref[...],
                preferred_element_type=jnp.float32)
    o_ref[...] = jnp.maximum(y + shift_ref[...], 0.0)


def deconv_relu_call(patches, W, shift):
    M, K9 = patches.shape
    N = W.shape[1]
    return pl.pallas_call(
        _deconv_kernel,
        out_shape=jax.ShapeDtypeStruct((M, N), jnp.float32),
        grid=(1,),
        in_specs=[pl.BlockSpec((M, K9), lambda i: (0, 0)),
                  pl.BlockSpec(W.shape, lambda i: (0, 0)),
                  pl.BlockSpec(shift.shape, lambda i: (0, 0))],
        out_specs=pl.BlockSpec((M, N), lambda i: (0, 0)),
    )(patches, W, shift)


def _deconv_final_kernel(p_ref, w_ref, shift_ref, fw_ref, fb_ref, o_ref):
    y = jnp.dot(_bf16(p_ref[...]), w_ref[...],
                preferred_element_type=jnp.float32)
    y = jnp.maximum(y + shift_ref[...], 0.0)
    o_ref[...] = jnp.dot(_bf16(y), fw_ref[...],
                         preferred_element_type=jnp.float32) + fb_ref[...]


def deconv_final_call(patches, W, shift, Wf, bf):
    M, K9 = patches.shape
    NO = Wf.shape[1]
    row_split = 2 if M % 16 == 0 else 1          # >=2 grid steps -> both v7x TCs
    tm = M // row_split
    return pl.pallas_call(
        _deconv_final_kernel,
        out_shape=jax.ShapeDtypeStruct((M, NO), jnp.float32),
        grid=(row_split,),
        in_specs=[pl.BlockSpec((tm, K9), lambda i: (i, 0)),
                  pl.BlockSpec(W.shape, lambda i: (0, 0)),
                  pl.BlockSpec(shift.shape, lambda i: (0, 0)),
                  pl.BlockSpec(Wf.shape, lambda i: (0, 0)),
                  pl.BlockSpec(bf.shape, lambda i: (0, 0))],
        out_specs=pl.BlockSpec((tm, NO), lambda i: (i, 0)),
        compiler_params=pltpu.CompilerParams(dimension_semantics=("parallel",)),
    )(patches, W, shift, Wf, bf)


# ----------------------------------------------------------------------------
# Pallas kernel 4: keypoint extraction on a lane-dense (B*K, H*W) heatmap
# (same row/col first-occurrence argmax semantics as the torch double-max)
# ----------------------------------------------------------------------------
def _keypoint_kernel(hm_ref, box_ref, hmap_ref, wmap_ref, out_ref,
                     *, inv_h, inv_w):
    hm = hm_ref[...]                                       # (BK, H*W) f32
    gmax = jnp.max(hm, axis=-1, keepdims=True)             # (BK, 1)
    mask = hm >= gmax
    big = jnp.float32(1e9)
    xi = jnp.min(jnp.where(mask, wmap_ref[...], big), axis=-1, keepdims=True)
    yi = jnp.min(jnp.where(mask, hmap_ref[...], big), axis=-1, keepdims=True)
    x0 = box_ref[:, 0:1]
    y0 = box_ref[:, 1:2]
    x1 = box_ref[:, 2:3]
    y1 = box_ref[:, 3:4]
    px = xi * inv_w * (x1 - x0) + x0
    py = yi * inv_h * (y1 - y0) + y0
    out_ref[...] = jnp.concatenate([px, py, gmax], axis=-1)


def keypoint_call(hm, boxes_bk, hmap, wmap):
    BK, HW = hm.shape
    kern = functools.partial(_keypoint_kernel,
                             inv_h=1.0 / HEAT_H, inv_w=1.0 / HEAT_W)
    return pl.pallas_call(
        kern,
        out_shape=jax.ShapeDtypeStruct((BK, 3), jnp.float32),
        grid=(1,),
        in_specs=[pl.BlockSpec((BK, HW), lambda i: (0, 0)),
                  pl.BlockSpec((BK, 4), lambda i: (0, 0)),
                  pl.BlockSpec((1, HW), lambda i: (0, 0)),
                  pl.BlockSpec((1, HW), lambda i: (0, 0))],
        out_specs=pl.BlockSpec((BK, 3), lambda i: (0, 0)),
    )(hm, boxes_bk, hmap, wmap)


# ----------------------------------------------------------------------------
# XLA glue (all KB-scale): patchify, 3x3 im2col, pixel shuffle
# ----------------------------------------------------------------------------
def _im2col3x3(f):
    """f: (B, H, W, C) -> (B*H*W, 9*C), taps ordered (u, v) row-major."""
    B, H, W, C = f.shape
    fp = jnp.pad(f, ((0, 0), (1, 1), (1, 1), (0, 0)))
    cols = [fp[:, u:u + H, v:v + W, :] for u in range(3) for v in range(3)]
    return jnp.concatenate(cols, axis=-1).reshape(B * H * W, 9 * C)


def _pixel_shuffle(y, B, H, W, C):
    """y: (B*H*W, 4*C) parity-packed (r, c, ch) -> (B, 2H, 2W, C)."""
    y = y.reshape(B, H, W, 2, 2, C).transpose(0, 1, 3, 2, 4, 5)
    return y.reshape(B, 2 * H, 2 * W, C)


# ----------------------------------------------------------------------------
# Full model forward (jitted; 4 pallas_calls total)
# ----------------------------------------------------------------------------
@jax.jit
def model_forward(images, boxes_f, prm):
    B = images.shape[0]
    # patch embed tokens: (B,3,64,48) -> (B, Np, 3*16*16), channel-major per patch
    x = images.reshape(B, 3, HP, PATCH, WP, PATCH)
    tok = x.transpose(0, 2, 4, 1, 3, 5).reshape(B, NP_TOK, PATCH_DIM)

    feat = backbone_call(tok, prm)                          # (B, Np, EMBED)

    # keypoint head: deconv1 -> deconv2 + final 1x1 conv (fused), sub-pixel form
    f0 = feat.reshape(B, HP, WP, EMBED)
    p1 = _im2col3x3(f0)                                     # (B*12, 288)
    y1 = deconv_relu_call(p1, prm["dc1_w"], prm["dc1_shift"])   # (B*12, 128)
    f1 = _pixel_shuffle(y1, B, HP, WP, DECONV_FILTERS[0])   # (B, 8, 6, 32)
    p2 = _im2col3x3(f1)                                     # (B*48, 288)
    heat = deconv_final_call(p2, prm["dc2_w"], prm["dc2_shift"],
                             prm["final_w"], prm["final_b"])    # (B*48, 68)

    H1, W1 = 2 * HP, 2 * WP
    hm = heat.reshape(B, H1, W1, 2, 2, OUT_CH).transpose(0, 5, 1, 3, 2, 4)
    hm = hm.reshape(B * OUT_CH, HEAT_H * HEAT_W)            # (B*17, 192)

    boxes_bk = jnp.repeat(boxes_f, OUT_CH, axis=0)          # (B*17, 4)
    pts = keypoint_call(hm, boxes_bk, prm["hmap"], prm["wmap"])  # (B*17, 3)
    return pts.reshape(B, OUT_CH, 3)                        # (x, y, conf)


# ----------------------------------------------------------------------------
# Host-side preprocessing (per-box crop/pad/resize/normalize, as in torch code)
# ----------------------------------------------------------------------------
def preprocess(img_u8, boxes_ltrb):
    img = np.asarray(img_u8)
    boxes = np.asarray(boxes_ltrb).astype(np.int64)
    boxes = np.clip(boxes, 0, None)
    n = boxes.shape[0]
    padded_boxes = np.zeros_like(boxes)
    images = np.zeros((n, 3, TGT_H, TGT_W), np.float32)
    for i, (x0, y0, x1, y1) in enumerate(boxes):
        x1 = min(img.shape[-1], int(x1))
        y1 = min(img.shape[-2], int(y1))
        x0, y0 = int(x0), int(y0)
        cf = TGT_H / TGT_W * (x1 - x0) / (y1 - y0)
        if cf > 1:
            center = y0 + (y1 - y0) // 2
            length = int(np.rint((y1 - y0) * cf))
            y0n = center - length // 2
            y1n = center + length // 2
            crop = img[:, y0:y1, x0:x1].astype(np.float32)
            crop = np.pad(crop, ((0, 0), (abs(y0n - y0), abs(y1n - y1)), (0, 0)))
            padded_boxes[i] = [x0, y0n, x1, y1n]
        else:
            center = x0 + (x1 - x0) // 2
            length = int(np.rint((x1 - x0) / cf))
            x0n = center - length // 2
            x1n = center + length // 2
            crop = img[:, y0:y1, x0:x1].astype(np.float32)
            crop = np.pad(crop, ((0, 0), (0, 0), (abs(x0n - x0), abs(x1n - x1))))
            padded_boxes[i] = [x0n, y0, x1n, y1]
        # TODO(synk): torchvision F.resize(antialias=True) bilinear; jax.image.resize
        # (linear, antialias) is the closest equivalent, not bit-identical.
        crop_r = jax.image.resize(jnp.asarray(crop), (3, TGT_H, TGT_W),
                                  method="linear", antialias=True)
        crop_r = (crop_r - MEAN[:, None, None]) / STD[:, None, None]
        images[i] = np.asarray(crop_r, np.float32)
    return jnp.asarray(images), jnp.asarray(padded_boxes)


def vitpose_forward(img, boxes_ltrb, prm):
    assert img.ndim == 3
    assert img.dtype == jnp.uint8
    assert boxes_ltrb.ndim == 2 and boxes_ltrb.shape[1] == 4
    images, padded_boxes = preprocess(img, boxes_ltrb)
    return model_forward(images, padded_boxes.astype(jnp.float32), prm)


# ----------------------------------------------------------------------------
# Deterministic synthetic parameters + one-time packing for the kernels
# ----------------------------------------------------------------------------
def init_params(key):
    keys = iter(jax.random.split(key, 64))

    def nrm(shape, scale=0.05):
        return (scale * jax.random.normal(next(keys), shape)).astype(jnp.float32)

    p = {
        "patch_w": nrm((PATCH_DIM, EMBED)),
        "patch_b": nrm((EMBED,)),
        "pos_embed": nrm((NP_TOK, EMBED)),
        "lnf_g": 1.0 + nrm((EMBED,)),
        "lnf_b": nrm((EMBED,)),
    }
    blocks = []
    for _ in range(DEPTH):
        blocks.append(dict(
            ln1_g=1.0 + nrm((EMBED,)), ln1_b=nrm((EMBED,)),
            qkv_w=nrm((EMBED, 3 * EMBED)), qkv_b=nrm((3 * EMBED,)),
            proj_w=nrm((EMBED, EMBED)), proj_b=nrm((EMBED,)),
            ln2_g=1.0 + nrm((EMBED,)), ln2_b=nrm((EMBED,)),
            fc1_w=nrm((EMBED, MLP_DIM)), fc1_b=nrm((MLP_DIM,)),
            fc2_w=nrm((MLP_DIM, EMBED)), fc2_b=nrm((EMBED,)),
        ))
    p["blocks"] = blocks
    deconvs = []
    cin = EMBED
    for cout in DECONV_FILTERS:
        deconvs.append(dict(
            w=nrm((cin, cout, 4, 4)),
            bn_g=1.0 + nrm((cout,)), bn_b=nrm((cout,)),
            bn_mean=nrm((cout,)), bn_var=1.0 + jnp.abs(nrm((cout,))),
        ))
        cin = cout
    p["deconvs"] = deconvs
    p["final_w"] = nrm((cin, OUT_CH))
    p["final_b"] = nrm((OUT_CH,))
    return p


def _pack_deconv(w, bn_g, bn_b, bn_mean, bn_var, eps=1e-5):
    """ConvTranspose2d(k=4,s=2,p=1,bias=False)+BN(eval) -> (9*Cin, 4*Cout) matmul.

    out[2m+r, 2n+c, co] = sum_{u,v} xp[m+u, n+v, ci] * w[ci, co, 3+r-2u, 3+c-2v]
    with xp the 1-pixel zero-padded input; column order is (r, c, co).
    """
    w_np = np.asarray(w, np.float32)                      # (Cin, Cout, 4, 4)
    cin, cout = w_np.shape[0], w_np.shape[1]
    Wp_ = np.zeros((3, 3, cin, 2, 2, cout), np.float32)
    for r in range(2):
        for c in range(2):
            for u in range(3):
                for v in range(3):
                    kh = 3 + r - 2 * u
                    kw = 3 + c - 2 * v
                    if 0 <= kh < 4 and 0 <= kw < 4:
                        Wp_[u, v, :, r, c, :] = w_np[:, :, kh, kw]
    W = Wp_.reshape(9 * cin, 4 * cout)
    scale = np.asarray(bn_g) / np.sqrt(np.asarray(bn_var) + eps)
    shift = np.asarray(bn_b) - np.asarray(bn_mean) * scale
    W = W * np.tile(scale, 4)[None, :]                    # fold BN scale
    return (jnp.asarray(W, jnp.bfloat16),
            jnp.asarray(np.tile(shift, 4).reshape(1, 4 * cout), jnp.float32))


def prepare_params(raw):
    prm = {}
    prm["patch_w"] = jnp.asarray(raw["patch_w"], jnp.bfloat16)
    prm["patch_b"] = jnp.asarray(raw["patch_b"]).reshape(1, EMBED)
    prm["pos"] = jnp.asarray(raw["pos_embed"])
    prm["lnf_g"] = jnp.asarray(raw["lnf_g"]).reshape(1, EMBED)
    prm["lnf_b"] = jnp.asarray(raw["lnf_b"]).reshape(1, EMBED)

    def stack(name):
        return jnp.stack([jnp.asarray(b[name]) for b in raw["blocks"]], axis=0)

    prm["ln1_g"] = stack("ln1_g").reshape(DEPTH, 1, EMBED)
    prm["ln1_b"] = stack("ln1_b").reshape(DEPTH, 1, EMBED)
    prm["ln2_g"] = stack("ln2_g").reshape(DEPTH, 1, EMBED)
    prm["ln2_b"] = stack("ln2_b").reshape(DEPTH, 1, EMBED)
    prm["qkv_w"] = stack("qkv_w").astype(jnp.bfloat16)            # (D, 32, 96)
    prm["qkv_b"] = stack("qkv_b").reshape(DEPTH, 1, 3 * EMBED)
    prm["proj_w"] = stack("proj_w").astype(jnp.bfloat16)          # (D, 32, 32)
    prm["proj_b"] = stack("proj_b").reshape(DEPTH, 1, EMBED)
    prm["fc1_w"] = stack("fc1_w").astype(jnp.bfloat16)
    prm["fc1_b"] = stack("fc1_b").reshape(DEPTH, 1, MLP_DIM)
    prm["fc2_w"] = stack("fc2_w").astype(jnp.bfloat16)
    prm["fc2_b"] = stack("fc2_b").reshape(DEPTH, 1, EMBED)

    for i, d in enumerate(raw["deconvs"]):
        W, shift = _pack_deconv(d["w"], d["bn_g"], d["bn_b"],
                                d["bn_mean"], d["bn_var"])
        prm[f"dc{i + 1}_w"] = W
        prm[f"dc{i + 1}_shift"] = shift

    # final 1x1 conv applied per parity plane -> block-diagonal (4*C, 4*17)
    fw = np.asarray(raw["final_w"], np.float32)
    fb = np.asarray(raw["final_b"], np.float32)
    C2 = DECONV_FILTERS[1]
    Wf = np.zeros((4 * C2, 4 * OUT_CH), np.float32)
    for pp in range(4):
        Wf[pp * C2:(pp + 1) * C2, pp * OUT_CH:(pp + 1) * OUT_CH] = fw
    prm["final_w"] = jnp.asarray(Wf, jnp.bfloat16)
    prm["final_b"] = jnp.asarray(np.tile(fb, 4).reshape(1, 4 * OUT_CH), jnp.float32)

    # flat-heatmap coordinate maps for the keypoint kernel
    idx = np.arange(HEAT_H * HEAT_W)
    prm["hmap"] = jnp.asarray((idx // HEAT_W).astype(np.float32).reshape(1, -1))
    prm["wmap"] = jnp.asarray((idx % HEAT_W).astype(np.float32).reshape(1, -1))
    return prm


if __name__ == "__main__":
    key = jax.random.PRNGKey(0)
    k_param, k_img = jax.random.split(key)
    params = prepare_params(init_params(k_param))

    # deterministic synthetic "image" (uint8, CHW) and boxes (LTRB)
    img = jax.random.randint(k_img, (3, 40, 40), 0, 256,
                             dtype=jnp.int32).astype(jnp.uint8)
    boxes_ltrb = jnp.array([[4, 2, 20, 38],     # correction_factor < 1 branch
                            [8, 4, 36, 30]],    # correction_factor > 1 branch
                           dtype=jnp.int32)

    pts = vitpose_forward(img, boxes_ltrb, params)
    pts = jax.block_until_ready(pts)
    assert pts.shape == (boxes_ltrb.shape[0], OUT_CH, 3)
    assert pts.dtype == jnp.float32
    assert bool(jnp.all(jnp.isfinite(pts)))
    print("KERNEL_OK")
</pallas_src>

<mosaic_0001>
module attributes {stable_mosaic.version = 11 : i64} {
  func.func @_backbone_kernel(%arg0: i32, %arg1: memref<1x12x768xf32, #tpu.memory_space<vmem>>, %arg2: memref<768x32xbf16, #tpu.memory_space<vmem>>, %arg3: memref<1x32xf32, #tpu.memory_space<vmem>>, %arg4: memref<12x32xf32, #tpu.memory_space<vmem>>, %arg5: memref<2x1x32xf32, #tpu.memory_space<vmem>>, %arg6: memref<2x1x32xf32, #tpu.memory_space<vmem>>, %arg7: memref<2x32x96xbf16, #tpu.memory_space<vmem>>, %arg8: memref<2x1x96xf32, #tpu.memory_space<vmem>>, %arg9: memref<2x32x32xbf16, #tpu.memory_space<vmem>>, %arg10: memref<2x1x32xf32, #tpu.memory_space<vmem>>, %arg11: memref<2x1x32xf32, #tpu.memory_space<vmem>>, %arg12: memref<2x1x32xf32, #tpu.memory_space<vmem>>, %arg13: memref<2x32x128xbf16, #tpu.memory_space<vmem>>, %arg14: memref<2x1x128xf32, #tpu.memory_space<vmem>>, %arg15: memref<2x128x32xbf16, #tpu.memory_space<vmem>>, %arg16: memref<2x1x32xf32, #tpu.memory_space<vmem>>, %arg17: memref<1x32xf32, #tpu.memory_space<vmem>>, %arg18: memref<1x32xf32, #tpu.memory_space<vmem>>, %arg19: memref<1x12x32xf32, #tpu.memory_space<vmem>>) attributes {dimension_semantics = [#tpu.dimension_semantics<parallel>], iteration_bounds = array<i64: 2>, scalar_prefetch = 0 : i64, scratch_operands = 0 : i64, tpu.core_type = #tpu.core_type<tc>, window_params = [{transform_indices = @transform_0, window_bounds = array<i64: 1, 12, 768>}, {pipeline_mode = #tpu.pipeline_mode<synchronous>, transform_indices = @transform_1, window_bounds = array<i64: 768, 32>}, {pipeline_mode = #tpu.pipeline_mode<synchronous>, transform_indices = @transform_2, window_bounds = array<i64: 1, 32>}, {pipeline_mode = #tpu.pipeline_mode<synchronous>, transform_indices = @transform_3, window_bounds = array<i64: 12, 32>}, {pipeline_mode = #tpu.pipeline_mode<synchronous>, transform_indices = @transform_4, window_bounds = array<i64: 2, 1, 32>}, {pipeline_mode = #tpu.pipeline_mode<synchronous>, transform_indices = @transform_5, window_bounds = array<i64: 2, 1, 32>}, {pipeline_mode = #tpu.pipeline_mode<synchronous>, transform_indices = @transform_6, window_bounds = array<i64: 2, 32, 96>}, {pipeline_mode = #tpu.pipeline_mode<synchronous>, transform_indices = @transform_7, window_bounds = array<i64: 2, 1, 96>}, {pipeline_mode = #tpu.pipeline_mode<synchronous>, transform_indices = @transform_8, window_bounds = array<i64: 2, 32, 32>}, {pipeline_mode = #tpu.pipeline_mode<synchronous>, transform_indices = @transform_9, window_bounds = array<i64: 2, 1, 32>}, {pipeline_mode = #tpu.pipeline_mode<synchronous>, transform_indices = @transform_10, window_bounds = array<i64: 2, 1, 32>}, {pipeline_mode = #tpu.pipeline_mode<synchronous>, transform_indices = @transform_11, window_bounds = array<i64: 2, 1, 32>}, {pipeline_mode = #tpu.pipeline_mode<synchronous>, transform_indices = @transform_12, window_bounds = array<i64: 2, 32, 128>}, {pipeline_mode = #tpu.pipeline_mode<synchronous>, transform_indices = @transform_13, window_bounds = array<i64: 2, 1, 128>}, {pipeline_mode = #tpu.pipeline_mode<synchronous>, transform_indices = @transform_14, window_bounds = array<i64: 2, 128, 32>}, {pipeline_mode = #tpu.pipeline_mode<synchronous>, transform_indices = @transform_15, window_bounds = array<i64: 2, 1, 32>}, {pipeline_mode = #tpu.pipeline_mode<synchronous>, transform_indices = @transform_16, window_bounds = array<i64: 1, 32>}, {pipeline_mode = #tpu.pipeline_mode<synchronous>, transform_indices = @transform_17, window_bounds = array<i64: 1, 32>}, {transform_indices = @transform_18, window_bounds = array<i64: 1, 12, 32>}]} {
    %c0 = arith.constant 0 : index
    %c0_0 = arith.constant 0 : index
    %c0_1 = arith.constant 0 : index
    %0 = vector.load %arg1[%c0, %c0_0, %c0_1] : memref<1x12x768xf32, #tpu.memory_space<vmem>>, vector<1x12x768xf32>
    %1 = vector.shape_cast %0 : vector<1x12x768xf32> to vector<12x768xf32>
    %2 = arith.truncf %1 : vector<12x768xf32> to vector<12x768xbf16>
    %c0_2 = arith.constant 0 : index
    %c0_3 = arith.constant 0 : index
    %3 = vector.load %arg2[%c0_2, %c0_3] : memref<768x32xbf16, #tpu.memory_space<vmem>>, vector<768x32xbf16>
    %cst = arith.constant dense<0.000000e+00> : vector<12x32xf32>
    %4 = tpu.matmul %2, %3, %cst {dimension_numbers = #tpu.dot_dimension_numbers<[1], [0], [0], [1], [0, 0, 1, 1], [], []>} : vector<12x768xbf16>, vector<768x32xbf16>, vector<12x32xf32> -> vector<12x32xf32>
    %c0_4 = arith.constant 0 : index
    %c0_5 = arith.constant 0 : index
    %5 = vector.load %arg3[%c0_4, %c0_5] : memref<1x32xf32, #tpu.memory_space<vmem>>, vector<1x32xf32>
    %6 = vector.broadcast %5 : vector<1x32xf32> to vector<12x32xf32>
    %7 = arith.addf %4, %6 : vector<12x32xf32>
    %c0_6 = arith.constant 0 : index
    %c0_7 = arith.constant 0 : index
    %8 = vector.load %arg4[%c0_6, %c0_7] : memref<12x32xf32, #tpu.memory_space<vmem>>, vector<12x32xf32>
    %9 = arith.addf %7, %8 : vector<12x32xf32>
    %c0_8 = arith.constant 0 : index
    %c0_9 = arith.constant 0 : index
    %c0_10 = arith.constant 0 : index
    %10 = vector.load %arg5[%c0_8, %c0_9, %c0_10] : memref<2x1x32xf32, #tpu.memory_space<vmem>>, vector<1x1x32xf32>
    %11 = vector.shape_cast %10 : vector<1x1x32xf32> to vector<1x32xf32>
    %c0_11 = arith.constant 0 : index
    %c0_12 = arith.constant 0 : index
    %c0_13 = arith.constant 0 : index
    %12 = vector.load %arg6[%c0_11, %c0_12, %c0_13] : memref<2x1x32xf32, #tpu.memory_space<vmem>>, vector<1x1x32xf32>
    %13 = vector.shape_cast %12 : vector<1x1x32xf32> to vector<1x32xf32>
    %cst_14 = arith.constant dense<0.000000e+00> : vector<12xf32>
    %14 = vector.multi_reduction <add>, %9, %cst_14 [1] : vector<12x32xf32> to vector<12xf32>
    %15 = vector.shape_cast %14 : vector<12xf32> to vector<12x1xf32>
    %cst_15 = arith.constant 3.200000e+01 : f32
    %16 = vector.broadcast %cst_15 : f32 to vector<12x1xf32>
    %17 = arith.divf %15, %16 : vector<12x1xf32>
    %18 = vector.broadcast %17 : vector<12x1xf32> to vector<12x32xf32>
    %19 = arith.subf %9, %18 : vector<12x32xf32>
    %20 = arith.mulf %19, %19 : vector<12x32xf32>
    %cst_16 = arith.constant dense<0.000000e+00> : vector<12xf32>
    %21 = vector.multi_reduction <add>, %20, %cst_16 [1] : vector<12x32xf32> to vector<12xf32>
    %22 = vector.shape_cast %21 : vector<12xf32> to vector<12x1xf32>
    %cst_17 = arith.constant 3.200000e+01 : f32
    %23 = vector.broadcast %cst_17 : f32 to vector<12x1xf32>
    %24 = arith.divf %22, %23 : vector<12x1xf32>
    %cst_18 = arith.constant 9.99999997E-7 : f32
    %25 = vector.broadcast %cst_18 : f32 to vector<12x1xf32>
    %26 = arith.addf %24, %25 : vector<12x1xf32>
    %27 = math.rsqrt %26 : vector<12x1xf32>
    %28 = vector.broadcast %27 : vector<12x1xf32> to vector<12x32xf32>
    %29 = arith.mulf %19, %28 : vector<12x32xf32>
    %30 = vector.broadcast %11 : vector<1x32xf32> to vector<12x32xf32>
    %31 = arith.mulf %29, %30 : vector<12x32xf32>
    %32 = vector.broadcast %13 : vector<1x32xf32> to vector<12x32xf32>
    %33 = arith.addf %31, %32 : vector<12x32xf32>
    %34 = arith.truncf %33 : vector<12x32xf32> to vector<12x32xbf16>
    %c0_19 = arith.constant 0 : index
    %c0_20 = arith.constant 0 : index
    %c0_21 = arith.constant 0 : index
    %35 = vector.load %arg7[%c0_19, %c0_20, %c0_21] : memref<2x32x96xbf16, #tpu.memory_space<vmem>>, vector<1x32x96xbf16>
    %36 = vector.shape_cast %35 : vector<1x32x96xbf16> to vector<32x96xbf16>
    %cst_22 = arith.constant dense<0.000000e+00> : vector<12x96xf32>
    %37 = tpu.matmul %34, %36, %cst_22 {dimension_numbers = #tpu.dot_dimension_numbers<[1], [0], [0], [1], [0, 0, 1, 1], [], []>} : vector<12x32xbf16>, vector<32x96xbf16>, vector<12x96xf32> -> vector<12x96xf32>
    %c0_23 = arith.constant 0 : index
    %c0_24 = arith.constant 0 : index
    %c0_25 = arith.constant 0 : index
    %38 = vector.load %arg8[%c0_23, %c0_24, %c0_25] : memref<2x1x96xf32, #tpu.memory_space<vmem>>, vector<1x1x96xf32>
    %39 = vector.shape_cast %38 : vector<1x1x96xf32> to vector<1x96xf32>
    %40 = vector.broadcast %39 : vector<1x96xf32> to vector<12x96xf32>
    %41 = arith.addf %37, %40 : vector<12x96xf32>
    %42 = vector.extract_strided_slice %41 {offsets = [0, 0], sizes = [12, 8], strides = [1, 1]} : vector<12x96xf32> to vector<12x8xf32>
    %cst_26 = arith.constant 0.353553385 : f32
    %43 = vector.broadcast %cst_26 : f32 to vector<12x8xf32>
    %44 = arith.mulf %42, %43 : vector<12x8xf32>
    %45 = vector.extract_strided_slice %41 {offsets = [0, 32], sizes = [12, 8], strides = [1, 1]} : vector<12x96xf32> to vector<12x8xf32>
    %46 = vector.extract_strided_slice %41 {offsets = [0, 64], sizes = [12, 8], strides = [1, 1]} : vector<12x96xf32> to vector<12x8xf32>
    %cst_27 = arith.constant dense<0.000000e+00> : vector<12x12xf32>
    %47 = tpu.matmul %44, %45, %cst_27 {dimension_numbers = #tpu.dot_dimension_numbers<[1], [1], [0], [0], [0, 0, 1, 0], [], []>} : vector<12x8xf32>, vector<12x8xf32>, vector<12x12xf32> -> vector<12x12xf32>
    %cst_28 = arith.constant dense<0xFF800000> : vector<12xf32>
    %48 = vector.multi_reduction <maximumf>, %47, %cst_28 [1] : vector<12x12xf32> to vector<12xf32>
    %49 = vector.shape_cast %48 : vector<12xf32> to vector<12x1xf32>
    %50 = vector.broadcast %49 : vector<12x1xf32> to vector<12x12xf32>
    %51 = arith.subf %47, %50 : vector<12x12xf32>
    %52 = math.exp %51 : vector<12x12xf32>
    %cst_29 = arith.constant dense<0.000000e+00> : vector<12xf32>
    %53 = vector.multi_reduction <add>, %52, %cst_29 [1] : vector<12x12xf32> to vector<12xf32>
    %54 = vector.shape_cast %53 : vector<12xf32> to vector<12x1xf32>
    %55 = vector.broadcast %54 : vector<12x1xf32> to vector<12x12xf32>
    %56 = arith.divf %52, %55 : vector<12x12xf32>
    %cst_30 = arith.constant dense<0.000000e+00> : vector<12x8xf32>
    %57 = tpu.matmul %56, %46, %cst_30 {dimension_numbers = #tpu.dot_dimension_numbers<[1], [0], [0], [1], [0, 0, 1, 1], [], []>} : vector<12x12xf32>, vector<12x8xf32>, vector<12x8xf32> -> vector<12x8xf32>
    %58 = vector.extract_strided_slice %41 {offsets = [0, 8], sizes = [12, 8], strides = [1, 1]} : vector<12x96xf32> to vector<12x8xf32>
    %cst_31 = arith.constant 0.353553385 : f32
    %59 = vector.broadcast %cst_31 : f32 to vector<12x8xf32>
    %60 = arith.mulf %58, %59 : vector<12x8xf32>
    %61 = vector.extract_strided_slice %41 {offsets = [0, 40], sizes = [12, 8], strides = [1, 1]} : vector<12x96xf32> to vector<12x8xf32>
    %62 = vector.extract_strided_slice %41 {offsets = [0, 72], sizes = [12, 8], strides = [1, 1]} : vector<12x96xf32> to vector<12x8xf32>
    %cst_32 = arith.constant dense<0.000000e+00> : vector<12x12xf32>
    %63 = tpu.matmul %60, %61, %cst_32 {dimension_numbers = #tpu.dot_dimension_numbers<[1], [1], [0], [0], [0, 0, 1, 0], [], []>} : vector<12x8xf32>, vector<12x8xf32>, vector<12x12xf32> -> vector<12x12xf32>
    %cst_33 = arith.constant dense<0xFF800000> : vector<12xf32>
    %64 = vector.multi_reduction <maximumf>, %63, %cst_33 [1] : vector<12x12xf32> to vector<12xf32>
    %65 = vector.shape_cast %64 : vector<12xf32> to vector<12x1xf32>
    %66 = vector.broadcast %65 : vector<12x1xf32> to vector<12x12xf32>
    %67 = arith.subf %63, %66 : vector<12x12xf32>
    %68 = math.exp %67 : vector<12x12xf32>
    %cst_34 = arith.constant dense<0.000000e+00> : vector<12xf32>
    %69 = vector.multi_reduction <add>, %68, %cst_34 [1] : vector<12x12xf32> to vector<12xf32>
    %70 = vector.shape_cast %69 : vector<12xf32> to vector<12x1xf32>
    %71 = vector.broadcast %70 : vector<12x1xf32> to vector<12x12xf32>
    %72 = arith.divf %68, %71 : vector<12x12xf32>
    %cst_35 = arith.constant dense<0.000000e+00> : vector<12x8xf32>
    %73 = tpu.matmul %72, %62, %cst_35 {dimension_numbers = #tpu.dot_dimension_numbers<[1], [0], [0], [1], [0, 0, 1, 1], [], []>} : vector<12x12xf32>, vector<12x8xf32>, vector<12x8xf32> -> vector<12x8xf32>
    %74 = vector.extract_strided_slice %41 {offsets = [0, 16], sizes = [12, 8], strides = [1, 1]} : vector<12x96xf32> to vector<12x8xf32>
    %cst_36 = arith.constant 0.353553385 : f32
    %75 = vector.broadcast %cst_36 : f32 to vector<12x8xf32>
    %76 = arith.mulf %74, %75 : vector<12x8xf32>
    %77 = vector.extract_strided_slice %41 {offsets = [0, 48], sizes = [12, 8], strides = [1, 1]} : vector<12x96xf32> to vector<12x8xf32>
    %78 = vector.extract_strided_slice %41 {offsets = [0, 80], sizes = [12, 8], strides = [1, 1]} : vector<12x96xf32> to vector<12x8xf32>
    %cst_37 = arith.constant dense<0.000000e+00> : vector<12x12xf32>
    %79 = tpu.matmul %76, %77, %cst_37 {dimension_numbers = #tpu.dot_dimension_numbers<[1], [1], [0], [0], [0, 0, 1, 0], [], []>} : vector<12x8xf32>, vector<12x8xf32>, vector<12x12xf32> -> vector<12x12xf32>
    %cst_38 = arith.constant dense<0xFF800000> : vector<12xf32>
    %80 = vector.multi_reduction <maximumf>, %79, %cst_38 [1] : vector<12x12xf32> to vector<12xf32>
    %81 = vector.shape_cast %80 : vector<12xf32> to vector<12x1xf32>
    %82 = vector.broadcast %81 : vector<12x1xf32> to vector<12x12xf32>
    %83 = arith.subf %79, %82 : vector<12x12xf32>
    %84 = math.exp %83 : vector<12x12xf32>
    %cst_39 = arith.constant dense<0.000000e+00> : vector<12xf32>
    %85 = vector.multi_reduction <add>, %84, %cst_39 [1] : vector<12x12xf32> to vector<12xf32>
    %86 = vector.shape_cast %85 : vector<12xf32> to vector<12x1xf32>
    %87 = vector.broadcast %86 : vector<12x1xf32> to vector<12x12xf32>
    %88 = arith.divf %84, %87 : vector<12x12xf32>
    %cst_40 = arith.constant dense<0.000000e+00> : vector<12x8xf32>
    %89 = tpu.matmul %88, %78, %cst_40 {dimension_numbers = #tpu.dot_dimension_numbers<[1], [0], [0], [1], [0, 0, 1, 1], [], []>} : vector<12x12xf32>, vector<12x8xf32>, vector<12x8xf32> -> vector<12x8xf32>
    %90 = vector.extract_strided_slice %41 {offsets = [0, 24], sizes = [12, 8], strides = [1, 1]} : vector<12x96xf32> to vector<12x8xf32>
    %cst_41 = arith.constant 0.353553385 : f32
    %91 = vector.broadcast %cst_41 : f32 to vector<12x8xf32>
    %92 = arith.mulf %90, %91 : vector<12x8xf32>
    %93 = vector.extract_strided_slice %41 {offsets = [0, 56], sizes = [12, 8], strides = [1, 1]} : vector<12x96xf32> to vector<12x8xf32>
    %94 = vector.extract_strided_slice %41 {offsets = [0, 88], sizes = [12, 8], strides = [1, 1]} : vector<12x96xf32> to vector<12x8xf32>
    %cst_42 = arith.constant dense<0.000000e+00> : vector<12x12xf32>
    %95 = tpu.matmul %92, %93, %cst_42 {dimension_numbers = #tpu.dot_dimension_numbers<[1], [1], [0], [0], [0, 0, 1, 0], [], []>} : vector<12x8xf32>, vector<12x8xf32>, vector<12x12xf32> -> vector<12x12xf32>
    %cst_43 = arith.constant dense<0xFF800000> : vector<12xf32>
    %96 = vector.multi_reduction <maximumf>, %95, %cst_43 [1] : vector<12x12xf32> to vector<12xf32>
    %97 = vector.shape_cast %96 : vector<12xf32> to vector<12x1xf32>
    %98 = vector.broadcast %97 : vector<12x1xf32> to vector<12x12xf32>
    %99 = arith.subf %95, %98 : vector<12x12xf32>
    %100 = math.exp %99 : vector<12x12xf32>
    %cst_44 = arith.constant dense<0.000000e+00> : vector<12xf32>
    %101 = vector.multi_reduction <add>, %100, %cst_44 [1] : vector<12x12xf32> to vector<12xf32>
    %102 = vector.shape_cast %101 : vector<12xf32> to vector<12x1xf32>
    %103 = vector.broadcast %102 : vector<12x1xf32> to vector<12x12xf32>
    %104 = arith.divf %100, %103 : vector<12x12xf32>
    %cst_45 = arith.constant dense<0.000000e+00> : vector<12x8xf32>
    %105 = tpu.matmul %104, %94, %cst_45 {dimension_numbers = #tpu.dot_dimension_numbers<[1], [0], [0], [1], [0, 0, 1, 1], [], []>} : vector<12x12xf32>, vector<12x8xf32>, vector<12x8xf32> -> vector<12x8xf32>
    %106 = tpu.concatenate %57, %73, %89, %105 in 1 : vector<12x8xf32>, vector<12x8xf32>, vector<12x8xf32>, vector<12x8xf32> -> vector<12x32xf32>
    %107 = arith.truncf %106 : vector<12x32xf32> to vector<12x32xbf16>
    %c0_46 = arith.constant 0 : index
    %c0_47 = arith.constant 0 : index
    %c0_48 = arith.constant 0 : index
    %108 = vector.load %arg9[%c0_46, %c0_47, %c0_48] : memref<2x32x32xbf16, #tpu.memory_space<vmem>>, vector<1x32x32xbf16>
    %109 = vector.shape_cast %108 : vector<1x32x32xbf16> to vector<32x32xbf16>
    %cst_49 = arith.constant dense<0.000000e+00> : vector<12x32xf32>
    %110 = tpu.matmul %107, %109, %cst_49 {dimension_numbers = #tpu.dot_dimension_numbers<[1], [0], [0], [1], [0, 0, 1, 1], [], []>} : vector<12x32xbf16>, vector<32x32xbf16>, vector<12x32xf32> -> vector<12x32xf32>
    %c0_50 = arith.constant 0 : index
    %c0_51 = arith.constant 0 : index
    %c0_52 = arith.constant 0 : index
    %111 = vector.load %arg10[%c0_50, %c0_51, %c0_52] : memref<2x1x32xf32, #tpu.memory_space<vmem>>, vector<1x1x32xf32>
    %112 = vector.shape_cast %111 : vector<1x1x32xf32> to vector<1x32xf32>
    %113 = vector.broadcast %112 : vector<1x32xf32> to vector<12x32xf32>
    %114 = arith.addf %110, %113 : vector<12x32xf32>
    %115 = arith.addf %9, %114 : vector<12x32xf32>
    %c0_53 = arith.constant 0 : index
    %c0_54 = arith.constant 0 : index
    %c0_55 = arith.constant 0 : index
    %116 = vector.load %arg11[%c0_53, %c0_54, %c0_55] : memref<2x1x32xf32, #tpu.memory_space<vmem>>, vector<1x1x32xf32>
    %117 = vector.shape_cast %116 : vector<1x1x32xf32> to vector<1x32xf32>
    %c0_56 = arith.constant 0 : index
    %c0_57 = arith.constant 0 : index
    %c0_58 = arith.constant 0 : index
    %118 = vector.load %arg12[%c0_56, %c0_57, %c0_58] : memref<2x1x32xf32, #tpu.memory_space<vmem>>, vector<1x1x32xf32>
    %119 = vector.shape_cast %118 : vector<1x1x32xf32> to vector<1x32xf32>
    %cst_59 = arith.constant dense<0.000000e+00> : vector<12xf32>
    %120 = vector.multi_reduction <add>, %115, %cst_59 [1] : vector<12x32xf32> to vector<12xf32>
    %121 = vector.shape_cast %120 : vector<12xf32> to vector<12x1xf32>
    %cst_60 = arith.constant 3.200000e+01 : f32
    %122 = vector.broadcast %cst_60 : f32 to vector<12x1xf32>
    %123 = arith.divf %121, %122 : vector<12x1xf32>
    %124 = vector.broadcast %123 : vector<12x1xf32> to vector<12x32xf32>
    %125 = arith.subf %115, %124 : vector<12x32xf32>
    %126 = arith.mulf %125, %125 : vector<12x32xf32>
    %cst_61 = arith.constant dense<0.000000e+00> : vector<12xf32>
    %127 = vector.multi_reduction <add>, %126, %cst_61 [1] : vector<12x32xf32> to vector<12xf32>
    %128 = vector.shape_cast %127 : vector<12xf32> to vector<12x1xf32>
    %cst_62 = arith.constant 3.200000e+01 : f32
    %129 = vector.broadcast %cst_62 : f32 to vector<12x1xf32>
    %130 = arith.divf %128, %129 : vector<12x1xf32>
    %cst_63 = arith.constant 9.99999997E-7 : f32
    %131 = vector.broadcast %cst_63 : f32 to vector<12x1xf32>
    %132 = arith.addf %130, %131 : vector<12x1xf32>
    %133 = math.rsqrt %132 : vector<12x1xf32>
    %134 = vector.broadcast %133 : vector<12x1xf32> to vector<12x32xf32>
    %135 = arith.mulf %125, %134 : vector<12x32xf32>
    %136 = vector.broadcast %117 : vector<1x32xf32> to vector<12x32xf32>
    %137 = arith.mulf %135, %136 : vector<12x32xf32>
    %138 = vector.broadcast %119 : vector<1x32xf32> to vector<12x32xf32>
    %139 = arith.addf %137, %138 : vector<12x32xf32>
    %140 = arith.truncf %139 : vector<12x32xf32> to vector<12x32xbf16>
    %c0_64 = arith.constant 0 : index
    %c0_65 = arith.constant 0 : index
    %c0_66 = arith.constant 0 : index
    %141 = vector.load %arg13[%c0_64, %c0_65, %c0_66] : memref<2x32x128xbf16, #tpu.memory_space<vmem>>, vector<1x32x128xbf16>
    %142 = vector.shape_cast %141 : vector<1x32x128xbf16> to vector<32x128xbf16>
    %cst_67 = arith.constant dense<0.000000e+00> : vector<12x128xf32>
    %143 = tpu.matmul %140, %142, %cst_67 {dimension_numbers = #tpu.dot_dimension_numbers<[1], [0], [0], [1], [0, 0, 1, 1], [], []>} : vector<12x32xbf16>, vector<32x128xbf16>, vector<12x128xf32> -> vector<12x128xf32>
    %c0_68 = arith.constant 0 : index
    %c0_69 = arith.constant 0 : index
    %c0_70 = arith.constant 0 : index
    %144 = vector.load %arg14[%c0_68, %c0_69, %c0_70] : memref<2x1x128xf32, #tpu.memory_space<vmem>>, vector<1x1x128xf32>
    %145 = vector.shape_cast %144 : vector<1x1x128xf32> to vector<1x128xf32>
    %146 = vector.broadcast %145 : vector<1x128xf32> to vector<12x128xf32>
    %147 = arith.addf %143, %146 : vector<12x128xf32>
    %cst_71 = arith.constant 5.000000e-01 : f32
    %148 = vector.broadcast %cst_71 : f32 to vector<12x128xf32>
    %149 = arith.mulf %148, %147 : vector<12x128xf32>
    %cst_72 = arith.constant 4.471500e-02 : f32
    %150 = vector.broadcast %cst_72 : f32 to vector<12x128xf32>
    %151 = arith.mulf %150, %147 : vector<12x128xf32>
    %152 = arith.mulf %151, %147 : vector<12x128xf32>
    %153 = arith.mulf %152, %147 : vector<12x128xf32>
    %154 = arith.addf %147, %153 : vector<12x128xf32>
    %cst_73 = arith.constant 0.797884583 : f32
    %155 = vector.broadcast %cst_73 : f32 to vector<12x128xf32>
    %156 = arith.mulf %155, %154 : vector<12x128xf32>
    %157 = math.tanh %156 : vector<12x128xf32>
    %cst_74 = arith.constant 1.000000e+00 : f32
    %158 = vector.broadcast %cst_74 : f32 to vector<12x128xf32>
    %159 = arith.addf %158, %157 : vector<12x128xf32>
    %160 = arith.mulf %149, %159 : vector<12x128xf32>
    %161 = arith.truncf %160 : vector<12x128xf32> to vector<12x128xbf16>
    %c0_75 = arith.constant 0 : index
    %c0_76 = arith.constant 0 : index
    %c0_77 = arith.constant 0 : index
    %162 = vector.load %arg15[%c0_75, %c0_76, %c0_77] : memref<2x128x32xbf16, #tpu.memory_space<vmem>>, vector<1x128x32xbf16>
    %163 = vector.shape_cast %162 : vector<1x128x32xbf16> to vector<128x32xbf16>
    %cst_78 = arith.constant dense<0.000000e+00> : vector<12x32xf32>
    %164 = tpu.matmul %161, %163, %cst_78 {dimension_numbers = #tpu.dot_dimension_numbers<[1], [0], [0], [1], [0, 0, 1, 1], [], []>} : vector<12x128xbf16>, vector<128x32xbf16>, vector<12x32xf32> -> vector<12x32xf32>
    %c0_79 = arith.constant 0 : index
    %c0_80 = arith.constant 0 : index
    %c0_81 = arith.constant 0 : index
    %165 = vector.load %arg16[%c0_79, %c0_80, %c0_81] : memref<2x1x32xf32, #tpu.memory_space<vmem>>, vector<1x1x32xf32>
    %166 = vector.shape_cast %165 : vector<1x1x32xf32> to vector<1x32xf32>
    %167 = vector.broadcast %166 : vector<1x32xf32> to vector<12x32xf32>
    %168 = arith.addf %164, %167 : vector<12x32xf32>
    %169 = arith.addf %115, %168 : vector<12x32xf32>
    %c1 = arith.constant 1 : index
    %c0_82 = arith.constant 0 : index
    %c0_83 = arith.constant 0 : index
    %170 = vector.load %arg5[%c1, %c0_82, %c0_83] : memref<2x1x32xf32, #tpu.memory_space<vmem>>, vector<1x1x32xf32>
    %171 = vector.shape_cast %170 : vector<1x1x32xf32> to vector<1x32xf32>
    %c1_84 = arith.constant 1 : index
    %c0_85 = arith.constant 0 : index
    %c0_86 = arith.constant 0 : index
    %172 = vector.load %arg6[%c1_84, %c0_85, %c0_86] : memref<2x1x32xf32, #tpu.memory_space<vmem>>, vector<1x1x32xf32>
    %173 = vector.shape_cast %172 : vector<1x1x32xf32> to vector<1x32xf32>
    %cst_87 = arith.constant dense<0.000000e+00> : vector<12xf32>
    %174 = vector.multi_reduction <add>, %169, %cst_87 [1] : vector<12x32xf32> to vector<12xf32>
    %175 = vector.shape_cast %174 : vector<12xf32> to vector<12x1xf32>
    %cst_88 = arith.constant 3.200000e+01 : f32
    %176 = vector.broadcast %cst_88 : f32 to vector<12x1xf32>
    %177 = arith.divf %175, %176 : vector<12x1xf32>
    %178 = vector.broadcast %177 : vector<12x1xf32> to vector<12x32xf32>
    %179 = arith.subf %169, %178 : vector<12x32xf32>
    %180 = arith.mulf %179, %179 : vector<12x32xf32>
    %cst_89 = arith.constant dense<0.000000e+00> : vector<12xf32>
    %181 = vector.multi_reduction <add>, %180, %cst_89 [1] : vector<12x32xf32> to vector<12xf32>
    %182 = vector.shape_cast %181 : vector<12xf32> to vector<12x1xf32>
    %cst_90 = arith.constant 3.200000e+01 : f32
    %183 = vector.broadcast %cst_90 : f32 to vector<12x1xf32>
    %184 = arith.divf %182, %183 : vector<12x1xf32>
    %cst_91 = arith.constant 9.99999997E-7 : f32
    %185 = vector.broadcast %cst_91 : f32 to vector<12x1xf32>
    %186 = arith.addf %184, %185 : vector<12x1xf32>
    %187 = math.rsqrt %186 : vector<12x1xf32>
    %188 = vector.broadcast %187 : vector<12x1xf32> to vector<12x32xf32>
    %189 = arith.mulf %179, %188 : vector<12x32xf32>
    %190 = vector.broadcast %171 : vector<1x32xf32> to vector<12x32xf32>
    %191 = arith.mulf %189, %190 : vector<12x32xf32>
    %192 = vector.broadcast %173 : vector<1x32xf32> to vector<12x32xf32>
    %193 = arith.addf %191, %192 : vector<12x32xf32>
    %194 = arith.truncf %193 : vector<12x32xf32> to vector<12x32xbf16>
    %c1_92 = arith.constant 1 : index
    %c0_93 = arith.constant 0 : index
    %c0_94 = arith.constant 0 : index
    %195 = vector.load %arg7[%c1_92, %c0_93, %c0_94] : memref<2x32x96xbf16, #tpu.memory_space<vmem>>, vector<1x32x96xbf16>
    %196 = vector.shape_cast %195 : vector<1x32x96xbf16> to vector<32x96xbf16>
    %cst_95 = arith.constant dense<0.000000e+00> : vector<12x96xf32>
    %197 = tpu.matmul %194, %196, %cst_95 {dimension_numbers = #tpu.dot_dimension_numbers<[1], [0], [0], [1], [0, 0, 1, 1], [], []>} : vector<12x32xbf16>, vector<32x96xbf16>, vector<12x96xf32> -> vector<12x96xf32>
    %c1_96 = arith.constant 1 : index
    %c0_97 = arith.constant 0 : index
    %c0_98 = arith.constant 0 : index
    %198 = vector.load %arg8[%c1_96, %c0_97, %c0_98] : memref<2x1x96xf32, #tpu.memory_space<vmem>>, vector<1x1x96xf32>
    %199 = vector.shape_cast %198 : vector<1x1x96xf32> to vector<1x96xf32>
    %200 = vector.broadcast %199 : vector<1x96xf32> to vector<12x96xf32>
    %201 = arith.addf %197, %200 : vector<12x96xf32>
    %202 = vector.extract_strided_slice %201 {offsets = [0, 0], sizes = [12, 8], strides = [1, 1]} : vector<12x96xf32> to vector<12x8xf32>
    %cst_99 = arith.constant 0.353553385 : f32
    %203 = vector.broadcast %cst_99 : f32 to vector<12x8xf32>
    %204 = arith.mulf %202, %203 : vector<12x8xf32>
    %205 = vector.extract_strided_slice %201 {offsets = [0, 32], sizes = [12, 8], strides = [1, 1]} : vector<12x96xf32> to vector<12x8xf32>
    %206 = vector.extract_strided_slice %201 {offsets = [0, 64], sizes = [12, 8], strides = [1, 1]} : vector<12x96xf32> to vector<12x8xf32>
    %cst_100 = arith.constant dense<0.000000e+00> : vector<12x12xf32>
    %207 = tpu.matmul %204, %205, %cst_100 {dimension_numbers = #tpu.dot_dimension_numbers<[1], [1], [0], [0], [0, 0, 1, 0], [], []>} : vector<12x8xf32>, vector<12x8xf32>, vector<12x12xf32> -> vector<12x12xf32>
    %cst_101 = arith.constant dense<0xFF800000> : vector<12xf32>
    %208 = vector.multi_reduction <maximumf>, %207, %cst_101 [1] : vector<12x12xf32> to vector<12xf32>
    %209 = vector.shape_cast %208 : vector<12xf32> to vector<12x1xf32>
    %210 = vector.broadcast %209 : vector<12x1xf32> to vector<12x12xf32>
    %211 = arith.subf %207, %210 : vector<12x12xf32>
    %212 = math.exp %211 : vector<12x12xf32>
    %cst_102 = arith.constant dense<0.000000e+00> : vector<12xf32>
    %213 = vector.multi_reduction <add>, %212, %cst_102 [1] : vector<12x12xf32> to vector<12xf32>
    %214 = vector.shape_cast %213 : vector<12xf32> to vector<12x1xf32>
    %215 = vector.broadcast %214 : vector<12x1xf32> to vector<12x12xf32>
    %216 = arith.divf %212, %215 : vector<12x12xf32>
    %cst_103 = arith.constant dense<0.000000e+00> : vector<12x8xf32>
    %217 = tpu.matmul %216, %206, %cst_103 {dimension_numbers = #tpu.dot_dimension_numbers<[1], [0], [0], [1], [0, 0, 1, 1], [], []>} : vector<12x12xf32>, vector<12x8xf32>, vector<12x8xf32> -> vector<12x8xf32>
    %218 = vector.extract_strided_slice %201 {offsets = [0, 8], sizes = [12, 8], strides = [1, 1]} : vector<12x96xf32> to vector<12x8xf32>
    %cst_104 = arith.constant 0.353553385 : f32
    %219 = vector.broadcast %cst_104 : f32 to vector<12x8xf32>
    %220 = arith.mulf %218, %219 : vector<12x8xf32>
    %221 = vector.extract_strided_slice %201 {offsets = [0, 40], sizes = [12, 8], strides = [1, 1]} : vector<12x96xf32> to vector<12x8xf32>
    %222 = vector.extract_strided_slice %201 {offsets = [0, 72], sizes = [12, 8], strides = [1, 1]} : vector<12x96xf32> to vector<12x8xf32>
    %cst_105 = arith.constant dense<0.000000e+00> : vector<12x12xf32>
    %223 = tpu.matmul %220, %221, %cst_105 {dimension_numbers = #tpu.dot_dimension_numbers<[1], [1], [0], [0], [0, 0, 1, 0], [], []>} : vector<12x8xf32>, vector<12x8xf32>, vector<12x12xf32> -> vector<12x12xf32>
    %cst_106 = arith.constant dense<0xFF800000> : vector<12xf32>
    %224 = vector.multi_reduction <maximumf>, %223, %cst_106 [1] : vector<12x12xf32> to vector<12xf32>
    %225 = vector.shape_cast %224 : vector<12xf32> to vector<12x1xf32>
    %226 = vector.broadcast %225 : vector<12x1xf32> to vector<12x12xf32>
    %227 = arith.subf %223, %226 : vector<12x12xf32>
    %228 = math.exp %227 : vector<12x12xf32>
    %cst_107 = arith.constant dense<0.000000e+00> : vector<12xf32>
    %229 = vector.multi_reduction <add>, %228, %cst_107 [1] : vector<12x12xf32> to vector<12xf32>
    %230 = vector.shape_cast %229 : vector<12xf32> to vector<12x1xf32>
    %231 = vector.broadcast %230 : vector<12x1xf32> to vector<12x12xf32>
    %232 = arith.divf %228, %231 : vector<12x12xf32>
    %cst_108 = arith.constant dense<0.000000e+00> : vector<12x8xf32>
    %233 = tpu.matmul %232, %222, %cst_108 {dimension_numbers = #tpu.dot_dimension_numbers<[1], [0], [0], [1], [0, 0, 1, 1], [], []>} : vector<12x12xf32>, vector<12x8xf32>, vector<12x8xf32> -> vector<12x8xf32>
    %234 = vector.extract_strided_slice %201 {offsets = [0, 16], sizes = [12, 8], strides = [1, 1]} : vector<12x96xf32> to vector<12x8xf32>
    %cst_109 = arith.constant 0.353553385 : f32
    %235 = vector.broadcast %cst_109 : f32 to vector<12x8xf32>
    %236 = arith.mulf %234, %235 : vector<12x8xf32>
    %237 = vector.extract_strided_slice %201 {offsets = [0, 48], sizes = [12, 8], strides = [1, 1]} : vector<12x96xf32> to vector<12x8xf32>
    %238 = vector.extract_strided_slice %201 {offsets = [0, 80], sizes = [12, 8], strides = [1, 1]} : vector<12x96xf32> to vector<12x8xf32>
    %cst_110 = arith.constant dense<0.000000e+00> : vector<12x12xf32>
    %239 = tpu.matmul %236, %237, %cst_110 {dimension_numbers = #tpu.dot_dimension_numbers<[1], [1], [0], [0], [0, 0, 1, 0], [], []>} : vector<12x8xf32>, vector<12x8xf32>, vector<12x12xf32> -> vector<12x12xf32>
    %cst_111 = arith.constant dense<0xFF800000> : vector<12xf32>
    %240 = vector.multi_reduction <maximumf>, %239, %cst_111 [1] : vector<12x12xf32> to vector<12xf32>
    %241 = vector.shape_cast %240 : vector<12xf32> to vector<12x1xf32>
    %242 = vector.broadcast %241 : vector<12x1xf32> to vector<12x12xf32>
    %243 = arith.subf %239, %242 : vector<12x12xf32>
    %244 = math.exp %243 : vector<12x12xf32>
    %cst_112 = arith.constant dense<0.000000e+00> : vector<12xf32>
    %245 = vector.multi_reduction <add>, %244, %cst_112 [1] : vector<12x12xf32> to vector<12xf32>
    %246 = vector.shape_cast %245 : vector<12xf32> to vector<12x1xf32>
    %247 = vector.broadcast %246 : vector<12x1xf32> to vector<12x12xf32>
    %248 = arith.divf %244, %247 : vector<12x12xf32>
    %cst_113 = arith.constant dense<0.000000e+00> : vector<12x8xf32>
    %249 = tpu.matmul %248, %238, %cst_113 {dimension_numbers = #tpu.dot_dimension_numbers<[1], [0], [0], [1], [0, 0, 1, 1], [], []>} : vector<12x12xf32>, vector<12x8xf32>, vector<12x8xf32> -> vector<12x8xf32>
    %250 = vector.extract_strided_slice %201 {offsets = [0, 24], sizes = [12, 8], strides = [1, 1]} : vector<12x96xf32> to vector<12x8xf32>
    %cst_114 = arith.constant 0.353553385 : f32
    %251 = vector.broadcast %cst_114 : f32 to vector<12x8xf32>
    %252 = arith.mulf %250, %251 : vector<12x8xf32>
    %253 = vector.extract_strided_slice %201 {offsets = [0, 56], sizes = [12, 8], strides = [1, 1]} : vector<12x96xf32> to vector<12x8xf32>
    %254 = vector.extract_strided_slice %201 {offsets = [0, 88], sizes = [12, 8], strides = [1, 1]} : vector<12x96xf32> to vector<12x8xf32>
    %cst_115 = arith.constant dense<0.000000e+00> : vector<12x12xf32>
    %255 = tpu.matmul %252, %253, %cst_115 {dimension_numbers = #tpu.dot_dimension_numbers<[1], [1], [0], [0], [0, 0, 1, 0], [], []>} : vector<12x8xf32>, vector<12x8xf32>, vector<12x12xf32> -> vector<12x12xf32>
    %cst_116 = arith.constant dense<0xFF800000> : vector<12xf32>
    %256 = vector.multi_reduction <maximumf>, %255, %cst_116 [1] : vector<12x12xf32> to vector<12xf32>
    %257 = vector.shape_cast %256 : vector<12xf32> to vector<12x1xf32>
    %258 = vector.broadcast %257 : vector<12x1xf32> to vector<12x12xf32>
    %259 = arith.subf %255, %258 : vector<12x12xf32>
    %260 = math.exp %259 : vector<12x12xf32>
    %cst_117 = arith.constant dense<0.000000e+00> : vector<12xf32>
    %261 = vector.multi_reduction <add>, %260, %cst_117 [1] : vector<12x12xf32> to vector<12xf32>
    %262 = vector.shape_cast %261 : vector<12xf32> to vector<12x1xf32>
    %263 = vector.broadcast %262 : vector<12x1xf32> to vector<12x12xf32>
    %264 = arith.divf %260, %263 : vector<12x12xf32>
    %cst_118 = arith.constant dense<0.000000e+00> : vector<12x8xf32>
    %265 = tpu.matmul %264, %254, %cst_118 {dimension_numbers = #tpu.dot_dimension_numbers<[1], [0], [0], [1], [0, 0, 1, 1], [], []>} : vector<12x12xf32>, vector<12x8xf32>, vector<12x8xf32> -> vector<12x8xf32>
    %266 = tpu.concatenate %217, %233, %249, %265 in 1 : vector<12x8xf32>, vector<12x8xf32>, vector<12x8xf32>, vector<12x8xf32> -> vector<12x32xf32>
    %267 = arith.truncf %266 : vector<12x32xf32> to vector<12x32xbf16>
    %c1_119 = arith.constant 1 : index
    %c0_120 = arith.constant 0 : index
    %c0_121 = arith.constant 0 : index
    %268 = vector.load %arg9[%c1_119, %c0_120, %c0_121] : memref<2x32x32xbf16, #tpu.memory_space<vmem>>, vector<1x32x32xbf16>
    %269 = vector.shape_cast %268 : vector<1x32x32xbf16> to vector<32x32xbf16>
    %cst_122 = arith.constant dense<0.000000e+00> : vector<12x32xf32>
    %270 = tpu.matmul %267, %269, %cst_122 {dimension_numbers = #tpu.dot_dimension_numbers<[1], [0], [0], [1], [0, 0, 1, 1], [], []>} : vector<12x32xbf16>, vector<32x32xbf16>, vector<12x32xf32> -> vector<12x32xf32>
    %c1_123 = arith.constant 1 : index
    %c0_124 = arith.constant 0 : index
    %c0_125 = arith.constant 0 : index
    %271 = vector.load %arg10[%c1_123, %c0_124, %c0_125] : memref<2x1x32xf32, #tpu.memory_space<vmem>>, vector<1x1x32xf32>
    %272 = vector.shape_cast %271 : vector<1x1x32xf32> to vector<1x32xf32>
    %273 = vector.broadcast %272 : vector<1x32xf32> to vector<12x32xf32>
    %274 = arith.addf %270, %273 : vector<12x32xf32>
    %275 = arith.addf %169, %274 : vector<12x32xf32>
    %c1_126 = arith.constant 1 : index
    %c0_127 = arith.constant 0 : index
    %c0_128 = arith.constant 0 : index
    %276 = vector.load %arg11[%c1_126, %c0_127, %c0_128] : memref<2x1x32xf32, #tpu.memory_space<vmem>>, vector<1x1x32xf32>
    %277 = vector.shape_cast %276 : vector<1x1x32xf32> to vector<1x32xf32>
    %c1_129 = arith.constant 1 : index
    %c0_130 = arith.constant 0 : index
    %c0_131 = arith.constant 0 : index
    %278 = vector.load %arg12[%c1_129, %c0_130, %c0_131] : memref<2x1x32xf32, #tpu.memory_space<vmem>>, vector<1x1x32xf32>
    %279 = vector.shape_cast %278 : vector<1x1x32xf32> to vector<1x32xf32>
    %cst_132 = arith.constant dense<0.000000e+00> : vector<12xf32>
    %280 = vector.multi_reduction <add>, %275, %cst_132 [1] : vector<12x32xf32> to vector<12xf32>
    %281 = vector.shape_cast %280 : vector<12xf32> to vector<12x1xf32>
    %cst_133 = arith.constant 3.200000e+01 : f32
    %282 = vector.broadcast %cst_133 : f32 to vector<12x1xf32>
    %283 = arith.divf %281, %282 : vector<12x1xf32>
    %284 = vector.broadcast %283 : vector<12x1xf32> to vector<12x32xf32>
    %285 = arith.subf %275, %284 : vector<12x32xf32>
    %286 = arith.mulf %285, %285 : vector<12x32xf32>
    %cst_134 = arith.constant dense<0.000000e+00> : vector<12xf32>
    %287 = vector.multi_reduction <add>, %286, %cst_134 [1] : vector<12x32xf32> to vector<12xf32>
    %288 = vector.shape_cast %287 : vector<12xf32> to vector<12x1xf32>
    %cst_135 = arith.constant 3.200000e+01 : f32
    %289 = vector.broadcast %cst_135 : f32 to vector<12x1xf32>
    %290 = arith.divf %288, %289 : vector<12x1xf32>
    %cst_136 = arith.constant 9.99999997E-7 : f32
    %291 = vector.broadcast %cst_136 : f32 to vector<12x1xf32>
    %292 = arith.addf %290, %291 : vector<12x1xf32>
    %293 = math.rsqrt %292 : vector<12x1xf32>
    %294 = vector.broadcast %293 : vector<12x1xf32> to vector<12x32xf32>
    %295 = arith.mulf %285, %294 : vector<12x32xf32>
    %296 = vector.broadcast %277 : vector<1x32xf32> to vector<12x32xf32>
    %297 = arith.mulf %295, %296 : vector<12x32xf32>
    %298 = vector.broadcast %279 : vector<1x32xf32> to vector<12x32xf32>
    %299 = arith.addf %297, %298 : vector<12x32xf32>
    %300 = arith.truncf %299 : vector<12x32xf32> to vector<12x32xbf16>
    %c1_137 = arith.constant 1 : index
    %c0_138 = arith.constant 0 : index
    %c0_139 = arith.constant 0 : index
    %301 = vector.load %arg13[%c1_137, %c0_138, %c0_139] : memref<2x32x128xbf16, #tpu.memory_space<vmem>>, vector<1x32x128xbf16>
    %302 = vector.shape_cast %301 : vector<1x32x128xbf16> to vector<32x128xbf16>
    %cst_140 = arith.constant dense<0.000000e+00> : vector<12x128xf32>
    %303 = tpu.matmul %300, %302, %cst_140 {dimension_numbers = #tpu.dot_dimension_numbers<[1], [0], [0], [1], [0, 0, 1, 1], [], []>} : vector<12x32xbf16>, vector<32x128xbf16>, vector<12x128xf32> -> vector<12x128xf32>
    %c1_141 = arith.constant 1 : index
    %c0_142 = arith.constant 0 : index
    %c0_143 = arith.constant 0 : index
    %304 = vector.load %arg14[%c1_141, %c0_142, %c0_143] : memref<2x1x128xf32, #tpu.memory_space<vmem>>, vector<1x1x128xf32>
    %305 = vector.shape_cast %304 : vector<1x1x128xf32> to vector<1x128xf32>
    %306 = vector.broadcast %305 : vector<1x128xf32> to vector<12x128xf32>
    %307 = arith.addf %303, %306 : vector<12x128xf32>
    %cst_144 = arith.constant 5.000000e-01 : f32
    %308 = vector.broadcast %cst_144 : f32 to vector<12x128xf32>
    %309 = arith.mulf %308, %307 : vector<12x128xf32>
    %cst_145 = arith.constant 4.471500e-02 : f32
    %310 = vector.broadcast %cst_145 : f32 to vector<12x128xf32>
    %311 = arith.mulf %310, %307 : vector<12x128xf32>
    %312 = arith.mulf %311, %307 : vector<12x128xf32>
    %313 = arith.mulf %312, %307 : vector<12x128xf32>
    %314 = arith.addf %307, %313 : vector<12x128xf32>
    %cst_146 = arith.constant 0.797884583 : f32
    %315 = vector.broadcast %cst_146 : f32 to vector<12x128xf32>
    %316 = arith.mulf %315, %314 : vector<12x128xf32>
    %317 = math.tanh %316 : vector<12x128xf32>
    %cst_147 = arith.constant 1.000000e+00 : f32
    %318 = vector.broadcast %cst_147 : f32 to vector<12x128xf32>
    %319 = arith.addf %318, %317 : vector<12x128xf32>
    %320 = arith.mulf %309, %319 : vector<12x128xf32>
    %321 = arith.truncf %320 : vector<12x128xf32> to vector<12x128xbf16>
    %c1_148 = arith.constant 1 : index
    %c0_149 = arith.constant 0 : index
    %c0_150 = arith.constant 0 : index
    %322 = vector.load %arg15[%c1_148, %c0_149, %c0_150] : memref<2x128x32xbf16, #tpu.memory_space<vmem>>, vector<1x128x32xbf16>
    %323 = vector.shape_cast %322 : vector<1x128x32xbf16> to vector<128x32xbf16>
    %cst_151 = arith.constant dense<0.000000e+00> : vector<12x32xf32>
    %324 = tpu.matmul %321, %323, %cst_151 {dimension_numbers = #tpu.dot_dimension_numbers<[1], [0], [0], [1], [0, 0, 1, 1], [], []>} : vector<12x128xbf16>, vector<128x32xbf16>, vector<12x32xf32> -> vector<12x32xf32>
    %c1_152 = arith.constant 1 : index
    %c0_153 = arith.constant 0 : index
    %c0_154 = arith.constant 0 : index
    %325 = vector.load %arg16[%c1_152, %c0_153, %c0_154] : memref<2x1x32xf32, #tpu.memory_space<vmem>>, vector<1x1x32xf32>
    %326 = vector.shape_cast %325 : vector<1x1x32xf32> to vector<1x32xf32>
    %327 = vector.broadcast %326 : vector<1x32xf32> to vector<12x32xf32>
    %328 = arith.addf %324, %327 : vector<12x32xf32>
    %329 = arith.addf %275, %328 : vector<12x32xf32>
    %c0_155 = arith.constant 0 : index
    %c0_156 = arith.constant 0 : index
    %330 = vector.load %arg17[%c0_155, %c0_156] : memref<1x32xf32, #tpu.memory_space<vmem>>, vector<1x32xf32>
    %c0_157 = arith.constant 0 : index
    %c0_158 = arith.constant 0 : index
    %331 = vector.load %arg18[%c0_157, %c0_158] : memref<1x32xf32, #tpu.memory_space<vmem>>, vector<1x32xf32>
    %cst_159 = arith.constant dense<0.000000e+00> : vector<12xf32>
    %332 = vector.multi_reduction <add>, %329, %cst_159 [1] : vector<12x32xf32> to vector<12xf32>
    %333 = vector.shape_cast %332 : vector<12xf32> to vector<12x1xf32>
    %cst_160 = arith.constant 3.200000e+01 : f32
    %334 = vector.broadcast %cst_160 : f32 to vector<12x1xf32>
    %335 = arith.divf %333, %334 : vector<12x1xf32>
    %336 = vector.broadcast %335 : vector<12x1xf32> to vector<12x32xf32>
    %337 = arith.subf %329, %336 : vector<12x32xf32>
    %338 = arith.mulf %337, %337 : vector<12x32xf32>
    %cst_161 = arith.constant dense<0.000000e+00> : vector<12xf32>
    %339 = vector.multi_reduction <add>, %338, %cst_161 [1] : vector<12x32xf32> to vector<12xf32>
    %340 = vector.shape_cast %339 : vector<12xf32> to vector<12x1xf32>
    %cst_162 = arith.constant 3.200000e+01 : f32
    %341 = vector.broadcast %cst_162 : f32 to vector<12x1xf32>
    %342 = arith.divf %340, %341 : vector<12x1xf32>
    %cst_163 = arith.constant 9.99999997E-7 : f32
    %343 = vector.broadcast %cst_163 : f32 to vector<12x1xf32>
    %344 = arith.addf %342, %343 : vector<12x1xf32>
    %345 = math.rsqrt %344 : vector<12x1xf32>
    %346 = vector.broadcast %345 : vector<12x1xf32> to vector<12x32xf32>
    %347 = arith.mulf %337, %346 : vector<12x32xf32>
    %348 = vector.broadcast %330 : vector<1x32xf32> to vector<12x32xf32>
    %349 = arith.mulf %347, %348 : vector<12x32xf32>
    %350 = vector.broadcast %331 : vector<1x32xf32> to vector<12x32xf32>
    %351 = arith.addf %349, %350 : vector<12x32xf32>
    %c0_164 = arith.constant 0 : index
    %c0_165 = arith.constant 0 : index
    %c0_166 = arith.constant 0 : index
    %352 = vector.load %arg19[%c0_164, %c0_165, %c0_166] : memref<1x12x32xf32, #tpu.memory_space<vmem>>, vector<1x12x32xf32>
    %353 = vector.shape_cast %352 : vector<1x12x32xf32> to vector<12x32xf32>
    %354 = vector.shape_cast %351 : vector<12x32xf32> to vector<1x12x32xf32>
    tpu.vector_store %arg19[%c0_164, %c0_165, %c0_166], %354 {strides = array<i32>} : memref<1x12x32xf32, #tpu.memory_space<vmem>>, vector<1x12x32xf32>,
    return
  }
  func.func @transform_0(%arg0: i32) -> (i32, i32, i32) {
    %c0_i32 = arith.constant 0 : i32
    %c0_i32_0 = arith.constant 0 : i32
    %c0_i32_1 = arith.constant 0 : i32
    return %arg0, %c0_i32, %c0_i32_0 : i32, i32, i32
  }
  func.func @transform_1(%arg0: i32) -> (i32, i32) {
    %c0_i32 = arith.constant 0 : i32
    %c0_i32_0 = arith.constant 0 : i32
    %c0_i32_1 = arith.constant 0 : i32
    return %c0_i32, %c0_i32_0 : i32, i32
  }
  func.func @transform_2(%arg0: i32) -> (i32, i32) {
    %c0_i32 = arith.constant 0 : i32
    %c0_i32_0 = arith.constant 0 : i32
    %c0_i32_1 = arith.constant 0 : i32
    return %c0_i32, %c0_i32_0 : i32, i32
  }
  func.func @transform_3(%arg0: i32) -> (i32, i32) {
    %c0_i32 = arith.constant 0 : i32
    %c0_i32_0 = arith.constant 0 : i32
    %c0_i32_1 = arith.constant 0 : i32
    return %c0_i32, %c0_i32_0 : i32, i32
  }
  func.func @transform_4(%arg0: i32) -> (i32, i32, i32) {
    %c0_i32 = arith.constant 0 : i32
    %c0_i32_0 = arith.constant 0 : i32
    %c0_i32_1 = arith.constant 0 : i32
    %c0_i32_2 = arith.constant 0 : i32
    return %c0_i32, %c0_i32_0, %c0_i32_1 : i32, i32, i32
  }
  func.func @transform_5(%arg0: i32) -> (i32, i32, i32) {
    %c0_i32 = arith.constant 0 : i32
    %c0_i32_0 = arith.constant 0 : i32
    %c0_i32_1 = arith.constant 0 : i32
    %c0_i32_2 = arith.constant 0 : i32
    return %c0_i32, %c0_i32_0, %c0_i32_1 : i32, i32, i32
  }
  func.func @transform_6(%arg0: i32) -> (i32, i32, i32) {
    %c0_i32 = arith.constant 0 : i32
    %c0_i32_0 = arith.constant 0 : i32
    %c0_i32_1 = arith.constant 0 : i32
    %c0_i32_2 = arith.constant 0 : i32
    return %c0_i32, %c0_i32_0, %c0_i32_1 : i32, i32, i32
  }
  func.func @transform_7(%arg0: i32) -> (i32, i32, i32) {
    %c0_i32 = arith.constant 0 : i32
    %c0_i32_0 = arith.constant 0 : i32
    %c0_i32_1 = arith.constant 0 : i32
    %c0_i32_2 = arith.constant 0 : i32
    return %c0_i32, %c0_i32_0, %c0_i32_1 : i32, i32, i32
  }
  func.func @transform_8(%arg0: i32) -> (i32, i32, i32) {
    %c0_i32 = arith.constant 0 : i32
    %c0_i32_0 = arith.constant 0 : i32
    %c0_i32_1 = arith.constant 0 : i32
    %c0_i32_2 = arith.constant 0 : i32
    return %c0_i32, %c0_i32_0, %c0_i32_1 : i32, i32, i32
  }
  func.func @transform_9(%arg0: i32) -> (i32, i32, i32) {
    %c0_i32 = arith.constant 0 : i32
    %c0_i32_0 = arith.constant 0 : i32
    %c0_i32_1 = arith.constant 0 : i32
    %c0_i32_2 = arith.constant 0 : i32
    return %c0_i32, %c0_i32_0, %c0_i32_1 : i32, i32, i32
  }
  func.func @transform_10(%arg0: i32) -> (i32, i32, i32) {
    %c0_i32 = arith.constant 0 : i32
    %c0_i32_0 = arith.constant 0 : i32
    %c0_i32_1 = arith.constant 0 : i32
    %c0_i32_2 = arith.constant 0 : i32
    return %c0_i32, %c0_i32_0, %c0_i32_1 : i32, i32, i32
  }
  func.func @transform_11(%arg0: i32) -> (i32, i32, i32) {
    %c0_i32 = arith.constant 0 : i32
    %c0_i32_0 = arith.constant 0 : i32
    %c0_i32_1 = arith.constant 0 : i32
    %c0_i32_2 = arith.constant 0 : i32
    return %c0_i32, %c0_i32_0, %c0_i32_1 : i32, i32, i32
  }
  func.func @transform_12(%arg0: i32) -> (i32, i32, i32) {
    %c0_i32 = arith.constant 0 : i32
    %c0_i32_0 = arith.constant 0 : i32
    %c0_i32_1 = arith.constant 0 : i32
    %c0_i32_2 = arith.constant 0 : i32
    return %c0_i32, %c0_i32_0, %c0_i32_1 : i32, i32, i32
  }
  func.func @transform_13(%arg0: i32) -> (i32, i32, i32) {
    %c0_i32 = arith.constant 0 : i32
    %c0_i32_0 = arith.constant 0 : i32
    %c0_i32_1 = arith.constant 0 : i32
    %c0_i32_2 = arith.constant 0 : i32
    return %c0_i32, %c0_i32_0, %c0_i32_1 : i32, i32, i32
  }
  func.func @transform_14(%arg0: i32) -> (i32, i32, i32) {
    %c0_i32 = arith.constant 0 : i32
    %c0_i32_0 = arith.constant 0 : i32
    %c0_i32_1 = arith.constant 0 : i32
    %c0_i32_2 = arith.constant 0 : i32
    return %c0_i32, %c0_i32_0, %c0_i32_1 : i32, i32, i32
  }
  func.func @transform_15(%arg0: i32) -> (i32, i32, i32) {
    %c0_i32 = arith.constant 0 : i32
    %c0_i32_0 = arith.constant 0 : i32
    %c0_i32_1 = arith.constant 0 : i32
    %c0_i32_2 = arith.constant 0 : i32
    return %c0_i32, %c0_i32_0, %c0_i32_1 : i32, i32, i32
  }
  func.func @transform_16(%arg0: i32) -> (i32, i32) {
    %c0_i32 = arith.constant 0 : i32
    %c0_i32_0 = arith.constant 0 : i32
    %c0_i32_1 = arith.constant 0 : i32
    return %c0_i32, %c0_i32_0 : i32, i32
  }
  func.func @transform_17(%arg0: i32) -> (i32, i32) {
    %c0_i32 = arith.constant 0 : i32
    %c0_i32_0 = arith.constant 0 : i32
    %c0_i32_1 = arith.constant 0 : i32
    return %c0_i32, %c0_i32_0 : i32, i32
  }
  func.func @transform_18(%arg0: i32) -> (i32, i32, i32) {
    %c0_i32 = arith.constant 0 : i32
    %c0_i32_0 = arith.constant 0 : i32
    %c0_i32_1 = arith.constant 0 : i32
    return %arg0, %c0_i32, %c0_i32_0 : i32, i32, i32
  }
}

module attributes {stable_mosaic.version = 11 : i64} {
  func.func @_deconv_kernel(%arg0: i32, %arg1: memref<24x288xf32, #tpu.memory_space<vmem>>, %arg2: memref<288x128xbf16, #tpu.memory_space<vmem>>, %arg3: memref<1x128xf32, #tpu.memory_space<vmem>>, %arg4: memref<24x128xf32, #tpu.memory_space<vmem>>) attributes {dimension_semantics = [#tpu.dimension_semantics<arbitrary>], iteration_bounds = array<i64: 1>, scalar_prefetch = 0 : i64, scratch_operands = 0 : i64, tpu.core_type = #tpu.core_type<tc>, window_params = [{pipeline_mode = #tpu.pipeline_mode<synchronous>, transform_indices = @transform_0, window_bounds = array<i64: 24, 288>}, {pipeline_mode = #tpu.pipeline_mode<synchronous>, transform_indices = @transform_1, window_bounds = array<i64: 288, 128>}, {pipeline_mode = #tpu.pipeline_mode<synchronous>, transform_indices = @transform_2, window_bounds = array<i64: 1, 128>}, {pipeline_mode = #tpu.pipeline_mode<synchronous>, transform_indices = @transform_3, window_bounds = array<i64: 24, 128>}]} {
    %c0 = arith.constant 0 : index
    %c0_0 = arith.constant 0 : index
    %0 = vector.load %arg1[%c0, %c0_0] : memref<24x288xf32, #tpu.memory_space<vmem>>, vector<24x288xf32>
    %1 = arith.truncf %0 : vector<24x288xf32> to vector<24x288xbf16>
    %c0_1 = arith.constant 0 : index
    %c0_2 = arith.constant 0 : index
    %2 = vector.load %arg2[%c0_1, %c0_2] : memref<288x128xbf16, #tpu.memory_space<vmem>>, vector<288x128xbf16>
    %cst = arith.constant dense<0.000000e+00> : vector<24x128xf32>
    %3 = tpu.matmul %1, %2, %cst {dimension_numbers = #tpu.dot_dimension_numbers<[1], [0], [0], [1], [0, 0, 1, 1], [], []>} : vector<24x288xbf16>, vector<288x128xbf16>, vector<24x128xf32> -> vector<24x128xf32>
    %c0_3 = arith.constant 0 : index
    %c0_4 = arith.constant 0 : index
    %4 = vector.load %arg3[%c0_3, %c0_4] : memref<1x128xf32, #tpu.memory_space<vmem>>, vector<1x128xf32>
    %5 = vector.broadcast %4 : vector<1x128xf32> to vector<24x128xf32>
    %6 = arith.addf %3, %5 : vector<24x128xf32>
    %cst_5 = arith.constant 0.000000e+00 : f32
    %7 = vector.broadcast %cst_5 : f32 to vector<24x128xf32>
    %8 = arith.maximumf %6, %7 : vector<24x128xf32>
    %c0_6 = arith.constant 0 : index
    %c0_7 = arith.constant 0 : index
    %9 = vector.load %arg4[%c0_6, %c0_7] : memref<24x128xf32, #tpu.memory_space<vmem>>, vector<24x128xf32>
    tpu.vector_store %arg4[%c0_6, %c0_7], %8 {strides = array<i32>} : memref<24x128xf32, #tpu.memory_space<vmem>>, vector<24x128xf32>,
    return
  }
  func.func @transform_0(%arg0: i32) -> (i32, i32) {
    %c0_i32 = arith.constant 0 : i32
    %c0_i32_0 = arith.constant 0 : i32
    %c0_i32_1 = arith.constant 0 : i32
    return %c0_i32, %c0_i32_0 : i32, i32
  }
  func.func @transform_1(%arg0: i32) -> (i32, i32) {
    %c0_i32 = arith.constant 0 : i32
    %c0_i32_0 = arith.constant 0 : i32
    %c0_i32_1 = arith.constant 0 : i32
    return %c0_i32, %c0_i32_0 : i32, i32
  }
  func.func @transform_2(%arg0: i32) -> (i32, i32) {
    %c0_i32 = arith.constant 0 : i32
    %c0_i32_0 = arith.constant 0 : i32
    %c0_i32_1 = arith.constant 0 : i32
    return %c0_i32, %c0_i32_0 : i32, i32
  }
  func.func @transform_3(%arg0: i32) -> (i32, i32) {
    %c0_i32 = arith.constant 0 : i32
    %c0_i32_0 = arith.constant 0 : i32
    %c0_i32_1 = arith.constant 0 : i32
    return %c0_i32, %c0_i32_0 : i32, i32
  }
}

module attributes {stable_mosaic.version = 11 : i64} {
  func.func @_deconv_final_kernel(%arg0: i32, %arg1: memref<48x288xf32, #tpu.memory_space<vmem>>, %arg2: memref<288x128xbf16, #tpu.memory_space<vmem>>, %arg3: memref<1x128xf32, #tpu.memory_space<vmem>>, %arg4: memref<128x68xbf16, #tpu.memory_space<vmem>>, %arg5: memref<1x68xf32, #tpu.memory_space<vmem>>, %arg6: memref<48x68xf32, #tpu.memory_space<vmem>>) attributes {dimension_semantics = [#tpu.dimension_semantics<parallel>], iteration_bounds = array<i64: 2>, scalar_prefetch = 0 : i64, scratch_operands = 0 : i64, tpu.core_type = #tpu.core_type<tc>, window_params = [{transform_indices = @transform_0, window_bounds = array<i64: 48, 288>}, {pipeline_mode = #tpu.pipeline_mode<synchronous>, transform_indices = @transform_1, window_bounds = array<i64: 288, 128>}, {pipeline_mode = #tpu.pipeline_mode<synchronous>, transform_indices = @transform_2, window_bounds = array<i64: 1, 128>}, {pipeline_mode = #tpu.pipeline_mode<synchronous>, transform_indices = @transform_3, window_bounds = array<i64: 128, 68>}, {pipeline_mode = #tpu.pipeline_mode<synchronous>, transform_indices = @transform_4, window_bounds = array<i64: 1, 68>}, {transform_indices = @transform_5, window_bounds = array<i64: 48, 68>}]} {
    %c0 = arith.constant 0 : index
    %c0_0 = arith.constant 0 : index
    %0 = vector.load %arg1[%c0, %c0_0] : memref<48x288xf32, #tpu.memory_space<vmem>>, vector<48x288xf32>
    %1 = arith.truncf %0 : vector<48x288xf32> to vector<48x288xbf16>
    %c0_1 = arith.constant 0 : index
    %c0_2 = arith.constant 0 : index
    %2 = vector.load %arg2[%c0_1, %c0_2] : memref<288x128xbf16, #tpu.memory_space<vmem>>, vector<288x128xbf16>
    %cst = arith.constant dense<0.000000e+00> : vector<48x128xf32>
    %3 = tpu.matmul %1, %2, %cst {dimension_numbers = #tpu.dot_dimension_numbers<[1], [0], [0], [1], [0, 0, 1, 1], [], []>} : vector<48x288xbf16>, vector<288x128xbf16>, vector<48x128xf32> -> vector<48x128xf32>
    %c0_3 = arith.constant 0 : index
    %c0_4 = arith.constant 0 : index
    %4 = vector.load %arg3[%c0_3, %c0_4] : memref<1x128xf32, #tpu.memory_space<vmem>>, vector<1x128xf32>
    %5 = vector.broadcast %4 : vector<1x128xf32> to vector<48x128xf32>
    %6 = arith.addf %3, %5 : vector<48x128xf32>
    %cst_5 = arith.constant 0.000000e+00 : f32
    %7 = vector.broadcast %cst_5 : f32 to vector<48x128xf32>
    %8 = arith.maximumf %6, %7 : vector<48x128xf32>
    %9 = arith.truncf %8 : vector<48x128xf32> to vector<48x128xbf16>
    %c0_6 = arith.constant 0 : index
    %c0_7 = arith.constant 0 : index
    %10 = vector.load %arg4[%c0_6, %c0_7] : memref<128x68xbf16, #tpu.memory_space<vmem>>, vector<128x68xbf16>
    %cst_8 = arith.constant dense<0.000000e+00> : vector<48x68xf32>
    %11 = tpu.matmul %9, %10, %cst_8 {dimension_numbers = #tpu.dot_dimension_numbers<[1], [0], [0], [1], [0, 0, 1, 1], [], []>} : vector<48x128xbf16>, vector<128x68xbf16>, vector<48x68xf32> -> vector<48x68xf32>
    %c0_9 = arith.constant 0 : index
    %c0_10 = arith.constant 0 : index
    %12 = vector.load %arg5[%c0_9, %c0_10] : memref<1x68xf32, #tpu.memory_space<vmem>>, vector<1x68xf32>
    %13 = vector.broadcast %12 : vector<1x68xf32> to vector<48x68xf32>
    %14 = arith.addf %11, %13 : vector<48x68xf32>
    %c0_11 = arith.constant 0 : index
    %c0_12 = arith.constant 0 : index
    %15 = vector.load %arg6[%c0_11, %c0_12] : memref<48x68xf32, #tpu.memory_space<vmem>>, vector<48x68xf32>
    tpu.vector_store %arg6[%c0_11, %c0_12], %14 {strides = array<i32>} : memref<48x68xf32, #tpu.memory_space<vmem>>, vector<48x68xf32>,
    return
  }
  func.func @transform_0(%arg0: i32) -> (i32, i32) {
    %c0_i32 = arith.constant 0 : i32
    %c0_i32_0 = arith.constant 0 : i32
    return %arg0, %c0_i32 : i32, i32
  }
  func.func @transform_1(%arg0: i32) -> (i32, i32) {
    %c0_i32 = arith.constant 0 : i32
    %c0_i32_0 = arith.constant 0 : i32
    %c0_i32_1 = arith.constant 0 : i32
    return %c0_i32, %c0_i32_0 : i32, i32
  }
  func.func @transform_2(%arg0: i32) -> (i32, i32) {
    %c0_i32 = arith.constant 0 : i32
    %c0_i32_0 = arith.constant 0 : i32
    %c0_i32_1 = arith.constant 0 : i32
    return %c0_i32, %c0_i32_0 : i32, i32
  }
  func.func @transform_3(%arg0: i32) -> (i32, i32) {
    %c0_i32 = arith.constant 0 : i32
    %c0_i32_0 = arith.constant 0 : i32
    %c0_i32_1 = arith.constant 0 : i32
    return %c0_i32, %c0_i32_0 : i32, i32
  }
  func.func @transform_4(%arg0: i32) -> (i32, i32) {
    %c0_i32 = arith.constant 0 : i32
    %c0_i32_0 = arith.constant 0 : i32
    %c0_i32_1 = arith.constant 0 : i32
    return %c0_i32, %c0_i32_0 : i32, i32
  }
  func.func @transform_5(%arg0: i32) -> (i32, i32) {
    %c0_i32 = arith.constant 0 : i32
    %c0_i32_0 = arith.constant 0 : i32
    return %arg0, %c0_i32 : i32, i32
  }
}

module attributes {stable_mosaic.version = 11 : i64} {
  func.func @_keypoint_kernel(%arg0: i32, %arg1: memref<34x192xf32, #tpu.memory_space<vmem>>, %arg2: memref<34x4xf32, #tpu.memory_space<vmem>>, %arg3: memref<1x192xf32, #tpu.memory_space<vmem>>, %arg4: memref<1x192xf32, #tpu.memory_space<vmem>>, %arg5: memref<34x3xf32, #tpu.memory_space<vmem>>) attributes {dimension_semantics = [#tpu.dimension_semantics<arbitrary>], iteration_bounds = array<i64: 1>, scalar_prefetch = 0 : i64, scratch_operands = 0 : i64, tpu.core_type = #tpu.core_type<tc>, window_params = [{pipeline_mode = #tpu.pipeline_mode<synchronous>, transform_indices = @transform_0, window_bounds = array<i64: 34, 192>}, {pipeline_mode = #tpu.pipeline_mode<synchronous>, transform_indices = @transform_1, window_bounds = array<i64: 34, 4>}, {pipeline_mode = #tpu.pipeline_mode<synchronous>, transform_indices = @transform_2, window_bounds = array<i64: 1, 192>}, {pipeline_mode = #tpu.pipeline_mode<synchronous>, transform_indices = @transform_3, window_bounds = array<i64: 1, 192>}, {pipeline_mode = #tpu.pipeline_mode<synchronous>, transform_indices = @transform_4, window_bounds = array<i64: 34, 3>}]} {
    %c0 = arith.constant 0 : index
    %c0_0 = arith.constant 0 : index
    %0 = vector.load %arg1[%c0, %c0_0] : memref<34x192xf32, #tpu.memory_space<vmem>>, vector<34x192xf32>
    %cst = arith.constant dense<0xFF800000> : vector<34xf32>
    %1 = vector.multi_reduction <maximumf>, %0, %cst [1] : vector<34x192xf32> to vector<34xf32>
    %2 = vector.shape_cast %1 : vector<34xf32> to vector<34x1xf32>
    %3 = vector.broadcast %2 : vector<34x1xf32> to vector<34x192xf32>
    %4 = arith.cmpf oge, %0, %3 : vector<34x192xf32>
    %c0_1 = arith.constant 0 : index
    %c0_2 = arith.constant 0 : index
    %5 = vector.load %arg4[%c0_1, %c0_2] : memref<1x192xf32, #tpu.memory_space<vmem>>, vector<1x192xf32>
    %cst_3 = arith.constant 1.000000e+09 : f32
    %6 = vector.shape_cast %5 : vector<1x192xf32> to vector<1x192xf32>
    %7 = vector.broadcast %6 : vector<1x192xf32> to vector<34x192xf32>
    %8 = vector.broadcast %cst_3 : f32 to vector<34x192xf32>
    %9 = arith.select %4, %7, %8 : vector<34x192xi1>, vector<34x192xf32>
    %cst_4 = arith.constant dense<0x7F800000> : vector<34xf32>
    %10 = vector.multi_reduction <minimumf>, %9, %cst_4 [1] : vector<34x192xf32> to vector<34xf32>
    %11 = vector.shape_cast %10 : vector<34xf32> to vector<34x1xf32>
    %c0_5 = arith.constant 0 : index
    %c0_6 = arith.constant 0 : index
    %12 = vector.load %arg3[%c0_5, %c0_6] : memref<1x192xf32, #tpu.memory_space<vmem>>, vector<1x192xf32>
    %cst_7 = arith.constant 1.000000e+09 : f32
    %13 = vector.shape_cast %12 : vector<1x192xf32> to vector<1x192xf32>
    %14 = vector.broadcast %13 : vector<1x192xf32> to vector<34x192xf32>
    %15 = vector.broadcast %cst_7 : f32 to vector<34x192xf32>
    %16 = arith.select %4, %14, %15 : vector<34x192xi1>, vector<34x192xf32>
    %cst_8 = arith.constant dense<0x7F800000> : vector<34xf32>
    %17 = vector.multi_reduction <minimumf>, %16, %cst_8 [1] : vector<34x192xf32> to vector<34xf32>
    %18 = vector.shape_cast %17 : vector<34xf32> to vector<34x1xf32>
    %c0_9 = arith.constant 0 : index
    %c0_10 = arith.constant 0 : index
    %19 = vector.load %arg2[%c0_9, %c0_10] : memref<34x4xf32, #tpu.memory_space<vmem>>, vector<34x1xf32>
    %c0_11 = arith.constant 0 : index
    %c1 = arith.constant 1 : index
    %20 = vector.load %arg2[%c0_11, %c1] : memref<34x4xf32, #tpu.memory_space<vmem>>, vector<34x1xf32>
    %c0_12 = arith.constant 0 : index
    %c2 = arith.constant 2 : index
    %21 = vector.load %arg2[%c0_12, %c2] : memref<34x4xf32, #tpu.memory_space<vmem>>, vector<34x1xf32>
    %c0_13 = arith.constant 0 : index
    %c3 = arith.constant 3 : index
    %22 = vector.load %arg2[%c0_13, %c3] : memref<34x4xf32, #tpu.memory_space<vmem>>, vector<34x1xf32>
    %cst_14 = arith.constant 0.0833333358 : f32
    %23 = vector.broadcast %cst_14 : f32 to vector<34x1xf32>
    %24 = arith.mulf %11, %23 : vector<34x1xf32>
    %25 = arith.subf %21, %19 : vector<34x1xf32>
    %26 = arith.mulf %24, %25 : vector<34x1xf32>
    %27 = arith.addf %26, %19 : vector<34x1xf32>
    %cst_15 = arith.constant 6.250000e-02 : f32
    %28 = vector.broadcast %cst_15 : f32 to vector<34x1xf32>
    %29 = arith.mulf %18, %28 : vector<34x1xf32>
    %30 = arith.subf %22, %20 : vector<34x1xf32>
    %31 = arith.mulf %29, %30 : vector<34x1xf32>
    %32 = arith.addf %31, %20 : vector<34x1xf32>
    %33 = tpu.concatenate %27, %32, %2 in 1 : vector<34x1xf32>, vector<34x1xf32>, vector<34x1xf32> -> vector<34x3xf32>
    %c0_16 = arith.constant 0 : index
    %c0_17 = arith.constant 0 : index
    %34 = vector.load %arg5[%c0_16, %c0_17] : memref<34x3xf32, #tpu.memory_space<vmem>>, vector<34x3xf32>
    tpu.vector_store %arg5[%c0_16, %c0_17], %33 {strides = array<i32>} : memref<34x3xf32, #tpu.memory_space<vmem>>, vector<34x3xf32>,
    return
  }
  func.func @transform_0(%arg0: i32) -> (i32, i32) {
    %c0_i32 = arith.constant 0 : i32
    %c0_i32_0 = arith.constant 0 : i32
    %c0_i32_1 = arith.constant 0 : i32
    return %c0_i32, %c0_i32_0 : i32, i32
  }
  func.func @transform_1(%arg0: i32) -> (i32, i32) {
    %c0_i32 = arith.constant 0 : i32
    %c0_i32_0 = arith.constant 0 : i32
    %c0_i32_1 = arith.constant 0 : i32
    return %c0_i32, %c0_i32_0 : i32, i32
  }
  func.func @transform_2(%arg0: i32) -> (i32, i32) {
    %c0_i32 = arith.constant 0 : i32
    %c0_i32_0 = arith.constant 0 : i32
    %c0_i32_1 = arith.constant 0 : i32
    return %c0_i32, %c0_i32_0 : i32, i32
  }
  func.func @transform_3(%arg0: i32) -> (i32, i32) {
    %c0_i32 = arith.constant 0 : i32
    %c0_i32_0 = arith.constant 0 : i32
    %c0_i32_1 = arith.constant 0 : i32
    return %c0_i32, %c0_i32_0 : i32, i32
  }
  func.func @transform_4(%arg0: i32) -> (i32, i32) {
    %c0_i32 = arith.constant 0 : i32
    %c0_i32_0 = arith.constant 0 : i32
    %c0_i32_1 = arith.constant 0 : i32
    return %c0_i32, %c0_i32_0 : i32, i32
  }
}

</mosaic_0001>

<llo_original>
// kernel: model_forward.5
$region0: #{model_forward.5}
  #allocation0 [shape = 'u32[]', space=smem, size = 0x4, offset = 0x4, fixed_abs, tag = 'smem constant byte address 0x4 - core index']
  #allocation1 [shape = 'u32[144,128]{1,0:T(1,128)}', space=vmem, size = 0x12000, scoped, tag = 'internal scratch']
  %s0 = inlined_call_operand.vmem [shape: f32[24,288], index: 0, kind: input, shape index: {}]
  %s1 = inlined_call_operand.vmem [shape: bf16[288,128], index: 1, kind: input, shape index: {}]
  %s2 = inlined_call_operand.vmem [shape: f32[1,128], index: 2, kind: input, shape index: {}]
  %s3 = inlined_call_operand.vmem [shape: f32[24,128], index: 3, kind: output, shape index: {}]
  %s4 = sld [smem:[#allocation0]]
  $region22: #{model_forward.5} parent=0
    _
  %s6 = ssub.s32 1, %s4
  %s7 = scalar_select 0, %s6, %s4
  // Predicated region
  $region2: #{model_forward.5} parent=0 // pred_check
    _
  $region3: #{model_forward.5} parent=0 // pred_check_branch
    %9 = sbr.rel (0) target = $region5
  $region4: #{model_forward.5} parent=0 // pred_region
    _
  $region5: #{model_forward.5} parent=0 // pred_fallthru
    _
  // Predicated region
  $region6: #{model_forward.5} parent=0 // pred_check
    _
  $region7: #{model_forward.5} parent=0 // pred_check_branch
    %11 = sbr.rel (0) target = $region9
  $region8: #{model_forward.5} parent=0 // pred_region
    _
  $region9: #{model_forward.5} parent=0 // pred_fallthru
    _
  // Predicated region
  $region10: #{model_forward.5} parent=0 // pred_check
    _
  $region11: #{model_forward.5} parent=0 // pred_check_branch
    %13 = sbr.rel (0) target = $region13
  $region12: #{model_forward.5} parent=0 // pred_region
    _
  $region13: #{model_forward.5} parent=0 // pred_fallthru
    _
  %v15 = vld [vmem:[%s0] sm:$0xff]
  %v16 = vld [vmem:[%s0 + $0x8] sm:$0xff]
  %v17 = vld [vmem:[%s0 + $0x10] sm:$0xff]
  %v18 = vld [vmem:[%s0 + $0x18] sm:$0xff]
  %v19 = vld [vmem:[%s0 + $0x20] sm:$0xff]
  %v20 = vld [vmem:[%s0 + $0x28] sm:$0xff]
  %v21 = vld [vmem:[%s0 + $0x30] sm:$0xff]
  %v22 = vld [vmem:[%s0 + $0x38] sm:$0xff]
  %v23 = vld [vmem:[%s0 + $0x40] sm:$0xff]
  %v24 = vpack.c.bf16 %v18, %v15
  %v25 = vpack.c.bf16 %v19, %v16
  %v26 = vpack.c.bf16 %v20, %v17
  %v27 = vpack.c.bf16 %v21, %v21
  %v28 = vpack.c.bf16 %v22, %v22
  %v29 = vpack.c.bf16 %v23, %v23
  %v30 = vld [vmem:[%s1] sm:$0xf]
  %v31 = vld [vmem:[%s1 + $0x4] sm:$0xf]
  %v32 = vld [vmem:[%s1 + $0x8] sm:$0xf]
  %v33 = vld [vmem:[%s1 + $0xc] sm:$0xf]
  %v34 = vld [vmem:[%s1 + $0x10] sm:$0xf]
  %v35 = vld [vmem:[%s1 + $0x14] sm:$0xf]
  %v36 = vld [vmem:[%s1 + $0x18] sm:$0xf]
  %v37 = vld [vmem:[%s1 + $0x1c] sm:$0xf]
  %v38 = vld [vmem:[%s1 + $0x20] sm:$0xf]
  %v39 = vld [vmem:[%s1 + $0x24] sm:$0xf]
  %v40 = vld [vmem:[%s1 + $0x28] sm:$0xf]
  %v41 = vld [vmem:[%s1 + $0x2c] sm:$0xf]
  %v42 = vld [vmem:[%s1 + $0x30] sm:$0xf]
  %v43 = vld [vmem:[%s1 + $0x34] sm:$0xf]
  %v44 = vld [vmem:[%s1 + $0x38] sm:$0xf]
  %v45 = vld [vmem:[%s1 + $0x3c] sm:$0xf]
  %v46 = vld [vmem:[%s1 + $0x40] sm:$0xf]
  %v47 = vld [vmem:[%s1 + $0x44] sm:$0xf]
  %v48 = vld [vmem:[%s1 + $0x48] sm:$0xf]
  %v49 = vld [vmem:[%s1 + $0x4c] sm:$0xf]
  %v50 = vld [vmem:[%s1 + $0x50] sm:$0xf]
  %v51 = vld [vmem:[%s1 + $0x54] sm:$0xf]
  %v52 = vld [vmem:[%s1 + $0x58] sm:$0xf]
  %v53 = vld [vmem:[%s1 + $0x5c] sm:$0xf]
  %v54 = vld [vmem:[%s1 + $0x60] sm:$0xf]
  %v55 = vld [vmem:[%s1 + $0x64] sm:$0xf]
  %v56 = vld [vmem:[%s1 + $0x68] sm:$0xf]
  %v57 = vld [vmem:[%s1 + $0x6c] sm:$0xf]
  %v58 = vld [vmem:[%s1 + $0x70] sm:$0xf]
  %v59 = vld [vmem:[%s1 + $0x74] sm:$0xf]
  %v60 = vld [vmem:[%s1 + $0x78] sm:$0xf]
  %v61 = vld [vmem:[%s1 + $0x7c] sm:$0xf]
  %v62 = vld [vmem:[%s1 + $0x80] sm:$0xf]
  %v63 = vld [vmem:[%s1 + $0x84] sm:$0xf]
  %v64 = vld [vmem:[%s1 + $0x88] sm:$0xf]
  %v65 = vld [vmem:[%s1 + $0x8c] sm:$0xf]
  %v66 = vld [vmem:[%s2] sm:$0x1]
  %v68 = vlaneseq
  %v69 = vshrl.u32 %v68, 7
  %v70 = vsub.s32 0, %v69
  %v71 = vrot.slane %v66, %v70
  %v109 = vunpack.c.l.b16 %v30
  %v110 = vunpack.c.l.b16 %v31
  %v111 = vunpack.c.l.b16 %v32
  %v112 = vunpack.c.l.b16 %v33
  %v113 = vunpack.c.l.b16 %v34
  %v114 = vunpack.c.l.b16 %v35
  %v115 = vunpack.c.l.b16 %v36
  %v116 = vunpack.c.l.b16 %v37
  %v117 = vunpack.c.l.b16 %v38
  %v118 = vunpack.c.l.b16 %v39
  %v119 = vunpack.c.l.b16 %v40
  %v120 = vunpack.c.l.b16 %v41
  %v121 = vunpack.c.l.b16 %v42
  %v122 = vunpack.c.l.b16 %v43
  %v123 = vunpack.c.l.b16 %v44
  %v124 = vunpack.c.l.b16 %v45
  %v125 = vunpack.c.l.b16 %v46
  %v126 = vunpack.c.l.b16 %v47
  %v127 = vunpack.c.l.b16 %v48
  %v128 = vunpack.c.l.b16 %v49
  %v129 = vunpack.c.l.b16 %v50
  %v130 = vunpack.c.l.b16 %v51
  %v131 = vunpack.c.l.b16 %v52
  %v132 = vunpack.c.l.b16 %v53
  %v133 = vunpack.c.l.b16 %v54
  %v134 = vunpack.c.l.b16 %v55
  %v135 = vunpack.c.l.b16 %v56
  %v136 = vunpack.c.l.b16 %v57
  %v137 = vunpack.c.l.b16 %v58
  %v138 = vunpack.c.l.b16 %v59
  %v139 = vunpack.c.l.b16 %v60
  %v140 = vunpack.c.l.b16 %v61
  %v141 = vunpack.c.l.b16 %v62
  %v142 = vunpack.c.l.b16 %v63
  %v143 = vunpack.c.l.b16 %v64
  %v144 = vunpack.c.l.b16 %v65
  %v145 = vpack.c.b16 %v110, %v109
  %v146 = vpack.c.b16 %v112, %v111
  %v147 = vpack.c.b16 %v114, %v113
  %v148 = vpack.c.b16 %v116, %v115
  %v149 = vpack.c.b16 %v118, %v117
  %v150 = vpack.c.b16 %v120, %v119
  %v151 = vpack.c.b16 %v122, %v121
  %v152 = vpack.c.b16 %v124, %v123
  %v153 = vpack.c.b16 %v126, %v125
  %v154 = vpack.c.b16 %v128, %v127
  %v155 = vpack.c.b16 %v130, %v129
  %v156 = vpack.c.b16 %v132, %v131
  %v157 = vpack.c.b16 %v134, %v133
  %v158 = vpack.c.b16 %v136, %v135
  %v159 = vpack.c.b16 %v138, %v137
  %v160 = vpack.c.b16 %v140, %v139
  %v161 = vpack.c.b16 %v142, %v141
  %v162 = vpack.c.b16 %v144, %v143
  %vm181 = vcmask 261120
  %v183 = vsel %vm181, %v26, 0
  %v186 = vsel %vm181, %v29, 0
  %188 = vmatprep.subr.bf16.mxu0 0
  %189 = vmatpush1.bf16.msra.mxu0 %v145
  %190 = vmatprep.subr.bf16.mxu0 0
  %191 = vmatpush1.bf16.msra.mxu0 %v146
  %192 = vmatprep.subr.bf16.mxu0 0
  %193 = vmatpush1.bf16.msra.mxu0 %v147
  %194 = vmatprep.subr.bf16.mxu0 0
  %195 = vmatpush1.bf16.msra.mxu0 %v148
  %196 = vmatprep.subr.bf16.mxu0 0
  %197 = vmatpush1.bf16.msra.mxu0 %v149
  %198 = vmatprep.subr.bf16.mxu0 0
  %199 = vmatpush1.bf16.msra.mxu0 %v150
  %200 = vmatprep.subr.bf16.mxu0 0
  %201 = vmatpush1.bf16.msra.mxu0 %v151
  %202 = vmatprep.subr.bf16.mxu0 0
  %203 = vmatpush1.bf16.msra.mxu0 %v152
  %204 = vmatprep.subr.bf16.mxu0 0
  %205 = vmatpush1.bf16.msra.mxu0 %v153
  %206 = vmatprep.subr.bf16.mxu0 0
  %207 = vmatpush1.bf16.msra.mxu0 %v154
  %208 = vmatprep.subr.bf16.mxu0 0
  %209 = vmatpush1.bf16.msra.mxu0 %v155
  %210 = vmatprep.subr.bf16.mxu0 0
  %211 = vmatpush1.bf16.msra.mxu0 %v156
  %212 = vmatprep.subr.bf16.mxu0 0
  %213 = vmatpush1.bf16.msra.mxu0 %v157
  %214 = vmatprep.subr.bf16.mxu0 0
  %215 = vmatpush1.bf16.msra.mxu0 %v158
  %216 = vmatprep.subr.bf16.mxu0 0
  %217 = vmatpush1.bf16.msra.mxu0 %v159
  %218 = vmatprep.subr.bf16.mxu0 0
  %219 = vmatpush1.bf16.msra.mxu0 %v160
  %220 = vmatprep.mubr.bf16.mxu0 %v25
  %221 = vmatmul.mubr.bf16.gmra.mrb[0].mxu0 %v24
  %v222 = vpop.f32.mrb[0].mxu0
  %v223 = vadd.f32 %v71, %v222
  %v224 = vpop.f32.mrb[0].mxu0
  %v225 = vpop.f32.mrb[0].mxu0
  %v226 = vadd.f32 %v71, %v225
  %v227 = vpop.f32.mrb[0].mxu0
  %228 = vmatprep.mubr.bf16.mxu0 %v28
  %229 = vmatmul.mubr.bf16.gmra.mrb[0].mxu0 %v27
  %v230 = vpop.f32.mrb[0].mxu0
  %v231 = vadd.f32 %v71, %v230
  %v232 = vpop.f32.mrb[0].mxu0
  %v233 = vpop.f32.mrb[0].mxu0
  %v234 = vpop.f32.mrb[0].mxu0
  %235 = vdwg.mxu0
  %236 = vmatprep.subr.bf16.mxu0 0
  %237 = vmatpush1.bf16.msra.mxu0 %v161
  %238 = vmatprep.subr.bf16.mxu0 0
  %239 = vmatpush1.bf16.msra.mxu0 %v162
  %240 = vmatprep.subr.bf16.mxu0 0
  %241 = vmatpush1.bf16.msra.mxu0 0
  %242 = vmatprep.subr.bf16.mxu0 0
  %243 = vmatpush1.bf16.msra.mxu0 0
  %244 = vmatprep.subr.bf16.mxu0 0
  %245 = vmatpush1.bf16.msra.mxu0 0
  %246 = vmatprep.subr.bf16.mxu0 0
  %247 = vmatpush1.bf16.msra.mxu0 0
  %248 = vmatprep.subr.bf16.mxu0 0
  %249 = vmatpush1.bf16.msra.mxu0 0
  %250 = vmatprep.subr.bf16.mxu0 0
  %251 = vmatpush1.bf16.msra.mxu0 0
  %252 = vmatprep.subr.bf16.mxu0 0
  %253 = vmatpush1.bf16.msra.mxu0 0
  %254 = vmatprep.subr.bf16.mxu0 0
  %255 = vmatpush1.bf16.msra.mxu0 0
  %256 = vmatprep.subr.bf16.mxu0 0
  %257 = vmatpush1.bf16.msra.mxu0 0
  %258 = vmatprep.subr.bf16.mxu0 0
  %259 = vmatpush1.bf16.msra.mxu0 0
  %260 = vmatprep.subr.bf16.mxu0 0
  %261 = vmatpush1.bf16.msra.mxu0 0
  %262 = vmatprep.subr.bf16.mxu0 0
  %263 = vmatpush1.bf16.msra.mxu0 0
  %264 = vmatprep.subr.bf16.mxu0 0
  %265 = vmatpush1.bf16.msra.mxu0 0
  %266 = vmatprep.subr.bf16.mxu0 0
  %267 = vmatpush1.bf16.msra.mxu0 0
  %268 = vmatprep.mubr.bf16.mxu0 0
  %269 = vmatmul.mubr.bf16.gmra.mrb[0].mxu0 %v183
  %v270 = vpop.f32.mrb[0].mxu0
  %v271 = vadd.f32 %v223, %v270
  %v272 = vpop.f32.mrb[0].mxu0
  %v273 = vpop.f32.mrb[0].mxu0
  %v274 = vadd.f32 %v226, %v273
  %v275 = vpop.f32.mrb[0].mxu0
  %276 = vmatprep.mubr.bf16.mxu0 0
  %277 = vmatmul.mubr.bf16.gmra.mrb[0].mxu0 %v186
  %v278 = vpop.f32.mrb[0].mxu0
  %v279 = vadd.f32 %v231, %v278
  %v280 = vpop.f32.mrb[0].mxu0
  %v281 = vpop.f32.mrb[0].mxu0
  %v282 = vpop.f32.mrb[0].mxu0
  %283 = vdwg.mxu0
  %v284 = vmax.f32 %v271, 0.0
  %v285 = vmax.f32 %v274, 0.0
  %v286 = vmax.f32 %v279, 0.0
  %287 = vst [vmem:[%s3] sm:$0xff] %v284
  %288 = vst [vmem:[%s3 + $0x8] sm:$0xff] %v285
  %289 = vst [vmem:[%s3 + $0x10] sm:$0xff] %v286
  // Predicated region
  $region14: #{model_forward.5} parent=0 // pred_check
    _
  $region15: #{model_forward.5} parent=0 // pred_check_branch
    %291 = sbr.rel (0) target = $region17
  $region16: #{model_forward.5} parent=0 // pred_region
    _
  $region17: #{model_forward.5} parent=0 // pred_fallthru
    _
  // Predicated region
  $region18: #{model_forward.5} parent=0 // pred_check
    _
  $region19: #{model_forward.5} parent=0 // pred_check_branch
    %293 = sbr.rel (0) target = $region21
  $region20: #{model_forward.5} parent=0 // pred_region
    _
  $region21: #{model_forward.5} parent=0 // pred_fallthru
    _

// kernel: model_forward.6
$region0: #{model_forward.6}
  #allocation0 [shape = 'u32[]', space=smem, size = 0x4, offset = 0x4, fixed_abs, tag = 'smem constant byte address 0x4 - core index']
  #allocation1 [shape = 'u32[144,128]{1,0:T(1,128)}', space=vmem, size = 0x12000, scoped, tag = 'internal scratch']
  %s0 = inlined_call_operand.vmem [shape: f32[96,288], index: 0, kind: input, shape index: {}]
  %s1 = inlined_call_operand.vmem [shape: bf16[288,128], index: 1, kind: input, shape index: {}]
  %s2 = inlined_call_operand.vmem [shape: f32[1,128], index: 2, kind: input, shape index: {}]
  %s3 = inlined_call_operand.vmem [shape: bf16[128,68], index: 3, kind: input, shape index: {}]
  %s4 = inlined_call_operand.vmem [shape: f32[1,68], index: 4, kind: input, shape index: {}]
  %s5 = inlined_call_operand.vmem [shape: f32[96,68], index: 5, kind: output, shape index: {}]
  %s6 = sld [smem:[#allocation0]]
  $region53: #{model_forward.6} parent=0
    _
  %s8 = ssub.s32 1, %s6
  %s9 = scalar_select 0, %s8, %s6
  loop: start=0, step=1, limit=4
  $region2: #{model_forward.6} parent=0 // loop_pre_header
    _
  $region3: #{model_forward.6} parent=0 // loop_header
    %s11 = sphi 0, %s15
    %p12 = scmp.ge.s32.totalorder %s11, 4
    %s21 = sphi 0, %s23
    %s24 = sphi 0, %s21
    %s25 = sphi 0, %s24
    %s41 = sphi 0, %s25
    %s45 = sphi 0, %s45
    %s47 = sphi 0, %s45
    %s48 = sphi 0, %s47
    %s62 = sphi 0, %s48
    %s66 = sphi 0, %s66
    %s68 = sphi 0, %s66
    %s69 = sphi 0, %s68
    %s83 = sphi 0, %s69
    %s87 = sphi 0, %s87
    %s89 = sphi 0, %s87
    %s90 = sphi 0, %s89
    %s104 = sphi 0, %s90
    %s108 = sphi 0, %s108
    %s110 = sphi 0, %s108
    %s111 = sphi 0, %s110
    %s125 = sphi 0, %s111
    %s131 = sphi 0, %s133
    %s134 = sphi 0, %s131
    %s135 = sphi 0, %s134
    %s151 = sphi 0, %s135
  $region4: #{model_forward.6} parent=0 // loop_header_branch
    %14 = sbr.rel (%p12) target = $region8
  $region5: #{model_forward.6} parent=0 // loop_body
    %s16 = ssub.s32 %s11, 1
    %s17 = ssub.s32 %s11, 2
    %s18 = sadd.s32 %s11, 1
    %s19 = ssub.s32 %s11, %s18
    %p20 = scmp.eq.s32.totalorder %s19, 0
    %s22 = sadd.s32 %s21, 1
    %s23 = scalar_select %p20, %s21, %s22
    %p26 = pneg %p20
    %p27 = scmp.eq.s32.totalorder %s11, 1
    %p28 = por %p26, %p27
    %p29 = scmp.ne.s32.totalorder %s21, %s24
    %p30 = scmp.eq.s32.totalorder %s11, 0
    %p31 = por %p29, %p30
    %p32 = scmp.ne.s32.totalorder %s21, %s24
    %p33 = scmp.eq.s32.totalorder %s16, 1
    %p34 = por %p32, %p33
    %p35 = scmp.ne.s32.totalorder %s24, %s25
    %p36 = scmp.eq.s32.totalorder %s16, 0
    %p37 = por %p35, %p36
    %p38 = scmp.ne.s32.totalorder %s24, %s25
    %p39 = scmp.eq.s32.totalorder %s17, 1
    %p40 = por %p38, %p39
    %p42 = scmp.ne.s32.totalorder %s25, %s41
    %p43 = scmp.eq.s32.totalorder %s17, 0
    %p44 = por %p42, %p43
    %s46 = sadd.s32 %s45, 1
    %p49 = scmp.eq.s32.totalorder %s11, 1
    %p50 = scmp.ne.s32.totalorder %s45, %s47
    %p51 = scmp.eq.s32.totalorder %s11, 0
    %p52 = por %p50, %p51
    %p53 = scmp.ne.s32.totalorder %s45, %s47
    %p54 = scmp.eq.s32.totalorder %s16, 1
    %p55 = por %p53, %p54
    %p56 = scmp.ne.s32.totalorder %s47, %s48
    %p57 = scmp.eq.s32.totalorder %s16, 0
    %p58 = por %p56, %p57
    %p59 = scmp.ne.s32.totalorder %s47, %s48
    %p60 = scmp.eq.s32.totalorder %s17, 1
    %p61 = por %p59, %p60
    %p63 = scmp.ne.s32.totalorder %s48, %s62
    %p64 = scmp.eq.s32.totalorder %s17, 0
    %p65 = por %p63, %p64
    %s67 = sadd.s32 %s66, 1
    %p70 = scmp.eq.s32.totalorder %s11, 1
    %p71 = scmp.ne.s32.totalorder %s66, %s68
    %p72 = scmp.eq.s32.totalorder %s11, 0
    %p73 = por %p71, %p72
    %p74 = scmp.ne.s32.totalorder %s66, %s68
    %p75 = scmp.eq.s32.totalorder %s16, 1
    %p76 = por %p74, %p75
    %p77 = scmp.ne.s32.totalorder %s68, %s69
    %p78 = scmp.eq.s32.totalorder %s16, 0
    %p79 = por %p77, %p78
    %p80 = scmp.ne.s32.totalorder %s68, %s69
    %p81 = scmp.eq.s32.totalorder %s17, 1
    %p82 = por %p80, %p81
    %p84 = scmp.ne.s32.totalorder %s69, %s83
    %p85 = scmp.eq.s32.totalorder %s17, 0
    %p86 = por %p84, %p85
    %s88 = sadd.s32 %s87, 1
    %p91 = scmp.eq.s32.totalorder %s11, 1
    %p92 = scmp.ne.s32.totalorder %s87, %s89
    %p93 = scmp.eq.s32.totalorder %s11, 0
    %p94 = por %p92, %p93
    %p95 = scmp.ne.s32.totalorder %s87, %s89
    %p96 = scmp.eq.s32.totalorder %s16, 1
    %p97 = por %p95, %p96
    %p98 = scmp.ne.s32.totalorder %s89, %s90
    %p99 = scmp.eq.s32.totalorder %s16, 0
    %p100 = por %p98, %p99
    %p101 = scmp.ne.s32.totalorder %s89, %s90
    %p102 = scmp.eq.s32.totalorder %s17, 1
    %p103 = por %p101, %p102
    %p105 = scmp.ne.s32.totalorder %s90, %s104
    %p106 = scmp.eq.s32.totalorder %s17, 0
    %p107 = por %p105, %p106
    %s109 = sadd.s32 %s108, 1
    %p112 = scmp.eq.s32.totalorder %s11, 1
    %p113 = scmp.ne.s32.totalorder %s108, %s110
    %p114 = scmp.eq.s32.totalorder %s11, 0
    %p115 = por %p113, %p114
    %p116 = scmp.ne.s32.totalorder %s108, %s110
    %p117 = scmp.eq.s32.totalorder %s16, 1
    %p118 = por %p116, %p117
    %p119 = scmp.ne.s32.totalorder %s110, %s111
    %p120 = scmp.eq.s32.totalorder %s16, 0
    %p121 = por %p119, %p120
    %p122 = scmp.ne.s32.totalorder %s110, %s111
    %p123 = scmp.eq.s32.totalorder %s17, 1
    %p124 = por %p122, %p123
    %p126 = scmp.ne.s32.totalorder %s111, %s125
    %p127 = scmp.eq.s32.totalorder %s17, 0
    %p128 = por %p126, %p127
    %s129 = ssub.s32 %s11, %s18
    %p130 = scmp.eq.s32.totalorder %s129, 0
    %s132 = sadd.s32 %s131, 1
    %s133 = scalar_select %p130, %s131, %s132
    %p136 = pneg %p130
    %p137 = scmp.eq.s32.totalorder %s11, 1
    %p138 = por %p136, %p137
    %p139 = scmp.ne.s32.totalorder %s131, %s134
    %p140 = scmp.eq.s32.totalorder %s11, 0
    %p141 = por %p139, %p140
    %p142 = scmp.ne.s32.totalorder %s131, %s134
    %p143 = scmp.eq.s32.totalorder %s16, 1
    %p144 = por %p142, %p143
    %p145 = scmp.ne.s32.totalorder %s134, %s135
    %p146 = scmp.eq.s32.totalorder %s16, 0
    %p147 = por %p145, %p146
    %p148 = scmp.ne.s32.totalorder %s134, %s135
    %p149 = scmp.eq.s32.totalorder %s17, 1
    %p150 = por %p148, %p149
    %p152 = scmp.ne.s32.totalorder %s135, %s151
    %p153 = scmp.eq.s32.totalorder %s17, 0
    %p154 = por %p152, %p153
    %p155 = scmp.le.s32.totalorder 1, %s11
    %p156 = scmp.lt.s32.totalorder %s11, 3
    %p157 = pnand %p155, %p156
    %p158 = pneg %p157
    // Predicated region
    $region9: #{model_forward.6} parent=5 // pred_check
      _
    $region10: #{model_forward.6} parent=5 // pred_check_branch
      %160 = sbr.rel (%p157) target = $region12
    $region11: #{model_forward.6} parent=5 // pred_region
      %s161 = ssub.s32 %s11, 1
      // Predicated region
      $region13: #{model_forward.6} parent=11 // pred_check
        %p162 = pneg %p58
      $region14: #{model_forward.6} parent=11 // pred_check_branch
        %164 = sbr.rel (%p162) target = $region16
      $region15: #{model_forward.6} parent=11 // pred_region
        _
      $region16: #{model_forward.6} parent=11 // pred_fallthru
        _
      // Predicated region
      $region17: #{model_forward.6} parent=11 // pred_check
        %p165 = pneg %p79
      $region18: #{model_forward.6} parent=11 // pred_check_branch
        %167 = sbr.rel (%p165) target = $region20
      $region19: #{model_forward.6} parent=11 // pred_region
        _
      $region20: #{model_forward.6} parent=11 // pred_fallthru
        _
      // Predicated region
      $region21: #{model_forward.6} parent=11 // pred_check
        %p168 = pneg %p100
      $region22: #{model_forward.6} parent=11 // pred_check_branch
        %170 = sbr.rel (%p168) target = $region24
      $region23: #{model_forward.6} parent=11 // pred_region
        _
      $region24: #{model_forward.6} parent=11 // pred_fallthru
        _
      // Predicated region
      $region25: #{model_forward.6} parent=11 // pred_check
        %p171 = pneg %p121
      $region26: #{model_forward.6} parent=11 // pred_check_branch
        %173 = sbr.rel (%p171) target = $region28
      $region27: #{model_forward.6} parent=11 // pred_region
        _
      $region28: #{model_forward.6} parent=11 // pred_fallthru
        _
    $region12: #{model_forward.6} parent=5 // pred_fallthru
      _
    %p174 = scmp.lt.s32.totalorder %s11, 2
    // Predicated region
    $region29: #{model_forward.6} parent=5 // pred_check
      %p175 = pneg %p174
    $region30: #{model_forward.6} parent=5 // pred_check_branch
      %177 = sbr.rel (%p175) target = $region32
    $region31: #{model_forward.6} parent=5 // pred_region
      // Predicated region
      $region33: #{model_forward.6} parent=31 // pred_check
        %p178 = pneg %p31
      $region34: #{model_forward.6} parent=31 // pred_check_branch
        %180 = sbr.rel (%p178) target = $region36
      $region35: #{model_forward.6} parent=31 // pred_region
        %s181 = smul.u32 6, %s11
        %p182 = scmp.lt.s32.totalorder %s181, 11
        %s183 = scalar_select %p182, %s181, 11
        %s184 = smul.addr %s183, 3
        %s185 = smul.addr %s184, 8
        %s186 = scalar_lea.vmem %s0, %s185
        %s187 = smul.u32 6, %s11
      $region36: #{model_forward.6} parent=31 // pred_fallthru
        _
    $region32: #{model_forward.6} parent=5 // pred_fallthru
      _
    %p188 = scmp.le.s32.totalorder 1, %s11
    %p189 = scmp.lt.s32.totalorder %s11, 3
    %p190 = pnand %p188, %p189
    %p191 = pneg %p190
    // Predicated region
    $region37: #{model_forward.6} parent=5 // pred_check
      _
    $region38: #{model_forward.6} parent=5 // pred_check_branch
      %193 = sbr.rel (%p190) target = $region40
    $region39: #{model_forward.6} parent=5 // pred_region
      %s194 = ssub.s32 %s11, 1
      %s195 = smul.u32 6, %s16
      %p196 = scmp.lt.s32.totalorder %s195, 11
      %s197 = scalar_select %p196, %s195, 11
      %s198 = smul.addr %s197, 3
      %s199 = smul.addr %s198, 8
      %s200 = scalar_lea.vmem %s0, %s199
      %p201 = pneg %p37
      %p202 = pneg %p34
      %p203 = pneg %p58
      %p204 = pneg %p55
      %p205 = pneg %p79
      %p206 = pneg %p76
      %p207 = pneg %p100
      %p208 = pneg %p97
      %p209 = pneg %p121
      %p210 = pneg %p118
      %p211 = pneg %p147
      %p212 = pneg %p144
      %s213 = smul.u32 6, %s16
      %p214 = scmp.lt.s32.totalorder %s213, 11
      %s215 = scalar_select %p214, %s213, 11
      %s216 = smul.addr %s215, 8
      %s217 = scalar_lea.vmem %s5, %s216
      %s218 = smul.u32 6, %s16
      %p219 = scmp.lt.s32.totalorder %s218, 11
      %s220 = scalar_select %p219, %s218, 11
      %s221 = smul.addr %s220, 3
      %s222 = smul.addr %s221, 8
      %s223 = scalar_lea.vmem %s0, %s222
      %s224 = smul.u32 6, %s16
      %s225 = smul.u32 6, %s16
      %p226 = scmp.lt.s32.totalorder %s225, 11
      %s227 = scalar_select %p226, %s225, 11
      %s228 = smul.addr %s227, 8
      %s229 = scalar_lea.vmem %s5, %s228
      %s230 = smul.u32 6, %s16
      %v232 = vld [vmem:[%s223] sm:$0xff]
      %v233 = vld [vmem:[%s223 + $0x8] sm:$0xff]
      %v234 = vld [vmem:[%s223 + $0x10] sm:$0xff]
      %v235 = vld [vmem:[%s223 + $0x18] sm:$0xff]
      %v236 = vld [vmem:[%s223 + $0x20] sm:$0xff]
      %v237 = vld [vmem:[%s223 + $0x28] sm:$0xff]
      %v238 = vld [vmem:[%s223 + $0x30] sm:$0xff]
      %v239 = vld [vmem:[%s223 + $0x38] sm:$0xff]
      %v240 = vld [vmem:[%s223 + $0x40] sm:$0xff]
      %v241 = vld [vmem:[%s223 + $0x48] sm:$0xff]
      %v242 = vld [vmem:[%s223 + $0x50] sm:$0xff]
      %v243 = vld [vmem:[%s223 + $0x58] sm:$0xff]
      %v244 = vld [vmem:[%s223 + $0x60] sm:$0xff]
      %v245 = vld [vmem:[%s223 + $0x68] sm:$0xff]
      %v246 = vld [vmem:[%s223 + $0x70] sm:$0xff]
      %v247 = vld [vmem:[%s223 + $0x78] sm:$0xff]
      %v248 = vld [vmem:[%s223 + $0x80] sm:$0xff]
      %v249 = vld [vmem:[%s223 + $0x88] sm:$0xff]
      %v250 = vpack.c.bf16 %v235, %v232
      %v251 = vpack.c.bf16 %v236, %v233
      %v252 = vpack.c.bf16 %v237, %v234
      %v253 = vpack.c.bf16 %v241, %v238
      %v254 = vpack.c.bf16 %v242, %v239
      %v255 = vpack.c.bf16 %v243, %v240
      %v256 = vpack.c.bf16 %v247, %v244
      %v257 = vpack.c.bf16 %v248, %v245
      %v258 = vpack.c.bf16 %v249, %v246
      %v259 = vld [vmem:[%s1] sm:$0xf]
      %v260 = vld [vmem:[%s1 + $0x4] sm:$0xf]
      %v261 = vld [vmem:[%s1 + $0x8] sm:$0xf]
      %v262 = vld [vmem:[%s1 + $0xc] sm:$0xf]
      %v263 = vld [vmem:[%s1 + $0x10] sm:$0xf]
      %v264 = vld [vmem:[%s1 + $0x14] sm:$0xf]
      %v265 = vld [vmem:[%s1 + $0x18] sm:$0xf]
      %v266 = vld [vmem:[%s1 + $0x1c] sm:$0xf]
      %v267 = vld [vmem:[%s1 + $0x20] sm:$0xf]
      %v268 = vld [vmem:[%s1 + $0x24] sm:$0xf]
      %v269 = vld [vmem:[%s1 + $0x28] sm:$0xf]
      %v270 = vld [vmem:[%s1 + $0x2c] sm:$0xf]
      %v271 = vld [vmem:[%s1 + $0x30] sm:$0xf]
      %v272 = vld [vmem:[%s1 + $0x34] sm:$0xf]
      %v273 = vld [vmem:[%s1 + $0x38] sm:$0xf]
      %v274 = vld [vmem:[%s1 + $0x3c] sm:$0xf]
      %v275 = vld [vmem:[%s1 + $0x40] sm:$0xf]
      %v276 = vld [vmem:[%s1 + $0x44] sm:$0xf]
      %v277 = vld [vmem:[%s1 + $0x48] sm:$0xf]
      %v278 = vld [vmem:[%s1 + $0x4c] sm:$0xf]
      %v279 = vld [vmem:[%s1 + $0x50] sm:$0xf]
      %v280 = vld [vmem:[%s1 + $0x54] sm:$0xf]
      %v281 = vld [vmem:[%s1 + $0x58] sm:$0xf]
      %v282 = vld [vmem:[%s1 + $0x5c] sm:$0xf]
      %v283 = vld [vmem:[%s1 + $0x60] sm:$0xf]
      %v284 = vld [vmem:[%s1 + $0x64] sm:$0xf]
      %v285 = vld [vmem:[%s1 + $0x68] sm:$0xf]
      %v286 = vld [vmem:[%s1 + $0x6c] sm:$0xf]
      %v287 = vld [vmem:[%s1 + $0x70] sm:$0xf]
      %v288 = vld [vmem:[%s1 + $0x74] sm:$0xf]
      %v289 = vld [vmem:[%s1 + $0x78] sm:$0xf]
      %v290 = vld [vmem:[%s1 + $0x7c] sm:$0xf]
      %v291 = vld [vmem:[%s1 + $0x80] sm:$0xf]
      %v292 = vld [vmem:[%s1 + $0x84] sm:$0xf]
      %v293 = vld [vmem:[%s1 + $0x88] sm:$0xf]
      %v294 = vld [vmem:[%s1 + $0x8c] sm:$0xf]
      %v295 = vld [vmem:[%s2] sm:$0x1]
      %v297 = vlaneseq
      %v298 = vshrl.u32 %v297, 7
      %v299 = vsub.s32 0, %v298
      %v300 = vrot.slane %v295, %v299
      %v338 = vunpack.c.l.b16 %v259
      %v339 = vunpack.c.l.b16 %v260
      %v340 = vunpack.c.l.b16 %v261
      %v341 = vunpack.c.l.b16 %v262
      %v342 = vunpack.c.l.b16 %v263
      %v343 = vunpack.c.l.b16 %v264
      %v344 = vunpack.c.l.b16 %v265
      %v345 = vunpack.c.l.b16 %v266
      %v346 = vunpack.c.l.b16 %v267
      %v347 = vunpack.c.l.b16 %v268
      %v348 = vunpack.c.l.b16 %v269
      %v349 = vunpack.c.l.b16 %v270
      %v350 = vunpack.c.l.b16 %v271
      %v351 = vunpack.c.l.b16 %v272
      %v352 = vunpack.c.l.b16 %v273
      %v353 = vunpack.c.l.b16 %v274
      %v354 = vunpack.c.l.b16 %v275
      %v355 = vunpack.c.l.b16 %v276
      %v356 = vunpack.c.l.b16 %v277
      %v357 = vunpack.c.l.b16 %v278
      %v358 = vunpack.c.l.b16 %v279
      %v359 = vunpack.c.l.b16 %v280
      %v360 = vunpack.c.l.b16 %v281
      %v361 = vunpack.c.l.b16 %v282
      %v362 = vunpack.c.l.b16 %v283
      %v363 = vunpack.c.l.b16 %v284
      %v364 = vunpack.c.l.b16 %v285
      %v365 = vunpack.c.l.b16 %v286
      %v366 = vunpack.c.l.b16 %v287
      %v367 = vunpack.c.l.b16 %v288
      %v368 = vunpack.c.l.b16 %v289
      %v369 = vunpack.c.l.b16 %v290
      %v370 = vunpack.c.l.b16 %v291
      %v371 = vunpack.c.l.b16 %v292
      %v372 = vunpack.c.l.b16 %v293
      %v373 = vunpack.c.l.b16 %v294
      %v374 = vpack.c.b16 %v339, %v338
      %v375 = vpack.c.b16 %v341, %v340
      %v376 = vpack.c.b16 %v343, %v342
      %v377 = vpack.c.b16 %v345, %v344
      %v378 = vpack.c.b16 %v347, %v346
      %v379 = vpack.c.b16 %v349, %v348
      %v380 = vpack.c.b16 %v351, %v350
      %v381 = vpack.c.b16 %v353, %v352
      %v382 = vpack.c.b16 %v355, %v354
      %v383 = vpack.c.b16 %v357, %v356
      %v384 = vpack.c.b16 %v359, %v358
      %v385 = vpack.c.b16 %v361, %v360
      %v386 = vpack.c.b16 %v363, %v362
      %v387 = vpack.c.b16 %v365, %v364
      %v388 = vpack.c.b16 %v367, %v366
      %v389 = vpack.c.b16 %v369, %v368
      %v390 = vpack.c.b16 %v371, %v370
      %v391 = vpack.c.b16 %v373, %v372
      %vm410 = vcmask 261120
      %v412 = vsel %vm410, %v252, 0
      %v415 = vsel %vm410, %v255, 0
      %v418 = vsel %vm410, %v258, 0
      %420 = vmatprep.subr.bf16.mxu0 0
      %421 = vmatpush1.bf16.msra.mxu0 %v374
      %422 = vmatprep.subr.bf16.mxu0 0
      %423 = vmatpush1.bf16.msra.mxu0 %v375
      %424 = vmatprep.subr.bf16.mxu0 0
      %425 = vmatpush1.bf16.msra.mxu0 %v376
      %426 = vmatprep.subr.bf16.mxu0 0
      %427 = vmatpush1.bf16.msra.mxu0 %v377
      %428 = vmatprep.subr.bf16.mxu0 0
      %429 = vmatpush1.bf16.msra.mxu0 %v378
      %430 = vmatprep.subr.bf16.mxu0 0
      %431 = vmatpush1.bf16.msra.mxu0 %v379
      %432 = vmatprep.subr.bf16.mxu0 0
      %433 = vmatpush1.bf16.msra.mxu0 %v380
      %434 = vmatprep.subr.bf16.mxu0 0
      %435 = vmatpush1.bf16.msra.mxu0 %v381
      %436 = vmatprep.subr.bf16.mxu0 0
      %437 = vmatpush1.bf16.msra.mxu0 %v382
      %438 = vmatprep.subr.bf16.mxu0 0
      %439 = vmatpush1.bf16.msra.mxu0 %v383
      %440 = vmatprep.subr.bf16.mxu0 0
      %441 = vmatpush1.bf16.msra.mxu0 %v384
      %442 = vmatprep.subr.bf16.mxu0 0
      %443 = vmatpush1.bf16.msra.mxu0 %v385
      %444 = vmatprep.subr.bf16.mxu0 0
      %445 = vmatpush1.bf16.msra.mxu0 %v386
      %446 = vmatprep.subr.bf16.mxu0 0
      %447 = vmatpush1.bf16.msra.mxu0 %v387
      %448 = vmatprep.subr.bf16.mxu0 0
      %449 = vmatpush1.bf16.msra.mxu0 %v388
      %450 = vmatprep.subr.bf16.mxu0 0
      %451 = vmatpush1.bf16.msra.mxu0 %v389
      %452 = vmatprep.mubr.bf16.mxu0 %v251
      %453 = vmatmul.mubr.bf16.gmra.mrb[0].mxu0 %v250
      %v454 = vpop.f32.mrb[0].mxu0
      %v455 = vadd.f32 %v300, %v454
      %v456 = vpop.f32.mrb[0].mxu0
      %v457 = vpop.f32.mrb[0].mxu0
      %v458 = vadd.f32 %v300, %v457
      %v459 = vpop.f32.mrb[0].mxu0
      %460 = vmatprep.mubr.bf16.mxu0 %v254
      %461 = vmatmul.mubr.bf16.gmra.mrb[0].mxu0 %v253
      %v462 = vpop.f32.mrb[0].mxu0
      %v463 = vadd.f32 %v300, %v462
      %v464 = vpop.f32.mrb[0].mxu0
      %v465 = vpop.f32.mrb[0].mxu0
      %v466 = vadd.f32 %v300, %v465
      %v467 = vpop.f32.mrb[0].mxu0
      %468 = vmatprep.mubr.bf16.mxu0 %v257
      %469 = vmatmul.mubr.bf16.gmra.mrb[0].mxu0 %v256
      %v470 = vpop.f32.mrb[0].mxu0
      %v471 = vadd.f32 %v300, %v470
      %v472 = vpop.f32.mrb[0].mxu0
      %v473 = vpop.f32.mrb[0].mxu0
      %v474 = vadd.f32 %v300, %v473
      %v475 = vpop.f32.mrb[0].mxu0
      %476 = vdwg.mxu0
      %477 = vmatprep.subr.bf16.mxu0 0
      %478 = vmatpush1.bf16.msra.mxu0 %v390
      %479 = vmatprep.subr.bf16.mxu0 0
      %480 = vmatpush1.bf16.msra.mxu0 %v391
      %481 = vmatprep.subr.bf16.mxu0 0
      %482 = vmatpush1.bf16.msra.mxu0 0
      %483 = vmatprep.subr.bf16.mxu0 0
      %484 = vmatpush1.bf16.msra.mxu0 0
      %485 = vmatprep.subr.bf16.mxu0 0
      %486 = vmatpush1.bf16.msra.mxu0 0
      %487 = vmatprep.subr.bf16.mxu0 0
      %488 = vmatpush1.bf16.msra.mxu0 0
      %489 = vmatprep.subr.bf16.mxu0 0
      %490 = vmatpush1.bf16.msra.mxu0 0
      %491 = vmatprep.subr.bf16.mxu0 0
      %492 = vmatpush1.bf16.msra.mxu0 0
      %493 = vmatprep.subr.bf16.mxu0 0
      %494 = vmatpush1.bf16.msra.mxu0 0
      %495 = vmatprep.subr.bf16.mxu0 0
      %496 = vmatpush1.bf16.msra.mxu0 0
      %497 = vmatprep.subr.bf16.mxu0 0
      %498 = vmatpush1.bf16.msra.mxu0 0
      %499 = vmatprep.subr.bf16.mxu0 0
      %500 = vmatpush1.bf16.msra.mxu0 0
      %501 = vmatprep.subr.bf16.mxu0 0
      %502 = vmatpush1.bf16.msra.mxu0 0
      %503 = vmatprep.subr.bf16.mxu0 0
      %504 = vmatpush1.bf16.msra.mxu0 0
      %505 = vmatprep.subr.bf16.mxu0 0
      %506 = vmatpush1.bf16.msra.mxu0 0
      %507 = vmatprep.subr.bf16.mxu0 0
      %508 = vmatpush1.bf16.msra.mxu0 0
      %509 = vmatprep.mubr.bf16.mxu0 0
      %510 = vmatmul.mubr.bf16.gmra.mrb[0].mxu0 %v412
      %v511 = vpop.f32.mrb[0].mxu0
      %v512 = vadd.f32 %v455, %v511
      %v513 = vpop.f32.mrb[0].mxu0
      %v514 = vpop.f32.mrb[0].mxu0
      %v515 = vadd.f32 %v458, %v514
      %v516 = vpop.f32.mrb[0].mxu0
      %517 = vmatprep.mubr.bf16.mxu0 0
      %518 = vmatmul.mubr.bf16.gmra.mrb[0].mxu0 %v415
      %v519 = vpop.f32.mrb[0].mxu0
      %v520 = vadd.f32 %v463, %v519
      %v521 = vpop.f32.mrb[0].mxu0
      %v522 = vpop.f32.mrb[0].mxu0
      %v523 = vadd.f32 %v466, %v522
      %v524 = vpop.f32.mrb[0].mxu0
      %525 = vmatprep.mubr.bf16.mxu0 0
      %526 = vmatmul.mubr.bf16.gmra.mrb[0].mxu0 %v418
      %v527 = vpop.f32.mrb[0].mxu0
      %v528 = vadd.f32 %v471, %v527
      %v529 = vpop.f32.mrb[0].mxu0
      %v530 = vpop.f32.mrb[0].mxu0
      %v531 = vadd.f32 %v474, %v530
      %v532 = vpop.f32.mrb[0].mxu0
      %533 = vdwg.mxu0
      %v534 = vmax.f32 %v512, 0.0
      %v535 = vmax.f32 %v515, 0.0
      %v536 = vmax.f32 %v520, 0.0
      %v537 = vmax.f32 %v523, 0.0
      %v538 = vmax.f32 %v528, 0.0
      %v539 = vmax.f32 %v531, 0.0
      %v540 = vpack.c.bf16 %v535, %v534
      %v541 = vpack.c.bf16 %v537, %v536
      %v542 = vpack.c.bf16 %v539, %v538
      %v543 = vld [vmem:[%s3] sm:$0xf]
      %v544 = vld [vmem:[%s3 + $0x4] sm:$0xf]
      %v545 = vld [vmem:[%s3 + $0x8] sm:$0xf]
      %v546 = vld [vmem:[%s3 + $0xc] sm:$0xf]
      %v547 = vld [vmem:[%s3 + $0x10] sm:$0xf]
      %v548 = vld [vmem:[%s3 + $0x14] sm:$0xf]
      %v549 = vld [vmem:[%s3 + $0x18] sm:$0xf]
      %v550 = vld [vmem:[%s3 + $0x1c] sm:$0xf]
      %v551 = vld [vmem:[%s3 + $0x20] sm:$0xf]
      %v552 = vld [vmem:[%s3 + $0x24] sm:$0xf]
      %v553 = vld [vmem:[%s3 + $0x28] sm:$0xf]
      %v554 = vld [vmem:[%s3 + $0x2c] sm:$0xf]
      %v555 = vld [vmem:[%s3 + $0x30] sm:$0xf]
      %v556 = vld [vmem:[%s3 + $0x34] sm:$0xf]
      %v557 = vld [vmem:[%s3 + $0x38] sm:$0xf]
      %v558 = vld [vmem:[%s3 + $0x3c] sm:$0xf]
      %v559 = vld [vmem:[%s4] sm:$0x1]
      %v561 = vlaneseq
      %v562 = vshrl.u32 %v561, 7
      %v563 = vsub.s32 0, %v562
      %v564 = vrot.slane %v559, %v563
      %v582 = vunpack.c.l.b16 %v543
      %v583 = vunpack.c.l.b16 %v544
      %v584 = vunpack.c.l.b16 %v545
      %v585 = vunpack.c.l.b16 %v546
      %v586 = vunpack.c.l.b16 %v547
      %v587 = vunpack.c.l.b16 %v548
      %v588 = vunpack.c.l.b16 %v549
      %v589 = vunpack.c.l.b16 %v550
      %v590 = vunpack.c.l.b16 %v551
      %v591 = vunpack.c.l.b16 %v552
      %v592 = vunpack.c.l.b16 %v553
      %v593 = vunpack.c.l.b16 %v554
      %v594 = vunpack.c.l.b16 %v555
      %v595 = vunpack.c.l.b16 %v556
      %v596 = vunpack.c.l.b16 %v557
      %v597 = vunpack.c.l.b16 %v558
      %v598 = vpack.c.b16 %v583, %v582
      %v599 = vpack.c.b16 %v585, %v584
      %v600 = vpack.c.b16 %v587, %v586
      %v601 = vpack.c.b16 %v589, %v588
      %v602 = vpack.c.b16 %v591, %v590
      %v603 = vpack.c.b16 %v593, %v592
      %v604 = vpack.c.b16 %v595, %v594
      %v605 = vpack.c.b16 %v597, %v596
      %614 = vmatprep.subr.bf16.mxu0 0
      %615 = vmatpush1.bf16.msra.mxu0 %v598
      %616 = vmatprep.subr.bf16.mxu0 0
      %617 = vmatpush1.bf16.msra.mxu0 %v599
      %618 = vmatprep.subr.bf16.mxu0 0
      %619 = vmatpush1.bf16.msra.mxu0 %v600
      %620 = vmatprep.subr.bf16.mxu0 0
      %621 = vmatpush1.bf16.msra.mxu0 %v601
      %622 = vmatprep.subr.bf16.mxu0 0
      %623 = vmatpush1.bf16.msra.mxu0 %v602
      %624 = vmatprep.subr.bf16.mxu0 0
      %625 = vmatpush1.bf16.msra.mxu0 %v603
      %626 = vmatprep.subr.bf16.mxu0 0
      %627 = vmatpush1.bf16.msra.mxu0 %v604
      %628 = vmatprep.subr.bf16.mxu0 0
      %629 = vmatpush1.bf16.msra.mxu0 %v605
      %630 = vmatprep.subr.bf16.mxu0 0
      %631 = vmatpush1.bf16.msra.mxu0 0
      %632 = vmatprep.subr.bf16.mxu0 0
      %633 = vmatpush1.bf16.msra.mxu0 0
      %634 = vmatprep.subr.bf16.mxu0 0
      %635 = vmatpush1.bf16.msra.mxu0 0
      %636 = vmatprep.subr.bf16.mxu0 0
      %637 = vmatpush1.bf16.msra.mxu0 0
      %638 = vmatprep.subr.bf16.mxu0 0
      %639 = vmatpush1.bf16.msra.mxu0 0
      %640 = vmatprep.subr.bf16.mxu0 0
      %641 = vmatpush1.bf16.msra.mxu0 0
      %642 = vmatprep.subr.bf16.mxu0 0
      %643 = vmatpush1.bf16.msra.mxu0 0
      %644 = vmatprep.subr.bf16.mxu0 0
      %645 = vmatpush1.bf16.msra.mxu0 0
      %646 = vmatprep.mubr.bf16.mxu0 0
      %647 = vmatmul.mubr.bf16.gmra.mrb[0].mxu0 %v540
      %v648 = vpop.f32.mrb[0].mxu0
      %v649 = vadd.f32 %v564, %v648
      %v650 = vpop.f32.mrb[0].mxu0
      %v651 = vpop.f32.mrb[0].mxu0
      %v652 = vadd.f32 %v564, %v651
      %v653 = vpop.f32.mrb[0].mxu0
      %654 = vmatprep.mubr.bf16.mxu0 0
      %655 = vmatmul.mubr.bf16.gmra.mrb[0].mxu0 %v541
      %v656 = vpop.f32.mrb[0].mxu0
      %v657 = vadd.f32 %v564, %v656
      %v658 = vpop.f32.mrb[0].mxu0
      %v659 = vpop.f32.mrb[0].mxu0
      %v660 = vadd.f32 %v564, %v659
      %v661 = vpop.f32.mrb[0].mxu0
      %662 = vmatprep.mubr.bf16.mxu0 0
      %663 = vmatmul.mubr.bf16.gmra.mrb[0].mxu0 %v542
      %v664 = vpop.f32.mrb[0].mxu0
      %v665 = vadd.f32 %v564, %v664
      %v666 = vpop.f32.mrb[0].mxu0
      %v667 = vpop.f32.mrb[0].mxu0
      %v668 = vadd.f32 %v564, %v667
      %v669 = vpop.f32.mrb[0].mxu0
      %670 = vdwg.mxu0
      %vm671 = vcmask 556032
      %672 = vst.msk [vmem:[%s229] sm:$0xff] %vm671, %v649
      %673 = vst.msk [vmem:[%s229 + $0x8] sm:$0xff] %vm671, %v652
      %674 = vst.msk [vmem:[%s229 + $0x10] sm:$0xff] %vm671, %v657
      %675 = vst.msk [vmem:[%s229 + $0x18] sm:$0xff] %vm671, %v660
      %676 = vst.msk [vmem:[%s229 + $0x20] sm:$0xff] %vm671, %v665
      %677 = vst.msk [vmem:[%s229 + $0x28] sm:$0xff] %vm671, %v668
      %s678 = smul.u32 6, %s16
      %p679 = scmp.lt.s32.totalorder %s678, 11
      %s680 = scalar_select %p679, %s678, 11
      %s681 = smul.addr %s680, 8
      %s682 = scalar_lea.vmem %s5, %s681
      // Predicated region
      $region41: #{model_forward.6} parent=39 // pred_check
        %p683 = pneg %p144
      $region42: #{model_forward.6} parent=39 // pred_check_branch
        %685 = sbr.rel (%p683) target = $region44
      $region43: #{model_forward.6} parent=39 // pred_region
        %s686 = smul.u32 6, %s16
      $region44: #{model_forward.6} parent=39 // pred_fallthru
        _
    $region40: #{model_forward.6} parent=5 // pred_fallthru
      _
    %p687 = scmp.le.s32.totalorder 2, %s11
    // Predicated region
    $region45: #{model_forward.6} parent=5 // pred_check
      %p688 = pneg %p687
    $region46: #{model_forward.6} parent=5 // pred_check_branch
      %690 = sbr.rel (%p688) target = $region48
    $region47: #{model_forward.6} parent=5 // pred_region
      %s691 = ssub.s32 %s11, 2
      // Predicated region
      $region49: #{model_forward.6} parent=47 // pred_check
        %p692 = pneg %p150
      $region50: #{model_forward.6} parent=47 // pred_check_branch
        %694 = sbr.rel (%p692) target = $region52
      $region51: #{model_forward.6} parent=47 // pred_region
        %s695 = smul.u32 6, %s17
        %p696 = scmp.lt.s32.totalorder %s695, 11
        %s697 = scalar_select %p696, %s695, 11
        %s698 = smul.addr %s697, 8
        %s699 = scalar_lea.vmem %s5, %s698
      $region52: #{model_forward.6} parent=47 // pred_fallthru
        _
    $region48: #{model_forward.6} parent=5 // pred_fallthru
      _
  $region6: #{model_forward.6} parent=0 // loop_footer
    %s15 = sadd.s32 1, %s11
  $region7: #{model_forward.6} parent=0 // loop_footer_branch
    %10 = sbr.rel target = $region3
  $region8: #{model_forward.6} parent=0 // loop_exit
    _

// kernel: model_forward.4
$region0: #{model_forward.4}
  #allocation0 [shape = 'u32[]', space=smem, size = 0x4, offset = 0x4, fixed_abs, tag = 'smem constant byte address 0x4 - core index']
  #allocation1 [shape = 'u32[144,128]{1,0:T(1,128)}', space=vmem, size = 0x12000, scoped, tag = 'internal scratch']
  %s0 = inlined_call_operand.vmem [shape: f32[2,12,768], index: 0, kind: input, shape index: {}]
  %s1 = inlined_call_operand.vmem [shape: bf16[768,32], index: 1, kind: input, shape index: {}]
  %s2 = inlined_call_operand.vmem [shape: f32[1,32], index: 2, kind: input, shape index: {}]
  %s3 = inlined_call_operand.vmem [shape: f32[12,32], index: 3, kind: input, shape index: {}]
  %s4 = inlined_call_operand.vmem [shape: f32[2,1,32], index: 4, kind: input, shape index: {}]
  %s5 = inlined_call_operand.vmem [shape: f32[2,1,32], index: 5, kind: input, shape index: {}]
  %s6 = inlined_call_operand.vmem [shape: bf16[2,32,96], index: 6, kind: input, shape index: {}]
  %s7 = inlined_call_operand.vmem [shape: f32[2,1,96], index: 7, kind: input, shape index: {}]
  %s8 = inlined_call_operand.vmem [shape: bf16[2,32,32], index: 8, kind: input, shape index: {}]
  %s9 = inlined_call_operand.vmem [shape: f32[2,1,32], index: 9, kind: input, shape index: {}]
  %s10 = inlined_call_operand.vmem [shape: f32[2,1,32], index: 10, kind: input, shape index: {}]
  %s11 = inlined_call_operand.vmem [shape: f32[2,1,32], index: 11, kind: input, shape index: {}]
  %s12 = inlined_call_operand.vmem [shape: bf16[2,32,128], index: 12, kind: input, shape index: {}]
  %s13 = inlined_call_operand.vmem [shape: f32[2,1,128], index: 13, kind: input, shape index: {}]
  %s14 = inlined_call_operand.vmem [shape: bf16[2,128,32], index: 14, kind: input, shape index: {}]
  %s15 = inlined_call_operand.vmem [shape: f32[2,1,32], index: 15, kind: input, shape index: {}]
  %s16 = inlined_call_operand.vmem [shape: f32[1,32], index: 16, kind: input, shape index: {}]
  %s17 = inlined_call_operand.vmem [shape: f32[1,32], index: 17, kind: input, shape index: {}]
  %s18 = inlined_call_operand.vmem [shape: f32[2,12,32], index: 18, kind: output, shape index: {}]
  %s19 = sld [smem:[#allocation0]]
  $region105: #{model_forward.4} parent=0
    _
  %s21 = ssub.s32 1, %s19
  %s22 = scalar_select 0, %s21, %s19
  loop: start=0, step=1, limit=4
  $region2: #{model_forward.4} parent=0 // loop_pre_header
    _
  $region3: #{model_forward.4} parent=0 // loop_header
    %s24 = sphi 0, %s28
    %p25 = scmp.ge.s32.totalorder %s24, 4
    %s34 = sphi 0, %s36
    %s37 = sphi 0, %s34
    %s38 = sphi 0, %s37
    %s54 = sphi 0, %s38
    %s58 = sphi 0, %s58
    %s60 = sphi 0, %s58
    %s61 = sphi 0, %s60
    %s75 = sphi 0, %s61
    %s79 = sphi 0, %s79
    %s81 = sphi 0, %s79
    %s82 = sphi 0, %s81
    %s96 = sphi 0, %s82
    %s100 = sphi 0, %s100
    %s102 = sphi 0, %s100
    %s103 = sphi 0, %s102
    %s117 = sphi 0, %s103
    %s121 = sphi 0, %s121
    %s123 = sphi 0, %s121
    %s124 = sphi 0, %s123
    %s138 = sphi 0, %s124
    %s142 = sphi 0, %s142
    %s144 = sphi 0, %s142
    %s145 = sphi 0, %s144
    %s159 = sphi 0, %s145
    %s163 = sphi 0, %s163
    %s165 = sphi 0, %s163
    %s166 = sphi 0, %s165
    %s180 = sphi 0, %s166
    %s184 = sphi 0, %s184
    %s186 = sphi 0, %s184
    %s187 = sphi 0, %s186
    %s201 = sphi 0, %s187
    %s205 = sphi 0, %s205
    %s207 = sphi 0, %s205
    %s208 = sphi 0, %s207
    %s222 = sphi 0, %s208
    %s226 = sphi 0, %s226
    %s228 = sphi 0, %s226
    %s229 = sphi 0, %s228
    %s243 = sphi 0, %s229
    %s247 = sphi 0, %s247
    %s249 = sphi 0, %s247
    %s250 = sphi 0, %s249
    %s264 = sphi 0, %s250
    %s268 = sphi 0, %s268
    %s270 = sphi 0, %s268
    %s271 = sphi 0, %s270
    %s285 = sphi 0, %s271
    %s289 = sphi 0, %s289
    %s291 = sphi 0, %s289
    %s292 = sphi 0, %s291
    %s306 = sphi 0, %s292
    %s310 = sphi 0, %s310
    %s312 = sphi 0, %s310
    %s313 = sphi 0, %s312
    %s327 = sphi 0, %s313
    %s331 = sphi 0, %s331
    %s333 = sphi 0, %s331
    %s334 = sphi 0, %s333
    %s348 = sphi 0, %s334
    %s352 = sphi 0, %s352
    %s354 = sphi 0, %s352
    %s355 = sphi 0, %s354
    %s369 = sphi 0, %s355
    %s373 = sphi 0, %s373
    %s375 = sphi 0, %s373
    %s376 = sphi 0, %s375
    %s390 = sphi 0, %s376
    %s394 = sphi 0, %s394
    %s396 = sphi 0, %s394
    %s397 = sphi 0, %s396
    %s411 = sphi 0, %s397
    %s417 = sphi 0, %s419
    %s420 = sphi 0, %s417
    %s421 = sphi 0, %s420
    %s437 = sphi 0, %s421
  $region4: #{model_forward.4} parent=0 // loop_header_branch
    %27 = sbr.rel (%p25) target = $region8
  $region5: #{model_forward.4} parent=0 // loop_body
    %s29 = ssub.s32 %s24, 1
    %s30 = ssub.s32 %s24, 2
    %s31 = sadd.s32 %s24, 1
    %s32 = ssub.s32 %s24, %s31
    %p33 = scmp.eq.s32.totalorder %s32, 0
    %s35 = sadd.s32 %s34, 1
    %s36 = scalar_select %p33, %s34, %s35
    %p39 = pneg %p33
    %p40 = scmp.eq.s32.totalorder %s24, 1
    %p41 = por %p39, %p40
    %p42 = scmp.ne.s32.totalorder %s34, %s37
    %p43 = scmp.eq.s32.totalorder %s24, 0
    %p44 = por %p42, %p43
    %p45 = scmp.ne.s32.totalorder %s34, %s37
    %p46 = scmp.eq.s32.totalorder %s29, 1
    %p47 = por %p45, %p46
    %p48 = scmp.ne.s32.totalorder %s37, %s38
    %p49 = scmp.eq.s32.totalorder %s29, 0
    %p50 = por %p48, %p49
    %p51 = scmp.ne.s32.totalorder %s37, %s38
    %p52 = scmp.eq.s32.totalorder %s30, 1
    %p53 = por %p51, %p52
    %p55 = scmp.ne.s32.totalorder %s38, %s54
    %p56 = scmp.eq.s32.totalorder %s30, 0
    %p57 = por %p55, %p56
    %s59 = sadd.s32 %s58, 1
    %p62 = scmp.eq.s32.totalorder %s24, 1
    %p63 = scmp.ne.s32.totalorder %s58, %s60
    %p64 = scmp.eq.s32.totalorder %s24, 0
    %p65 = por %p63, %p64
    %p66 = scmp.ne.s32.totalorder %s58, %s60
    %p67 = scmp.eq.s32.totalorder %s29, 1
    %p68 = por %p66, %p67
    %p69 = scmp.ne.s32.totalorder %s60, %s61
    %p70 = scmp.eq.s32.totalorder %s29, 0
    %p71 = por %p69, %p70
    %p72 = scmp.ne.s32.totalorder %s60, %s61
    %p73 = scmp.eq.s32.totalorder %s30, 1
    %p74 = por %p72, %p73
    %p76 = scmp.ne.s32.totalorder %s61, %s75
    %p77 = scmp.eq.s32.totalorder %s30, 0
    %p78 = por %p76, %p77
    %s80 = sadd.s32 %s79, 1
    %p83 = scmp.eq.s32.totalorder %s24, 1
    %p84 = scmp.ne.s32.totalorder %s79, %s81
    %p85 = scmp.eq.s32.totalorder %s24, 0
    %p86 = por %p84, %p85
    %p87 = scmp.ne.s32.totalorder %s79, %s81
    %p88 = scmp.eq.s32.totalorder %s29, 1
    %p89 = por %p87, %p88
    %p90 = scmp.ne.s32.totalorder %s81, %s82
    %p91 = scmp.eq.s32.totalorder %s29, 0
    %p92 = por %p90, %p91
    %p93 = scmp.ne.s32.totalorder %s81, %s82
    %p94 = scmp.eq.s32.totalorder %s30, 1
    %p95 = por %p93, %p94
    %p97 = scmp.ne.s32.totalorder %s82, %s96
    %p98 = scmp.eq.s32.totalorder %s30, 0
    %p99 = por %p97, %p98
    %s101 = sadd.s32 %s100, 1
    %p104 = scmp.eq.s32.totalorder %s24, 1
    %p105 = scmp.ne.s32.totalorder %s100, %s102
    %p106 = scmp.eq.s32.totalorder %s24, 0
    %p107 = por %p105, %p106
    %p108 = scmp.ne.s32.totalorder %s100, %s102
    %p109 = scmp.eq.s32.totalorder %s29, 1
    %p110 = por %p108, %p109
    %p111 = scmp.ne.s32.totalorder %s102, %s103
    %p112 = scmp.eq.s32.totalorder %s29, 0
    %p113 = por %p111, %p112
    %p114 = scmp.ne.s32.totalorder %s102, %s103
    %p115 = scmp.eq.s32.totalorder %s30, 1
    %p116 = por %p114, %p115
    %p118 = scmp.ne.s32.totalorder %s103, %s117
    %p119 = scmp.eq.s32.totalorder %s30, 0
    %p120 = por %p118, %p119
    %s122 = sadd.s32 %s121, 1
    %p125 = scmp.eq.s32.totalorder %s24, 1
    %p126 = scmp.ne.s32.totalorder %s121, %s123
    %p127 = scmp.eq.s32.totalorder %s24, 0
    %p128 = por %p126, %p127
    %p129 = scmp.ne.s32.totalorder %s121, %s123
    %p130 = scmp.eq.s32.totalorder %s29, 1
    %p131 = por %p129, %p130
    %p132 = scmp.ne.s32.totalorder %s123, %s124
    %p133 = scmp.eq.s32.totalorder %s29, 0
    %p134 = por %p132, %p133
    %p135 = scmp.ne.s32.totalorder %s123, %s124
    %p136 = scmp.eq.s32.totalorder %s30, 1
    %p137 = por %p135, %p136
    %p139 = scmp.ne.s32.totalorder %s124, %s138
    %p140 = scmp.eq.s32.totalorder %s30, 0
    %p141 = por %p139, %p140
    %s143 = sadd.s32 %s142, 1
    %p146 = scmp.eq.s32.totalorder %s24, 1
    %p147 = scmp.ne.s32.totalorder %s142, %s144
    %p148 = scmp.eq.s32.totalorder %s24, 0
    %p149 = por %p147, %p148
    %p150 = scmp.ne.s32.totalorder %s142, %s144
    %p151 = scmp.eq.s32.totalorder %s29, 1
    %p152 = por %p150, %p151
    %p153 = scmp.ne.s32.totalorder %s144, %s145
    %p154 = scmp.eq.s32.totalorder %s29, 0
    %p155 = por %p153, %p154
    %p156 = scmp.ne.s32.totalorder %s144, %s145
    %p157 = scmp.eq.s32.totalorder %s30, 1
    %p158 = por %p156, %p157
    %p160 = scmp.ne.s32.totalorder %s145, %s159
    %p161 = scmp.eq.s32.totalorder %s30, 0
    %p162 = por %p160, %p161
    %s164 = sadd.s32 %s163, 1
    %p167 = scmp.eq.s32.totalorder %s24, 1
    %p168 = scmp.ne.s32.totalorder %s163, %s165
    %p169 = scmp.eq.s32.totalorder %s24, 0
    %p170 = por %p168, %p169
    %p171 = scmp.ne.s32.totalorder %s163, %s165
    %p172 = scmp.eq.s32.totalorder %s29, 1
    %p173 = por %p171, %p172
    %p174 = scmp.ne.s32.totalorder %s165, %s166
    %p175 = scmp.eq.s32.totalorder %s29, 0
    %p176 = por %p174, %p175
    %p177 = scmp.ne.s32.totalorder %s165, %s166
    %p178 = scmp.eq.s32.totalorder %s30, 1
    %p179 = por %p177, %p178
    %p181 = scmp.ne.s32.totalorder %s166, %s180
    %p182 = scmp.eq.s32.totalorder %s30, 0
    %p183 = por %p181, %p182
    %s185 = sadd.s32 %s184, 1
    %p188 = scmp.eq.s32.totalorder %s24, 1
    %p189 = scmp.ne.s32.totalorder %s184, %s186
    %p190 = scmp.eq.s32.totalorder %s24, 0
    %p191 = por %p189, %p190
    %p192 = scmp.ne.s32.totalorder %s184, %s186
    %p193 = scmp.eq.s32.totalorder %s29, 1
    %p194 = por %p192, %p193
    %p195 = scmp.ne.s32.totalorder %s186, %s187
    %p196 = scmp.eq.s32.totalorder %s29, 0
    %p197 = por %p195, %p196
    %p198 = scmp.ne.s32.totalorder %s186, %s187
    %p199 = scmp.eq.s32.totalorder %s30, 1
    %p200 = por %p198, %p199
    %p202 = scmp.ne.s32.totalorder %s187, %s201
    %p203 = scmp.eq.s32.totalorder %s30, 0
    %p204 = por %p202, %p203
    %s206 = sadd.s32 %s205, 1
    %p209 = scmp.eq.s32.totalorder %s24, 1
    %p210 = scmp.ne.s32.totalorder %s205, %s207
    %p211 = scmp.eq.s32.totalorder %s24, 0
    %p212 = por %p210, %p211
    %p213 = scmp.ne.s32.totalorder %s205, %s207
    %p214 = scmp.eq.s32.totalorder %s29, 1
    %p215 = por %p213, %p214
    %p216 = scmp.ne.s32.totalorder %s207, %s208
    %p217 = scmp.eq.s32.totalorder %s29, 0
    %p218 = por %p216, %p217
    %p219 = scmp.ne.s32.totalorder %s207, %s208
    %p220 = scmp.eq.s32.totalorder %s30, 1
    %p221 = por %p219, %p220
    %p223 = scmp.ne.s32.totalorder %s208, %s222
    %p224 = scmp.eq.s32.totalorder %s30, 0
    %p225 = por %p223, %p224
    %s227 = sadd.s32 %s226, 1
    %p230 = scmp.eq.s32.totalorder %s24, 1
    %p231 = scmp.ne.s32.totalorder %s226, %s228
    %p232 = scmp.eq.s32.totalorder %s24, 0
    %p233 = por %p231, %p232
    %p234 = scmp.ne.s32.totalorder %s226, %s228
    %p235 = scmp.eq.s32.totalorder %s29, 1
    %p236 = por %p234, %p235
    %p237 = scmp.ne.s32.totalorder %s228, %s229
    %p238 = scmp.eq.s32.totalorder %s29, 0
    %p239 = por %p237, %p238
    %p240 = scmp.ne.s32.totalorder %s228, %s229
    %p241 = scmp.eq.s32.totalorder %s30, 1
    %p242 = por %p240, %p241
    %p244 = scmp.ne.s32.totalorder %s229, %s243
    %p245 = scmp.eq.s32.totalorder %s30, 0
    %p246 = por %p244, %p245
    %s248 = sadd.s32 %s247, 1
    %p251 = scmp.eq.s32.totalorder %s24, 1
    %p252 = scmp.ne.s32.totalorder %s247, %s249
    %p253 = scmp.eq.s32.totalorder %s24, 0
    %p254 = por %p252, %p253
    %p255 = scmp.ne.s32.totalorder %s247, %s249
    %p256 = scmp.eq.s32.totalorder %s29, 1
    %p257 = por %p255, %p256
    %p258 = scmp.ne.s32.totalorder %s249, %s250
    %p259 = scmp.eq.s32.totalorder %s29, 0
    %p260 = por %p258, %p259
    %p261 = scmp.ne.s32.totalorder %s249, %s250
    %p262 = scmp.eq.s32.totalorder %s30, 1
    %p263 = por %p261, %p262
    %p265 = scmp.ne.s32.totalorder %s250, %s264
    %p266 = scmp.eq.s32.totalorder %s30, 0
    %p267 = por %p265, %p266
    %s269 = sadd.s32 %s268, 1
    %p272 = scmp.eq.s32.totalorder %s24, 1
    %p273 = scmp.ne.s32.totalorder %s268, %s270
    %p274 = scmp.eq.s32.totalorder %s24, 0
    %p275 = por %p273, %p274
    %p276 = scmp.ne.s32.totalorder %s268, %s270
    %p277 = scmp.eq.s32.totalorder %s29, 1
    %p278 = por %p276, %p277
    %p279 = scmp.ne.s32.totalorder %s270, %s271
    %p280 = scmp.eq.s32.totalorder %s29, 0
    %p281 = por %p279, %p280
    %p282 = scmp.ne.s32.totalorder %s270, %s271
    %p283 = scmp.eq.s32.totalorder %s30, 1
    %p284 = por %p282, %p283
    %p286 = scmp.ne.s32.totalorder %s271, %s285
    %p287 = scmp.eq.s32.totalorder %s30, 0
    %p288 = por %p286, %p287
    %s290 = sadd.s32 %s289, 1
    %p293 = scmp.eq.s32.totalorder %s24, 1
    %p294 = scmp.ne.s32.totalorder %s289, %s291
    %p295 = scmp.eq.s32.totalorder %s24, 0
    %p296 = por %p294, %p295
    %p297 = scmp.ne.s32.totalorder %s289, %s291
    %p298 = scmp.eq.s32.totalorder %s29, 1
    %p299 = por %p297, %p298
    %p300 = scmp.ne.s32.totalorder %s291, %s292
    %p301 = scmp.eq.s32.totalorder %s29, 0
    %p302 = por %p300, %p301
    %p303 = scmp.ne.s32.totalorder %s291, %s292
    %p304 = scmp.eq.s32.totalorder %s30, 1
    %p305 = por %p303, %p304
    %p307 = scmp.ne.s32.totalorder %s292, %s306
    %p308 = scmp.eq.s32.totalorder %s30, 0
    %p309 = por %p307, %p308
    %s311 = sadd.s32 %s310, 1
    %p314 = scmp.eq.s32.totalorder %s24, 1
    %p315 = scmp.ne.s32.totalorder %s310, %s312
    %p316 = scmp.eq.s32.totalorder %s24, 0
    %p317 = por %p315, %p316
    %p318 = scmp.ne.s32.totalorder %s310, %s312
    %p319 = scmp.eq.s32.totalorder %s29, 1
    %p320 = por %p318, %p319
    %p321 = scmp.ne.s32.totalorder %s312, %s313
    %p322 = scmp.eq.s32.totalorder %s29, 0
    %p323 = por %p321, %p322
    %p324 = scmp.ne.s32.totalorder %s312, %s313
    %p325 = scmp.eq.s32.totalorder %s30, 1
    %p326 = por %p324, %p325
    %p328 = scmp.ne.s32.totalorder %s313, %s327
    %p329 = scmp.eq.s32.totalorder %s30, 0
    %p330 = por %p328, %p329
    %s332 = sadd.s32 %s331, 1
    %p335 = scmp.eq.s32.totalorder %s24, 1
    %p336 = scmp.ne.s32.totalorder %s331, %s333
    %p337 = scmp.eq.s32.totalorder %s24, 0
    %p338 = por %p336, %p337
    %p339 = scmp.ne.s32.totalorder %s331, %s333
    %p340 = scmp.eq.s32.totalorder %s29, 1
    %p341 = por %p339, %p340
    %p342 = scmp.ne.s32.totalorder %s333, %s334
    %p343 = scmp.eq.s32.totalorder %s29, 0
    %p344 = por %p342, %p343
    %p345 = scmp.ne.s32.totalorder %s333, %s334
    %p346 = scmp.eq.s32.totalorder %s30, 1
    %p347 = por %p345, %p346
    %p349 = scmp.ne.s32.totalorder %s334, %s348
    %p350 = scmp.eq.s32.totalorder %s30, 0
    %p351 = por %p349, %p350
    %s353 = sadd.s32 %s352, 1
    %p356 = scmp.eq.s32.totalorder %s24, 1
    %p357 = scmp.ne.s32.totalorder %s352, %s354
    %p358 = scmp.eq.s32.totalorder %s24, 0
    %p359 = por %p357, %p358
    %p360 = scmp.ne.s32.totalorder %s352, %s354
    %p361 = scmp.eq.s32.totalorder %s29, 1
    %p362 = por %p360, %p361
    %p363 = scmp.ne.s32.totalorder %s354, %s355
    %p364 = scmp.eq.s32.totalorder %s29, 0
    %p365 = por %p363, %p364
    %p366 = scmp.ne.s32.totalorder %s354, %s355
    %p367 = scmp.eq.s32.totalorder %s30, 1
    %p368 = por %p366, %p367
    %p370 = scmp.ne.s32.totalorder %s355, %s369
    %p371 = scmp.eq.s32.totalorder %s30, 0
    %p372 = por %p370, %p371
    %s374 = sadd.s32 %s373, 1
    %p377 = scmp.eq.s32.totalorder %s24, 1
    %p378 = scmp.ne.s32.totalorder %s373, %s375
    %p379 = scmp.eq.s32.totalorder %s24, 0
    %p380 = por %p378, %p379
    %p381 = scmp.ne.s32.totalorder %s373, %s375
    %p382 = scmp.eq.s32.totalorder %s29, 1
    %p383 = por %p381, %p382
    %p384 = scmp.ne.s32.totalorder %s375, %s376
    %p385 = scmp.eq.s32.totalorder %s29, 0
    %p386 = por %p384, %p385
    %p387 = scmp.ne.s32.totalorder %s375, %s376
    %p388 = scmp.eq.s32.totalorder %s30, 1
    %p389 = por %p387, %p388
    %p391 = scmp.ne.s32.totalorder %s376, %s390
    %p392 = scmp.eq.s32.totalorder %s30, 0
    %p393 = por %p391, %p392
    %s395 = sadd.s32 %s394, 1
    %p398 = scmp.eq.s32.totalorder %s24, 1
    %p399 = scmp.ne.s32.totalorder %s394, %s396
    %p400 = scmp.eq.s32.totalorder %s24, 0
    %p401 = por %p399, %p400
    %p402 = scmp.ne.s32.totalorder %s394, %s396
    %p403 = scmp.eq.s32.totalorder %s29, 1
    %p404 = por %p402, %p403
    %p405 = scmp.ne.s32.totalorder %s396, %s397
    %p406 = scmp.eq.s32.totalorder %s29, 0
    %p407 = por %p405, %p406
    %p408 = scmp.ne.s32.totalorder %s396, %s397
    %p409 = scmp.eq.s32.totalorder %s30, 1
    %p410 = por %p408, %p409
    %p412 = scmp.ne.s32.totalorder %s397, %s411
    %p413 = scmp.eq.s32.totalorder %s30, 0
    %p414 = por %p412, %p413
    %s415 = ssub.s32 %s24, %s31
    %p416 = scmp.eq.s32.totalorder %s415, 0
    %s418 = sadd.s32 %s417, 1
    %s419 = scalar_select %p416, %s417, %s418
    %p422 = pneg %p416
    %p423 = scmp.eq.s32.totalorder %s24, 1
    %p424 = por %p422, %p423
    %p425 = scmp.ne.s32.totalorder %s417, %s420
    %p426 = scmp.eq.s32.totalorder %s24, 0
    %p427 = por %p425, %p426
    %p428 = scmp.ne.s32.totalorder %s417, %s420
    %p429 = scmp.eq.s32.totalorder %s29, 1
    %p430 = por %p428, %p429
    %p431 = scmp.ne.s32.totalorder %s420, %s421
    %p432 = scmp.eq.s32.totalorder %s29, 0
    %p433 = por %p431, %p432
    %p434 = scmp.ne.s32.totalorder %s420, %s421
    %p435 = scmp.eq.s32.totalorder %s30, 1
    %p436 = por %p434, %p435
    %p438 = scmp.ne.s32.totalorder %s421, %s437
    %p439 = scmp.eq.s32.totalorder %s30, 0
    %p440 = por %p438, %p439
    %p441 = scmp.le.s32.totalorder 1, %s24
    %p442 = scmp.lt.s32.totalorder %s24, 3
    %p443 = pnand %p441, %p442
    %p444 = pneg %p443
    // Predicated region
    $region9: #{model_forward.4} parent=5 // pred_check
      _
    $region10: #{model_forward.4} parent=5 // pred_check_branch
      %446 = sbr.rel (%p443) target = $region12
    $region11: #{model_forward.4} parent=5 // pred_region
      %s447 = ssub.s32 %s24, 1
      // Predicated region
      $region13: #{model_forward.4} parent=11 // pred_check
        %p448 = pneg %p71
      $region14: #{model_forward.4} parent=11 // pred_check_branch
        %450 = sbr.rel (%p448) target = $region16
      $region15: #{model_forward.4} parent=11 // pred_region
        _
      $region16: #{model_forward.4} parent=11 // pred_fallthru
        _
      // Predicated region
      $region17: #{model_forward.4} parent=11 // pred_check
        %p451 = pneg %p92
      $region18: #{model_forward.4} parent=11 // pred_check_branch
        %453 = sbr.rel (%p451) target = $region20
      $region19: #{model_forward.4} parent=11 // pred_region
        _
      $region20: #{model_forward.4} parent=11 // pred_fallthru
        _
      // Predicated region
      $region21: #{model_forward.4} parent=11 // pred_check
        %p454 = pneg %p113
      $region22: #{model_forward.4} parent=11 // pred_check_branch
        %456 = sbr.rel (%p454) target = $region24
      $region23: #{model_forward.4} parent=11 // pred_region
        _
      $region24: #{model_forward.4} parent=11 // pred_fallthru
        _
      // Predicated region
      $region25: #{model_forward.4} parent=11 // pred_check
        %p457 = pneg %p134
      $region26: #{model_forward.4} parent=11 // pred_check_branch
        %459 = sbr.rel (%p457) target = $region28
      $region27: #{model_forward.4} parent=11 // pred_region
        _
      $region28: #{model_forward.4} parent=11 // pred_fallthru
        _
      // Predicated region
      $region29: #{model_forward.4} parent=11 // pred_check
        %p460 = pneg %p155
      $region30: #{model_forward.4} parent=11 // pred_check_branch
        %462 = sbr.rel (%p460) target = $region32
      $region31: #{model_forward.4} parent=11 // pred_region
        _
      $region32: #{model_forward.4} parent=11 // pred_fallthru
        _
      // Predicated region
      $region33: #{model_forward.4} parent=11 // pred_check
        %p463 = pneg %p176
      $region34: #{model_forward.4} parent=11 // pred_check_branch
        %465 = sbr.rel (%p463) target = $region36
      $region35: #{model_forward.4} parent=11 // pred_region
        _
      $region36: #{model_forward.4} parent=11 // pred_fallthru
        _
      // Predicated region
      $region37: #{model_forward.4} parent=11 // pred_check
        %p466 = pneg %p197
      $region38: #{model_forward.4} parent=11 // pred_check_branch
        %468 = sbr.rel (%p466) target = $region40
      $region39: #{model_forward.4} parent=11 // pred_region
        _
      $region40: #{model_forward.4} parent=11 // pred_fallthru
        _
      // Predicated region
      $region41: #{model_forward.4} parent=11 // pred_check
        %p469 = pneg %p218
      $region42: #{model_forward.4} parent=11 // pred_check_branch
        %471 = sbr.rel (%p469) target = $region44
      $region43: #{model_forward.4} parent=11 // pred_region
        _
      $region44: #{model_forward.4} parent=11 // pred_fallthru
        _
      // Predicated region
      $region45: #{model_forward.4} parent=11 // pred_check
        %p472 = pneg %p239
      $region46: #{model_forward.4} parent=11 // pred_check_branch
        %474 = sbr.rel (%p472) target = $region48
      $region47: #{model_forward.4} parent=11 // pred_region
        _
      $region48: #{model_forward.4} parent=11 // pred_fallthru
        _
      // Predicated region
      $region49: #{model_forward.4} parent=11 // pred_check
        %p475 = pneg %p260
      $region50: #{model_forward.4} parent=11 // pred_check_branch
        %477 = sbr.rel (%p475) target = $region52
      $region51: #{model_forward.4} parent=11 // pred_region
        _
      $region52: #{model_forward.4} parent=11 // pred_fallthru
        _
      // Predicated region
      $region53: #{model_forward.4} parent=11 // pred_check
        %p478 = pneg %p281
      $region54: #{model_forward.4} parent=11 // pred_check_branch
        %480 = sbr.rel (%p478) target = $region56
      $region55: #{model_forward.4} parent=11 // pred_region
        _
      $region56: #{model_forward.4} parent=11 // pred_fallthru
        _
      // Predicated region
      $region57: #{model_forward.4} parent=11 // pred_check
        %p481 = pneg %p302
      $region58: #{model_forward.4} parent=11 // pred_check_branch
        %483 = sbr.rel (%p481) target = $region60
      $region59: #{model_forward.4} parent=11 // pred_region
        _
      $region60: #{model_forward.4} parent=11 // pred_fallthru
        _
      // Predicated region
      $region61: #{model_forward.4} parent=11 // pred_check
        %p484 = pneg %p323
      $region62: #{model_forward.4} parent=11 // pred_check_branch
        %486 = sbr.rel (%p484) target = $region64
      $region63: #{model_forward.4} parent=11 // pred_region
        _
      $region64: #{model_forward.4} parent=11 // pred_fallthru
        _
      // Predicated region
      $region65: #{model_forward.4} parent=11 // pred_check
        %p487 = pneg %p344
      $region66: #{model_forward.4} parent=11 // pred_check_branch
        %489 = sbr.rel (%p487) target = $region68
      $region67: #{model_forward.4} parent=11 // pred_region
        _
      $region68: #{model_forward.4} parent=11 // pred_fallthru
        _
      // Predicated region
      $region69: #{model_forward.4} parent=11 // pred_check
        %p490 = pneg %p365
      $region70: #{model_forward.4} parent=11 // pred_check_branch
        %492 = sbr.rel (%p490) target = $region72
      $region71: #{model_forward.4} parent=11 // pred_region
        _
      $region72: #{model_forward.4} parent=11 // pred_fallthru
        _
      // Predicated region
      $region73: #{model_forward.4} parent=11 // pred_check
        %p493 = pneg %p386
      $region74: #{model_forward.4} parent=11 // pred_check_branch
        %495 = sbr.rel (%p493) target = $region76
      $region75: #{model_forward.4} parent=11 // pred_region
        _
      $region76: #{model_forward.4} parent=11 // pred_fallthru
        _
      // Predicated region
      $region77: #{model_forward.4} parent=11 // pred_check
        %p496 = pneg %p407
      $region78: #{model_forward.4} parent=11 // pred_check_branch
        %498 = sbr.rel (%p496) target = $region80
      $region79: #{model_forward.4} parent=11 // pred_region
        _
      $region80: #{model_forward.4} parent=11 // pred_fallthru
        _
    $region12: #{model_forward.4} parent=5 // pred_fallthru
      _
    %p499 = scmp.lt.s32.totalorder %s24, 2
    // Predicated region
    $region81: #{model_forward.4} parent=5 // pred_check
      %p500 = pneg %p499
    $region82: #{model_forward.4} parent=5 // pred_check_branch
      %502 = sbr.rel (%p500) target = $region84
    $region83: #{model_forward.4} parent=5 // pred_region
      // Predicated region
      $region85: #{model_forward.4} parent=83 // pred_check
        %p503 = pneg %p44
      $region86: #{model_forward.4} parent=83 // pred_check_branch
        %505 = sbr.rel (%p503) target = $region88
      $region87: #{model_forward.4} parent=83 // pred_region
        %p506 = scmp.lt.s32.totalorder %s24, 1
        %s507 = scalar_select %p506, %s24, 1
        %s508 = smul.addr %s507, 12
        %s509 = smul.addr %s508, 8
        %s510 = scalar_lea.vmem %s0, %s509
      $region88: #{model_forward.4} parent=83 // pred_fallthru
        _
    $region84: #{model_forward.4} parent=5 // pred_fallthru
      _
    %p511 = scmp.le.s32.totalorder 1, %s24
    %p512 = scmp.lt.s32.totalorder %s24, 3
    %p513 = pnand %p511, %p512
    %p514 = pneg %p513
    // Predicated region
    $region89: #{model_forward.4} parent=5 // pred_check
      _
    $region90: #{model_forward.4} parent=5 // pred_check_branch
      %516 = sbr.rel (%p513) target = $region92
    $region91: #{model_forward.4} parent=5 // pred_region
      %s517 = ssub.s32 %s24, 1
      %p518 = scmp.lt.s32.totalorder %s29, 1
      %s519 = scalar_select %p518, %s29, 1
      %s520 = smul.addr %s519, 12
      %s521 = smul.addr %s520, 8
      %s522 = scalar_lea.vmem %s0, %s521
      %p523 = pneg %p50
      %p524 = pneg %p47
      %p525 = pneg %p71
      %p526 = pneg %p68
      %p527 = pneg %p92
      %p528 = pneg %p89
      %p529 = pneg %p113
      %p530 = pneg %p110
      %p531 = pneg %p134
      %p532 = pneg %p131
      %p533 = pneg %p155
      %p534 = pneg %p152
      %p535 = pneg %p176
      %p536 = pneg %p173
      %p537 = pneg %p197
      %p538 = pneg %p194
      %p539 = pneg %p218
      %p540 = pneg %p215
      %p541 = pneg %p239
      %p542 = pneg %p236
      %p543 = pneg %p260
      %p544 = pneg %p257
      %p545 = pneg %p281
      %p546 = pneg %p278
      %p547 = pneg %p302
      %p548 = pneg %p299
      %p549 = pneg %p323
      %p550 = pneg %p320
      %p551 = pneg %p344
      %p552 = pneg %p341
      %p553 = pneg %p365
      %p554 = pneg %p362
      %p555 = pneg %p386
      %p556 = pneg %p383
      %p557 = pneg %p407
      %p558 = pneg %p404
      %p559 = pneg %p433
      %p560 = pneg %p430
      %p561 = scmp.lt.s32.totalorder %s29, 1
      %s562 = scalar_select %p561, %s29, 1
      %s563 = smul.addr %s562, 2
      %s564 = smul.addr %s563, 8
      %s565 = scalar_lea.vmem %s18, %s564
      %p566 = scmp.lt.s32.totalorder %s29, 1
      %s567 = scalar_select %p566, %s29, 1
      %s568 = smul.addr %s567, 12
      %s569 = smul.addr %s568, 8
      %s570 = scalar_lea.vmem %s0, %s569
      %p571 = scmp.lt.s32.totalorder %s29, 1
      %s572 = scalar_select %p571, %s29, 1
      %s573 = smul.addr %s572, 2
      %s574 = smul.addr %s573, 8
      %s575 = scalar_lea.vmem %s18, %s574
      %v577 = vld [vmem:[%s570] sm:$0xff]
      %v578 = vld [vmem:[%s570 + $0x8] sm:$0xff]
      %v579 = vld [vmem:[%s570 + $0x10] sm:$0xff]
      %v580 = vld [vmem:[%s570 + $0x18] sm:$0xff]
      %v581 = vld [vmem:[%s570 + $0x20] sm:$0xff]
      %v582 = vld [vmem:[%s570 + $0x28] sm:$0xff]
      %v583 = vld [vmem:[%s570 + $0x30] sm:$0xf]
      %v584 = vld [vmem:[%s570 + $0x38] sm:$0xf]
      %v585 = vld [vmem:[%s570 + $0x40] sm:$0xf]
      %v586 = vld [vmem:[%s570 + $0x48] sm:$0xf]
      %v587 = vld [vmem:[%s570 + $0x50] sm:$0xf]
      %v588 = vld [vmem:[%s570 + $0x58] sm:$0xf]
      %v589 = vpack.c.bf16 %v583, %v577
      %v590 = vpack.c.bf16 %v584, %v578
      %v591 = vpack.c.bf16 %v585, %v579
      %v592 = vpack.c.bf16 %v586, %v580
      %v593 = vpack.c.bf16 %v587, %v581
      %v594 = vpack.c.bf16 %v588, %v582
      %v595 = vld [vmem:[%s1] sm:$0xf]
      %v596 = vld [vmem:[%s1 + $0x4] sm:$0xf]
      %v597 = vld [vmem:[%s1 + $0x8] sm:$0xf]
      %v598 = vld [vmem:[%s1 + $0xc] sm:$0xf]
      %v599 = vld [vmem:[%s1 + $0x10] sm:$0xf]
      %v600 = vld [vmem:[%s1 + $0x14] sm:$0xf]
      %v601 = vld [vmem:[%s1 + $0x18] sm:$0xf]
      %v602 = vld [vmem:[%s1 + $0x1c] sm:$0xf]
      %v603 = vld [vmem:[%s1 + $0x20] sm:$0xf]
      %v604 = vld [vmem:[%s1 + $0x24] sm:$0xf]
      %v605 = vld [vmem:[%s1 + $0x28] sm:$0xf]
      %v606 = vld [vmem:[%s1 + $0x2c] sm:$0xf]
      %v607 = vld [vmem:[%s1 + $0x30] sm:$0xf]
      %v608 = vld [vmem:[%s1 + $0x34] sm:$0xf]
      %v609 = vld [vmem:[%s1 + $0x38] sm:$0xf]
      %v610 = vld [vmem:[%s1 + $0x3c] sm:$0xf]
      %v611 = vld [vmem:[%s1 + $0x40] sm:$0xf]
      %v612 = vld [vmem:[%s1 + $0x44] sm:$0xf]
      %v613 = vld [vmem:[%s1 + $0x48] sm:$0xf]
      %v614 = vld [vmem:[%s1 + $0x4c] sm:$0xf]
      %v615 = vld [vmem:[%s1 + $0x50] sm:$0xf]
      %v616 = vld [vmem:[%s1 + $0x54] sm:$0xf]
      %v617 = vld [vmem:[%s1 + $0x58] sm:$0xf]
      %v618 = vld [vmem:[%s1 + $0x5c] sm:$0xf]
      %v619 = vld [vmem:[%s1 + $0x60] sm:$0xf]
      %v620 = vld [vmem:[%s1 + $0x64] sm:$0xf]
      %v621 = vld [vmem:[%s1 + $0x68] sm:$0xf]
      %v622 = vld [vmem:[%s1 + $0x6c] sm:$0xf]
      %v623 = vld [vmem:[%s1 + $0x70] sm:$0xf]
      %v624 = vld [vmem:[%s1 + $0x74] sm:$0xf]
      %v625 = vld [vmem:[%s1 + $0x78] sm:$0xf]
      %v626 = vld [vmem:[%s1 + $0x7c] sm:$0xf]
      %v627 = vld [vmem:[%s1 + $0x80] sm:$0xf]
      %v628 = vld [vmem:[%s1 + $0x84] sm:$0xf]
      %v629 = vld [vmem:[%s1 + $0x88] sm:$0xf]
      %v630 = vld [vmem:[%s1 + $0x8c] sm:$0xf]
      %v631 = vld [vmem:[%s1 + $0x90] sm:$0xf]
      %v632 = vld [vmem:[%s1 + $0x94] sm:$0xf]
      %v633 = vld [vmem:[%s1 + $0x98] sm:$0xf]
      %v634 = vld [vmem:[%s1 + $0x9c] sm:$0xf]
      %v635 = vld [vmem:[%s1 + $0xa0] sm:$0xf]
      %v636 = vld [vmem:[%s1 + $0xa4] sm:$0xf]
      %v637 = vld [vmem:[%s1 + $0xa8] sm:$0xf]
      %v638 = vld [vmem:[%s1 + $0xac] sm:$0xf]
      %v639 = vld [vmem:[%s1 + $0xb0] sm:$0xf]
      %v640 = vld [vmem:[%s1 + $0xb4] sm:$0xf]
      %v641 = vld [vmem:[%s1 + $0xb8] sm:$0xf]
      %v642 = vld [vmem:[%s1 + $0xbc] sm:$0xf]
      %v643 = vld [vmem:[%s1 + $0xc0] sm:$0xf]
      %v644 = vld [vmem:[%s1 + $0xc4] sm:$0xf]
      %v645 = vld [vmem:[%s1 + $0xc8] sm:$0xf]
      %v646 = vld [vmem:[%s1 + $0xcc] sm:$0xf]
      %v647 = vld [vmem:[%s1 + $0xd0] sm:$0xf]
      %v648 = vld [vmem:[%s1 + $0xd4] sm:$0xf]
      %v649 = vld [vmem:[%s1 + $0xd8] sm:$0xf]
      %v650 = vld [vmem:[%s1 + $0xdc] sm:$0xf]
      %v651 = vld [vmem:[%s1 + $0xe0] sm:$0xf]
      %v652 = vld [vmem:[%s1 + $0xe4] sm:$0xf]
      %v653 = vld [vmem:[%s1 + $0xe8] sm:$0xf]
      %v654 = vld [vmem:[%s1 + $0xec] sm:$0xf]
      %v655 = vld [vmem:[%s1 + $0xf0] sm:$0xf]
      %v656 = vld [vmem:[%s1 + $0xf4] sm:$0xf]
      %v657 = vld [vmem:[%s1 + $0xf8] sm:$0xf]
      %v658 = vld [vmem:[%s1 + $0xfc] sm:$0xf]
      %v659 = vld [vmem:[%s1 + $0x100] sm:$0xf]
      %v660 = vld [vmem:[%s1 + $0x104] sm:$0xf]
      %v661 = vld [vmem:[%s1 + $0x108] sm:$0xf]
      %v662 = vld [vmem:[%s1 + $0x10c] sm:$0xf]
      %v663 = vld [vmem:[%s1 + $0x110] sm:$0xf]
      %v664 = vld [vmem:[%s1 + $0x114] sm:$0xf]
      %v665 = vld [vmem:[%s1 + $0x118] sm:$0xf]
      %v666 = vld [vmem:[%s1 + $0x11c] sm:$0xf]
      %v667 = vld [vmem:[%s1 + $0x120] sm:$0xf]
      %v668 = vld [vmem:[%s1 + $0x124] sm:$0xf]
      %v669 = vld [vmem:[%s1 + $0x128] sm:$0xf]
      %v670 = vld [vmem:[%s1 + $0x12c] sm:$0xf]
      %v671 = vld [vmem:[%s1 + $0x130] sm:$0xf]
      %v672 = vld [vmem:[%s1 + $0x134] sm:$0xf]
      %v673 = vld [vmem:[%s1 + $0x138] sm:$0xf]
      %v674 = vld [vmem:[%s1 + $0x13c] sm:$0xf]
      %v675 = vld [vmem:[%s1 + $0x140] sm:$0xf]
      %v676 = vld [vmem:[%s1 + $0x144] sm:$0xf]
      %v677 = vld [vmem:[%s1 + $0x148] sm:$0xf]
      %v678 = vld [vmem:[%s1 + $0x14c] sm:$0xf]
      %v679 = vld [vmem:[%s1 + $0x150] sm:$0xf]
      %v680 = vld [vmem:[%s1 + $0x154] sm:$0xf]
      %v681 = vld [vmem:[%s1 + $0x158] sm:$0xf]
      %v682 = vld [vmem:[%s1 + $0x15c] sm:$0xf]
      %v683 = vld [vmem:[%s1 + $0x160] sm:$0xf]
      %v684 = vld [vmem:[%s1 + $0x164] sm:$0xf]
      %v685 = vld [vmem:[%s1 + $0x168] sm:$0xf]
      %v686 = vld [vmem:[%s1 + $0x16c] sm:$0xf]
      %v687 = vld [vmem:[%s1 + $0x170] sm:$0xf]
      %v688 = vld [vmem:[%s1 + $0x174] sm:$0xf]
      %v689 = vld [vmem:[%s1 + $0x178] sm:$0xf]
      %v690 = vld [vmem:[%s1 + $0x17c] sm:$0xf]
      %v691 = vld [vmem:[%s2] sm:$0x1]
      %v693 = vlaneseq
      %v694 = vshrl.u32 %v693, 7
      %v695 = vsub.s32 0, %v694
      %v696 = vrot.slane %v691, %v695
      %v794 = vunpack.c.l.b16 %v595
      %v795 = vunpack.c.l.b16 %v596
      %v796 = vunpack.c.l.b16 %v597
      %v797 = vunpack.c.l.b16 %v598
      %v798 = vunpack.c.l.b16 %v599
      %v799 = vunpack.c.l.b16 %v600
      %v800 = vunpack.c.l.b16 %v601
      %v801 = vunpack.c.l.b16 %v602
      %v802 = vunpack.c.l.b16 %v603
      %v803 = vunpack.c.l.b16 %v604
      %v804 = vunpack.c.l.b16 %v605
      %v805 = vunpack.c.l.b16 %v606
      %v806 = vunpack.c.l.b16 %v607
      %v807 = vunpack.c.l.b16 %v608
      %v808 = vunpack.c.l.b16 %v609
      %v809 = vunpack.c.l.b16 %v610
      %v810 = vunpack.c.l.b16 %v611
      %v811 = vunpack.c.l.b16 %v612
      %v812 = vunpack.c.l.b16 %v613
      %v813 = vunpack.c.l.b16 %v614
      %v814 = vunpack.c.l.b16 %v615
      %v815 = vunpack.c.l.b16 %v616
      %v816 = vunpack.c.l.b16 %v617
      %v817 = vunpack.c.l.b16 %v618
      %v818 = vunpack.c.l.b16 %v619
      %v819 = vunpack.c.l.b16 %v620
      %v820 = vunpack.c.l.b16 %v621
      %v821 = vunpack.c.l.b16 %v622
      %v822 = vunpack.c.l.b16 %v623
      %v823 = vunpack.c.l.b16 %v624
      %v824 = vunpack.c.l.b16 %v625
      %v825 = vunpack.c.l.b16 %v626
      %v826 = vunpack.c.l.b16 %v627
      %v827 = vunpack.c.l.b16 %v628
      %v828 = vunpack.c.l.b16 %v629
      %v829 = vunpack.c.l.b16 %v630
      %v830 = vunpack.c.l.b16 %v631
      %v831 = vunpack.c.l.b16 %v632
      %v832 = vunpack.c.l.b16 %v633
      %v833 = vunpack.c.l.b16 %v634
      %v834 = vunpack.c.l.b16 %v635
      %v835 = vunpack.c.l.b16 %v636
      %v836 = vunpack.c.l.b16 %v637
      %v837 = vunpack.c.l.b16 %v638
      %v838 = vunpack.c.l.b16 %v639
      %v839 = vunpack.c.l.b16 %v640
      %v840 = vunpack.c.l.b16 %v641
      %v841 = vunpack.c.l.b16 %v642
      %v842 = vunpack.c.l.b16 %v643
      %v843 = vunpack.c.l.b16 %v644
      %v844 = vunpack.c.l.b16 %v645
      %v845 = vunpack.c.l.b16 %v646
      %v846 = vunpack.c.l.b16 %v647
      %v847 = vunpack.c.l.b16 %v648
      %v848 = vunpack.c.l.b16 %v649
      %v849 = vunpack.c.l.b16 %v650
      %v850 = vunpack.c.l.b16 %v651
      %v851 = vunpack.c.l.b16 %v652
      %v852 = vunpack.c.l.b16 %v653
      %v853 = vunpack.c.l.b16 %v654
      %v854 = vunpack.c.l.b16 %v655
      %v855 = vunpack.c.l.b16 %v656
      %v856 = vunpack.c.l.b16 %v657
      %v857 = vunpack.c.l.b16 %v658
      %v858 = vunpack.c.l.b16 %v659
      %v859 = vunpack.c.l.b16 %v660
      %v860 = vunpack.c.l.b16 %v661
      %v861 = vunpack.c.l.b16 %v662
      %v862 = vunpack.c.l.b16 %v663
      %v863 = vunpack.c.l.b16 %v664
      %v864 = vunpack.c.l.b16 %v665
      %v865 = vunpack.c.l.b16 %v666
      %v866 = vunpack.c.l.b16 %v667
      %v867 = vunpack.c.l.b16 %v668
      %v868 = vunpack.c.l.b16 %v669
      %v869 = vunpack.c.l.b16 %v670
      %v870 = vunpack.c.l.b16 %v671
      %v871 = vunpack.c.l.b16 %v672
      %v872 = vunpack.c.l.b16 %v673
      %v873 = vunpack.c.l.b16 %v674
      %v874 = vunpack.c.l.b16 %v675
      %v875 = vunpack.c.l.b16 %v676
      %v876 = vunpack.c.l.b16 %v677
      %v877 = vunpack.c.l.b16 %v678
      %v878 = vunpack.c.l.b16 %v679
      %v879 = vunpack.c.l.b16 %v680
      %v880 = vunpack.c.l.b16 %v681
      %v881 = vunpack.c.l.b16 %v682
      %v882 = vunpack.c.l.b16 %v683
      %v883 = vunpack.c.l.b16 %v684
      %v884 = vunpack.c.l.b16 %v685
      %v885 = vunpack.c.l.b16 %v686
      %v886 = vunpack.c.l.b16 %v687
      %v887 = vunpack.c.l.b16 %v688
      %v888 = vunpack.c.l.b16 %v689
      %v889 = vunpack.c.l.b16 %v690
      %v890 = vpack.c.b16 %v795, %v794
      %v891 = vpack.c.b16 %v797, %v796
      %v892 = vpack.c.b16 %v799, %v798
      %v893 = vpack.c.b16 %v801, %v800
      %v894 = vpack.c.b16 %v803, %v802
      %v895 = vpack.c.b16 %v805, %v804
      %v896 = vpack.c.b16 %v807, %v806
      %v897 = vpack.c.b16 %v809, %v808
      %v898 = vpack.c.b16 %v811, %v810
      %v899 = vpack.c.b16 %v813, %v812
      %v900 = vpack.c.b16 %v815, %v814
      %v901 = vpack.c.b16 %v817, %v816
      %v902 = vpack.c.b16 %v819, %v818
      %v903 = vpack.c.b16 %v821, %v820
      %v904 = vpack.c.b16 %v823, %v822
      %v905 = vpack.c.b16 %v825, %v824
      %v906 = vpack.c.b16 %v827, %v826
      %v907 = vpack.c.b16 %v829, %v828
      %v908 = vpack.c.b16 %v831, %v830
      %v909 = vpack.c.b16 %v833, %v832
      %v910 = vpack.c.b16 %v835, %v834
      %v911 = vpack.c.b16 %v837, %v836
      %v912 = vpack.c.b16 %v839, %v838
      %v913 = vpack.c.b16 %v841, %v840
      %v914 = vpack.c.b16 %v843, %v842
      %v915 = vpack.c.b16 %v845, %v844
      %v916 = vpack.c.b16 %v847, %v846
      %v917 = vpack.c.b16 %v849, %v848
      %v918 = vpack.c.b16 %v851, %v850
      %v919 = vpack.c.b16 %v853, %v852
      %v920 = vpack.c.b16 %v855, %v854
      %v921 = vpack.c.b16 %v857, %v856
      %v922 = vpack.c.b16 %v859, %v858
      %v923 = vpack.c.b16 %v861, %v860
      %v924 = vpack.c.b16 %v863, %v862
      %v925 = vpack.c.b16 %v865, %v864
      %v926 = vpack.c.b16 %v867, %v866
      %v927 = vpack.c.b16 %v869, %v868
      %v928 = vpack.c.b16 %v871, %v870
      %v929 = vpack.c.b16 %v873, %v872
      %v930 = vpack.c.b16 %v875, %v874
      %v931 = vpack.c.b16 %v877, %v876
      %v932 = vpack.c.b16 %v879, %v878
      %v933 = vpack.c.b16 %v881, %v880
      %v934 = vpack.c.b16 %v883, %v882
      %v935 = vpack.c.b16 %v885, %v884
      %v936 = vpack.c.b16 %v887, %v886
      %v937 = vpack.c.b16 %v889, %v888
      %986 = vmatprep.subr.bf16.mxu0 0
      %987 = vmatpush1.bf16.msra.mxu0 %v890
      %988 = vmatprep.subr.bf16.mxu0 0
      %989 = vmatpush1.bf16.msra.mxu0 %v891
      %990 = vmatprep.subr.bf16.mxu0 0
      %991 = vmatpush1.bf16.msra.mxu0 %v892
      %992 = vmatprep.subr.bf16.mxu0 0
      %993 = vmatpush1.bf16.msra.mxu0 %v893
      %994 = vmatprep.subr.bf16.mxu0 0
      %995 = vmatpush1.bf16.msra.mxu0 %v894
      %996 = vmatprep.subr.bf16.mxu0 0
      %997 = vmatpush1.bf16.msra.mxu0 %v895
      %998 = vmatprep.subr.bf16.mxu0 0
      %999 = vmatpush1.bf16.msra.mxu0 %v896
      %1000 = vmatprep.subr.bf16.mxu0 0
      %1001 = vmatpush1.bf16.msra.mxu0 %v897
      %1002 = vmatprep.subr.bf16.mxu0 0
      %1003 = vmatpush1.bf16.msra.mxu0 %v898
      %1004 = vmatprep.subr.bf16.mxu0 0
      %1005 = vmatpush1.bf16.msra.mxu0 %v899
      %1006 = vmatprep.subr.bf16.mxu0 0
      %1007 = vmatpush1.bf16.msra.mxu0 %v900
      %1008 = vmatprep.subr.bf16.mxu0 0
      %1009 = vmatpush1.bf16.msra.mxu0 %v901
      %1010 = vmatprep.subr.bf16.mxu0 0
      %1011 = vmatpush1.bf16.msra.mxu0 %v902
      %1012 = vmatprep.subr.bf16.mxu0 0
      %1013 = vmatpush1.bf16.msra.mxu0 %v903
      %1014 = vmatprep.subr.bf16.mxu0 0
      %1015 = vmatpush1.bf16.msra.mxu0 %v904
      %1016 = vmatprep.subr.bf16.mxu0 0
      %1017 = vmatpush1.bf16.msra.mxu0 %v905
      %1018 = vmatprep.mubr.bf16.mxu0 %v590
      %1019 = vmatmul.mubr.bf16.gmra.mrb[0].mxu0 %v589
      %v1020 = vpop.f32.mrb[0].mxu0
      %v1021 = vadd.f32 %v696, %v1020
      %v1022 = vpop.f32.mrb[0].mxu0
      %v1023 = vpop.f32.mrb[0].mxu0
      %v1024 = vadd.f32 %v696, %v1023
      %v1025 = vpop.f32.mrb[0].mxu0
      %1026 = vdwg.mxu0
      %1027 = vmatprep.subr.bf16.mxu0 0
      %1028 = vmatpush1.bf16.msra.mxu0 %v906
      %1029 = vmatprep.subr.bf16.mxu0 0
      %1030 = vmatpush1.bf16.msra.mxu0 %v907
      %1031 = vmatprep.subr.bf16.mxu0 0
      %1032 = vmatpush1.bf16.msra.mxu0 %v908
      %1033 = vmatprep.subr.bf16.mxu0 0
      %1034 = vmatpush1.bf16.msra.mxu0 %v909
      %1035 = vmatprep.subr.bf16.mxu0 0
      %1036 = vmatpush1.bf16.msra.mxu0 %v910
      %1037 = vmatprep.subr.bf16.mxu0 0
      %1038 = vmatpush1.bf16.msra.mxu0 %v911
      %1039 = vmatprep.subr.bf16.mxu0 0
      %1040 = vmatpush1.bf16.msra.mxu0 %v912
      %1041 = vmatprep.subr.bf16.mxu0 0
      %1042 = vmatpush1.bf16.msra.mxu0 %v913
      %1043 = vmatprep.subr.bf16.mxu0 0
      %1044 = vmatpush1.bf16.msra.mxu0 %v914
      %1045 = vmatprep.subr.bf16.mxu0 0
      %1046 = vmatpush1.bf16.msra.mxu0 %v915
      %1047 = vmatprep.subr.bf16.mxu0 0
      %1048 = vmatpush1.bf16.msra.mxu0 %v916
      %1049 = vmatprep.subr.bf16.mxu0 0
      %1050 = vmatpush1.bf16.msra.mxu0 %v917
      %1051 = vmatprep.subr.bf16.mxu0 0
      %1052 = vmatpush1.bf16.msra.mxu0 %v918
      %1053 = vmatprep.subr.bf16.mxu0 0
      %1054 = vmatpush1.bf16.msra.mxu0 %v919
      %1055 = vmatprep.subr.bf16.mxu0 0
      %1056 = vmatpush1.bf16.msra.mxu0 %v920
      %1057 = vmatprep.subr.bf16.mxu0 0
      %1058 = vmatpush1.bf16.msra.mxu0 %v921
      %1059 = vmatprep.mubr.bf16.mxu0 %v592
      %1060 = vmatmul.mubr.bf16.gmra.mrb[0].mxu0 %v591
      %v1061 = vpop.f32.mrb[0].mxu0
      %v1062 = vadd.f32 %v1021, %v1061
      %v1063 = vpop.f32.mrb[0].mxu0
      %v1064 = vpop.f32.mrb[0].mxu0
      %v1065 = vadd.f32 %v1024, %v1064
      %v1066 = vpop.f32.mrb[0].mxu0
      %1067 = vdwg.mxu0
      %1068 = vmatprep.subr.bf16.mxu0 0
      %1069 = vmatpush1.bf16.msra.mxu0 %v922
      %1070 = vmatprep.subr.bf16.mxu0 0
      %1071 = vmatpush1.bf16.msra.mxu0 %v923
      %1072 = vmatprep.subr.bf16.mxu0 0
      %1073 = vmatpush1.bf16.msra.mxu0 %v924
      %1074 = vmatprep.subr.bf16.mxu0 0
      %1075 = vmatpush1.bf16.msra.mxu0 %v925
      %1076 = vmatprep.subr.bf16.mxu0 0
      %1077 = vmatpush1.bf16.msra.mxu0 %v926
      %1078 = vmatprep.subr.bf16.mxu0 0
      %1079 = vmatpush1.bf16.msra.mxu0 %v927
      %1080 = vmatprep.subr.bf16.mxu0 0
      %1081 = vmatpush1.bf16.msra.mxu0 %v928
      %1082 = vmatprep.subr.bf16.mxu0 0
      %1083 = vmatpush1.bf16.msra.mxu0 %v929
      %1084 = vmatprep.subr.bf16.mxu0 0
      %1085 = vmatpush1.bf16.msra.mxu0 %v930
      %1086 = vmatprep.subr.bf16.mxu0 0
      %1087 = vmatpush1.bf16.msra.mxu0 %v931
      %1088 = vmatprep.subr.bf16.mxu0 0
      %1089 = vmatpush1.bf16.msra.mxu0 %v932
      %1090 = vmatprep.subr.bf16.mxu0 0
      %1091 = vmatpush1.bf16.msra.mxu0 %v933
      %1092 = vmatprep.subr.bf16.mxu0 0
      %1093 = vmatpush1.bf16.msra.mxu0 %v934
      %1094 = vmatprep.subr.bf16.mxu0 0
      %1095 = vmatpush1.bf16.msra.mxu0 %v935
      %1096 = vmatprep.subr.bf16.mxu0 0
      %1097 = vmatpush1.bf16.msra.mxu0 %v936
      %1098 = vmatprep.subr.bf16.mxu0 0
      %1099 = vmatpush1.bf16.msra.mxu0 %v937
      %1100 = vmatprep.mubr.bf16.mxu0 %v594
      %1101 = vmatmul.mubr.bf16.gmra.mrb[0].mxu0 %v593
      %v1102 = vpop.f32.mrb[0].mxu0
      %v1103 = vadd.f32 %v1062, %v1102
      %v1104 = vpop.f32.mrb[0].mxu0
      %v1105 = vpop.f32.mrb[0].mxu0
      %v1106 = vadd.f32 %v1065, %v1105
      %v1107 = vpop.f32.mrb[0].mxu0
      %1108 = vdwg.mxu0
      %v1109 = vld [vmem:[%s3] sm:$0xff]
      %v1110 = vld [vmem:[%s3 + $0x8] sm:$0xf]
      %v1111 = vadd.f32 %v1103, %v1109
      %v1112 = vadd.f32 %v1106, %v1110
      %v1113 = vld [vmem:[%s4] sm:$0x1]
      %v1114 = vld [vmem:[%s5] sm:$0x1]
      %vm1115 = vcmask 261120
      %v1116 = vsel %vm1115, %v1111, 0.0
      %1117 = vadd.xlane.f32.xlu0 %v1116
      %v1118 = vpop.xlane.xlu0 %1117
      %vm1119 = vcmask 257024
      %v1120 = vsel %vm1119, %v1112, 0.0
      %1121 = vadd.xlane.f32.xlu0 %v1120
      %v1122 = vpop.xlane.xlu0 %1121
      %v1123 = vrcp.pop 32.0
      %v1124 = vmul.f32 %v1118, %v1123
      %v1125 = vmul.f32 %v1122, %v1123
      %v1126 = vsub.f32 %v1111, %v1124
      %v1127 = vsub.f32 %v1112, %v1125
      %v1128 = vmul.f32 %v1126, %v1126
      %v1129 = vmul.f32 %v1127, %v1127
      %v1130 = vsel %vm1115, %v1128, 0.0
      %1131 = vadd.xlane.f32.xlu0 %v1130
      %v1132 = vpop.xlane.xlu0 %1131
      %v1133 = vsel %vm1119, %v1129, 0.0
      %1134 = vadd.xlane.f32.xlu0 %v1133
      %v1135 = vpop.xlane.xlu0 %1134
      %v1136 = vmul.f32 %v1132, %v1123
      %v1137 = vmul.f32 %v1135, %v1123
      %v1138 = vadd.f32 %v1136, 1e-06
      %v1139 = vadd.f32 %v1137, 1e-06
      %v1140 = vrsqrt.pop %v1138
      %v1141 = vrsqrt.pop %v1139
      %v1142 = vmul.f32 %v1126, %v1140
      %v1143 = vmul.f32 %v1127, %v1141
      %v1145 = vlaneseq
      %v1146 = vshrl.u32 %v1145, 7
      %v1147 = vsub.s32 0, %v1146
      %v1148 = vrot.slane %v1113, %v1147
      %v1150 = vmul.f32 %v1142, %v1148
      %v1151 = vmul.f32 %v1143, %v1148
      %v1153 = vlaneseq
      %v1154 = vshrl.u32 %v1153, 7
      %v1155 = vsub.s32 0, %v1154
      %v1156 = vrot.slane %v1114, %v1155
      %v1158 = vadd.f32 %v1150, %v1156
      %v1159 = vadd.f32 %v1151, %v1156
      %v1160 = vpack.c.bf16 %v1159, %v1158
      %v1161 = vld [vmem:[%s6] sm:$0xf]
      %v1162 = vld [vmem:[%s6 + $0x4] sm:$0xf]
      %v1163 = vld [vmem:[%s6 + $0x8] sm:$0xf]
      %v1164 = vld [vmem:[%s6 + $0xc] sm:$0xf]
      %v1165 = vld [vmem:[%s7] sm:$0x1]
      %v1167 = vlaneseq
      %v1168 = vshrl.u32 %v1167, 7
      %v1169 = vsub.s32 0, %v1168
      %v1170 = vrot.slane %v1165, %v1169
      %v1176 = vunpack.c.l.b16 %v1161
      %v1177 = vunpack.c.l.b16 %v1162
      %v1178 = vunpack.c.l.b16 %v1163
      %v1179 = vunpack.c.l.b16 %v1164
      %v1180 = vpack.c.b16 %v1177, %v1176
      %v1181 = vpack.c.b16 %v1179, %v1178
      %v1185 = vsel %vm1115, %v1160, 0
      %1187 = vmatprep.subr.bf16.mxu0 0
      %1188 = vmatpush1.bf16.msra.mxu0 %v1180
      %1189 = vmatprep.subr.bf16.mxu0 0
      %1190 = vmatpush1.bf16.msra.mxu0 %v1181
      %1191 = vmatprep.subr.bf16.mxu0 0
      %1192 = vmatpush1.bf16.msra.mxu0 0
      %1193 = vmatprep.subr.bf16.mxu0 0
      %1194 = vmatpush1.bf16.msra.mxu0 0
      %1195 = vmatprep.subr.bf16.mxu0 0
      %1196 = vmatpush1.bf16.msra.mxu0 0
      %1197 = vmatprep.subr.bf16.mxu0 0
      %1198 = vmatpush1.bf16.msra.mxu0 0
      %1199 = vmatprep.subr.bf16.mxu0 0
      %1200 = vmatpush1.bf16.msra.mxu0 0
      %1201 = vmatprep.subr.bf16.mxu0 0
      %1202 = vmatpush1.bf16.msra.mxu0 0
      %1203 = vmatprep.subr.bf16.mxu0 0
      %1204 = vmatpush1.bf16.msra.mxu0 0
      %1205 = vmatprep.subr.bf16.mxu0 0
      %1206 = vmatpush1.bf16.msra.mxu0 0
      %1207 = vmatprep.subr.bf16.mxu0 0
      %1208 = vmatpush1.bf16.msra.mxu0 0
      %1209 = vmatprep.subr.bf16.mxu0 0
      %1210 = vmatpush1.bf16.msra.mxu0 0
      %1211 = vmatprep.subr.bf16.mxu0 0
      %1212 = vmatpush1.bf16.msra.mxu0 0
      %1213 = vmatprep.subr.bf16.mxu0 0
      %1214 = vmatpush1.bf16.msra.mxu0 0
      %1215 = vmatprep.subr.bf16.mxu0 0
      %1216 = vmatpush1.bf16.msra.mxu0 0
      %1217 = vmatprep.subr.bf16.mxu0 0
      %1218 = vmatpush1.bf16.msra.mxu0 0
      %1219 = vmatprep.mubr.bf16.mxu0 0
      %1220 = vmatmul.mubr.bf16.gmra.mrb[0].mxu0 %v1185
      %v1221 = vpop.f32.mrb[0].mxu0
      %v1222 = vadd.f32 %v1170, %v1221
      %v1223 = vpop.f32.mrb[0].mxu0
      %v1224 = vpop.f32.mrb[0].mxu0
      %v1225 = vadd.f32 %v1170, %v1224
      %v1226 = vpop.f32.mrb[0].mxu0
      %1227 = vdwg.mxu0
      %v1228 = vmul.f32 %v1222, 0.35355338
      %v1229 = vmul.f32 %v1225, 0.35355338
      %1232 = vrot.lane.b32.xlu0 %v1222, 96
      %v1233 = vpop.permute.xlu0 %1232
      %1234 = vrot.lane.b32.xlu0 %v1225, 96
      %v1235 = vpop.permute.xlu0 %1234
      %vm1236 = vcmask 64512
      %v1238 = vsel %vm1236, %v1228, 0
      %v1241 = vsel %vm1236, %v1229, 0
      %v1243 = vsel %vm1236, %v1233, 0
      %v1245 = vsel %vm1236, %v1235, 0
      %1247 = vmatprep.subr.mxu0 0.0
      %1248 = vmatpush1.xpose.msra.mxu0 %v1243
      %1249 = vmatprep.subr.mxu0 0.0
      %1250 = vmatpush1.xpose.msra.mxu0 %v1245
      %1251 = vmatprep.subr.mxu0 0.0
      %1252 = vmatpush1.xpose.msra.mxu0 0.0
      %1253 = vmatprep.subr.mxu0 0.0
      %1254 = vmatpush1.xpose.msra.mxu0 0.0
      %1255 = vmatprep.subr.mxu0 0.0
      %1256 = vmatpush1.xpose.msra.mxu0 0.0
      %1257 = vmatprep.subr.mxu0 0.0
      %1258 = vmatpush1.xpose.msra.mxu0 0.0
      %1259 = vmatprep.subr.mxu0 0.0
      %1260 = vmatpush1.xpose.msra.mxu0 0.0
      %1261 = vmatprep.subr.mxu0 0.0
      %1262 = vmatpush1.xpose.msra.mxu0 0.0
      %1263 = vmatprep.subr.mxu0 0.0
      %1264 = vmatpush1.xpose.msra.mxu0 0.0
      %1265 = vmatprep.subr.mxu0 0.0
      %1266 = vmatpush1.xpose.msra.mxu0 0.0
      %1267 = vmatprep.subr.mxu0 0.0
      %1268 = vmatpush1.xpose.msra.mxu0 0.0
      %1269 = vmatprep.subr.mxu0 0.0
      %1270 = vmatpush1.xpose.msra.mxu0 0.0
      %1271 = vmatprep.subr.mxu0 0.0
      %1272 = vmatpush1.xpose.msra.mxu0 0.0
      %1273 = vmatprep.subr.mxu0 0.0
      %1274 = vmatpush1.xpose.msra.mxu0 0.0
      %1275 = vmatprep.subr.mxu0 0.0
      %1276 = vmatpush1.xpose.msra.mxu0 0.0
      %1277 = vmatprep.subr.mxu0 0.0
      %1278 = vmatpush1.xpose.msra.mxu0 0.0
      %1279 = vmatprep.subr.mxu0 0.0
      %1280 = vmatpush1.xpose.msra.mxu0 0.0
      %1281 = vmatprep.subr.mxu0 0.0
      %1282 = vmatpush1.xpose.msra.mxu0 0.0
      %1283 = vmatprep.subr.mxu0 0.0
      %1284 = vmatpush1.xpose.msra.mxu0 0.0
      %1285 = vmatprep.subr.mxu0 0.0
      %1286 = vmatpush1.xpose.msra.mxu0 0.0
      %1287 = vmatprep.subr.mxu0 0.0
      %1288 = vmatpush1.xpose.msra.mxu0 0.0
      %1289 = vmatprep.subr.mxu0 0.0
      %1290 = vmatpush1.xpose.msra.mxu0 0.0
      %1291 = vmatprep.subr.mxu0 0.0
      %1292 = vmatpush1.xpose.msra.mxu0 0.0
      %1293 = vmatprep.subr.mxu0 0.0
      %1294 = vmatpush1.xpose.msra.mxu0 0.0
      %1295 = vmatprep.subr.mxu0 0.0
      %1296 = vmatpush1.xpose.msra.mxu0 0.0
      %1297 = vmatprep.subr.mxu0 0.0
      %1298 = vmatpush1.xpose.msra.mxu0 0.0
      %1299 = vmatprep.subr.mxu0 0.0
      %1300 = vmatpush1.xpose.msra.mxu0 0.0
      %1301 = vmatprep.subr.mxu0 0.0
      %1302 = vmatpush1.xpose.msra.mxu0 0.0
      %1303 = vmatprep.subr.mxu0 0.0
      %1304 = vmatpush1.xpose.msra.mxu0 0.0
      %1305 = vmatprep.subr.mxu0 0.0
      %1306 = vmatpush1.xpose.msra.mxu0 0.0
      %1307 = vmatprep.subr.mxu0 0.0
      %1308 = vmatpush1.xpose.msra.mxu0 0.0
      %1309 = vmatprep.subr.mxu0 0.0
      %1310 = vmatpush1.xpose.msra.mxu0 0.0
      %1311 = vmatprep.mubr.f32.mxu0 0.0
      %1312 = vmatmul.mubr.f32.gmra.mrb[0].mxu0 %v1238
      %v1313 = vpop.f32.mrb[0].mxu0
      %v1314 = vadd.f32 0.0, %v1313
      %v1315 = vpop.f32.mrb[0].mxu0
      %1316 = vmatprep.mubr.f32.mxu0 0.0
      %1317 = vmatmul.mubr.f32.gmra.mrb[0].mxu0 %v1241
      %v1318 = vpop.f32.mrb[0].mxu0
      %v1319 = vadd.f32 0.0, %v1318
      %v1320 = vpop.f32.mrb[0].mxu0
      %1321 = vdwg.mxu0
      %vm1322 = vcmask 97280
      %v1323 = vsel %vm1322, %v1314, -inf
      %1324 = vmax.xlane.f32.xlu0 %v1323
      %v1325 = vpop.xlane.xlu0 %1324
      %vm1326 = vcmask 93184
      %v1327 = vsel %vm1326, %v1319, -inf
      %1328 = vmax.xlane.f32.xlu0 %v1327
      %v1329 = vpop.xlane.xlu0 %1328
      %v1330 = vsub.f32 %v1314, %v1325
      %v1331 = vsub.f32 %v1319, %v1329
      %v1332 = vmul.f32 %v1330, 1.442695
      %v1333 = vpow.pop %v1332
      %v1334 = vmul.f32 %v1331, 1.442695
      %v1335 = vpow.pop %v1334
      %v1336 = vsel %vm1322, %v1333, 0.0
      %1337 = vadd.xlane.f32.xlu0 %v1336
      %v1338 = vpop.xlane.xlu0 %1337
      %v1339 = vsel %vm1326, %v1335, 0.0
      %1340 = vadd.xlane.f32.xlu0 %v1339
      %v1341 = vpop.xlane.xlu0 %1340
      %v1342 = vrcp.pop %v1338
      %v1343 = vmul.f32 %v1333, %v1342
      %v1344 = vrcp.pop %v1341
      %v1345 = vmul.f32 %v1335, %v1344
      %1346 = vrot.lane.b32.xlu0 %v1222, 64
      %v1347 = vpop.permute.xlu0 %1346
      %1348 = vrot.lane.b32.xlu0 %v1225, 64
      %v1349 = vpop.permute.xlu0 %1348
      %v1352 = vsel %vm1322, %v1343, 0
      %v1355 = vsel %vm1322, %v1345, 0
      %vm1357 = vcmask 1043456
      %v1358 = vsel %vm1357, %v1349, 0
      %1360 = vmatprep.subr.mxu0 0.0
      %1361 = vmatpush1.msra.mxu0 %v1347
      %1362 = vmatprep.subr.mxu0 0.0
      %1363 = vmatpush1.msra.mxu0 %v1358
      %1364 = vmatprep.subr.mxu0 0.0
      %1365 = vmatpush1.msra.mxu0 0.0
      %1366 = vmatprep.subr.mxu0 0.0
      %1367 = vmatpush1.msra.mxu0 0.0
      %1368 = vmatprep.subr.mxu0 0.0
      %1369 = vmatpush1.msra.mxu0 0.0
      %1370 = vmatprep.subr.mxu0 0.0
      %1371 = vmatpush1.msra.mxu0 0.0
      %1372 = vmatprep.subr.mxu0 0.0
      %1373 = vmatpush1.msra.mxu0 0.0
      %1374 = vmatprep.subr.mxu0 0.0
      %1375 = vmatpush1.msra.mxu0 0.0
      %1376 = vmatprep.subr.mxu0 0.0
      %1377 = vmatpush1.msra.mxu0 0.0
      %1378 = vmatprep.subr.mxu0 0.0
      %1379 = vmatpush1.msra.mxu0 0.0
      %1380 = vmatprep.subr.mxu0 0.0
      %1381 = vmatpush1.msra.mxu0 0.0
      %1382 = vmatprep.subr.mxu0 0.0
      %1383 = vmatpush1.msra.mxu0 0.0
      %1384 = vmatprep.subr.mxu0 0.0
      %1385 = vmatpush1.msra.mxu0 0.0
      %1386 = vmatprep.subr.mxu0 0.0
      %1387 = vmatpush1.msra.mxu0 0.0
      %1388 = vmatprep.subr.mxu0 0.0
      %1389 = vmatpush1.msra.mxu0 0.0
      %1390 = vmatprep.subr.mxu0 0.0
      %1391 = vmatpush1.msra.mxu0 0.0
      %1392 = vmatprep.subr.mxu0 0.0
      %1393 = vmatpush1.msra.mxu0 0.0
      %1394 = vmatprep.subr.mxu0 0.0
      %1395 = vmatpush1.msra.mxu0 0.0
      %1396 = vmatprep.subr.mxu0 0.0
      %1397 = vmatpush1.msra.mxu0 0.0
      %1398 = vmatprep.subr.mxu0 0.0
      %1399 = vmatpush1.msra.mxu0 0.0
      %1400 = vmatprep.subr.mxu0 0.0
      %1401 = vmatpush1.msra.mxu0 0.0
      %1402 = vmatprep.subr.mxu0 0.0
      %1403 = vmatpush1.msra.mxu0 0.0
      %1404 = vmatprep.subr.mxu0 0.0
      %1405 = vmatpush1.msra.mxu0 0.0
      %1406 = vmatprep.subr.mxu0 0.0
      %1407 = vmatpush1.msra.mxu0 0.0
      %1408 = vmatprep.subr.mxu0 0.0
      %1409 = vmatpush1.msra.mxu0 0.0
      %1410 = vmatprep.subr.mxu0 0.0
      %1411 = vmatpush1.msra.mxu0 0.0
      %1412 = vmatprep.subr.mxu0 0.0
      %1413 = vmatpush1.msra.mxu0 0.0
      %1414 = vmatprep.subr.mxu0 0.0
      %1415 = vmatpush1.msra.mxu0 0.0
      %1416 = vmatprep.subr.mxu0 0.0
      %1417 = vmatpush1.msra.mxu0 0.0
      %1418 = vmatprep.subr.mxu0 0.0
      %1419 = vmatpush1.msra.mxu0 0.0
      %1420 = vmatprep.subr.mxu0 0.0
      %1421 = vmatpush1.msra.mxu0 0.0
      %1422 = vmatprep.subr.mxu0 0.0
      %1423 = vmatpush1.msra.mxu0 0.0
      %1424 = vmatprep.mubr.f32.mxu0 0.0
      %1425 = vmatmul.mubr.f32.gmra.mrb[0].mxu0 %v1352
      %v1426 = vpop.f32.mrb[0].mxu0
      %v1427 = vadd.f32 0.0, %v1426
      %v1428 = vpop.f32.mrb[0].mxu0
      %1429 = vmatprep.mubr.f32.mxu0 0.0
      %1430 = vmatmul.mubr.f32.gmra.mrb[0].mxu0 %v1355
      %v1431 = vpop.f32.mrb[0].mxu0
      %v1432 = vadd.f32 0.0, %v1431
      %v1433 = vpop.f32.mrb[0].mxu0
      %1434 = vdwg.mxu0
      %1435 = vrot.lane.b32.xlu0 %v1228, 120
      %v1436 = vpop.permute.xlu0 %1435
      %1437 = vrot.lane.b32.xlu0 %v1229, 120
      %v1438 = vpop.permute.xlu0 %1437
      %1439 = vrot.lane.b32.xlu0 %v1222, 88
      %v1440 = vpop.permute.xlu0 %1439
      %1441 = vrot.lane.b32.xlu0 %v1225, 88
      %v1442 = vpop.permute.xlu0 %1441
      %v1443 = vsel %vm1236, %v1436, 0
      %v1445 = vsel %vm1236, %v1438, 0
      %v1447 = vsel %vm1236, %v1440, 0
      %v1449 = vsel %vm1236, %v1442, 0
      %1451 = vmatprep.subr.mxu0 0.0
      %1452 = vmatpush1.xpose.msra.mxu0 %v1447
      %1453 = vmatprep.subr.mxu0 0.0
      %1454 = vmatpush1.xpose.msra.mxu0 %v1449
      %1455 = vmatprep.subr.mxu0 0.0
      %1456 = vmatpush1.xpose.msra.mxu0 0.0
      %1457 = vmatprep.subr.mxu0 0.0
      %1458 = vmatpush1.xpose.msra.mxu0 0.0
      %1459 = vmatprep.subr.mxu0 0.0
      %1460 = vmatpush1.xpose.msra.mxu0 0.0
      %1461 = vmatprep.subr.mxu0 0.0
      %1462 = vmatpush1.xpose.msra.mxu0 0.0
      %1463 = vmatprep.subr.mxu0 0.0
      %1464 = vmatpush1.xpose.msra.mxu0 0.0
      %1465 = vmatprep.subr.mxu0 0.0
      %1466 = vmatpush1.xpose.msra.mxu0 0.0
      %1467 = vmatprep.subr.mxu0 0.0
      %1468 = vmatpush1.xpose.msra.mxu0 0.0
      %1469 = vmatprep.subr.mxu0 0.0
      %1470 = vmatpush1.xpose.msra.mxu0 0.0
      %1471 = vmatprep.subr.mxu0 0.0
      %1472 = vmatpush1.xpose.msra.mxu0 0.0
      %1473 = vmatprep.subr.mxu0 0.0
      %1474 = vmatpush1.xpose.msra.mxu0 0.0
      %1475 = vmatprep.subr.mxu0 0.0
      %1476 = vmatpush1.xpose.msra.mxu0 0.0
      %1477 = vmatprep.subr.mxu0 0.0
      %1478 = vmatpush1.xpose.msra.mxu0 0.0
      %1479 = vmatprep.subr.mxu0 0.0
      %1480 = vmatpush1.xpose.msra.mxu0 0.0
      %1481 = vmatprep.subr.mxu0 0.0
      %1482 = vmatpush1.xpose.msra.mxu0 0.0
      %1483 = vmatprep.subr.mxu0 0.0
      %1484 = vmatpush1.xpose.msra.mxu0 0.0
      %1485 = vmatprep.subr.mxu0 0.0
      %1486 = vmatpush1.xpose.msra.mxu0 0.0
      %1487 = vmatprep.subr.mxu0 0.0
      %1488 = vmatpush1.xpose.msra.mxu0 0.0
      %1489 = vmatprep.subr.mxu0 0.0
      %1490 = vmatpush1.xpose.msra.mxu0 0.0
      %1491 = vmatprep.subr.mxu0 0.0
      %1492 = vmatpush1.xpose.msra.mxu0 0.0
      %1493 = vmatprep.subr.mxu0 0.0
      %1494 = vmatpush1.xpose.msra.mxu0 0.0
      %1495 = vmatprep.subr.mxu0 0.0
      %1496 = vmatpush1.xpose.msra.mxu0 0.0
      %1497 = vmatprep.subr.mxu0 0.0
      %1498 = vmatpush1.xpose.msra.mxu0 0.0
      %1499 = vmatprep.subr.mxu0 0.0
      %1500 = vmatpush1.xpose.msra.mxu0 0.0
      %1501 = vmatprep.subr.mxu0 0.0
      %1502 = vmatpush1.xpose.msra.mxu0 0.0
      %1503 = vmatprep.subr.mxu0 0.0
      %1504 = vmatpush1.xpose.msra.mxu0 0.0
      %1505 = vmatprep.subr.mxu0 0.0
      %1506 = vmatpush1.xpose.msra.mxu0 0.0
      %1507 = vmatprep.subr.mxu0 0.0
      %1508 = vmatpush1.xpose.msra.mxu0 0.0
      %1509 = vmatprep.subr.mxu0 0.0
      %1510 = vmatpush1.xpose.msra.mxu0 0.0
      %1511 = vmatprep.subr.mxu0 0.0
      %1512 = vmatpush1.xpose.msra.mxu0 0.0
      %1513 = vmatprep.subr.mxu0 0.0
      %1514 = vmatpush1.xpose.msra.mxu0 0.0
      %1515 = vmatprep.mubr.f32.mxu0 0.0
      %1516 = vmatmul.mubr.f32.gmra.mrb[0].mxu0 %v1443
      %v1517 = vpop.f32.mrb[0].mxu0
      %v1518 = vadd.f32 0.0, %v1517
      %v1519 = vpop.f32.mrb[0].mxu0
      %1520 = vmatprep.mubr.f32.mxu0 0.0
      %1521 = vmatmul.mubr.f32.gmra.mrb[0].mxu0 %v1445
      %v1522 = vpop.f32.mrb[0].mxu0
      %v1523 = vadd.f32 0.0, %v1522
      %v1524 = vpop.f32.mrb[0].mxu0
      %1525 = vdwg.mxu0
      %v1526 = vsel %vm1322, %v1518, -inf
      %1527 = vmax.xlane.f32.xlu0 %v1526
      %v1528 = vpop.xlane.xlu0 %1527
      %v1529 = vsel %vm1326, %v1523, -inf
      %1530 = vmax.xlane.f32.xlu0 %v1529
      %v1531 = vpop.xlane.xlu0 %1530
      %v1532 = vsub.f32 %v1518, %v1528
      %v1533 = vsub.f32 %v1523, %v1531
      %v1534 = vmul.f32 %v1532, 1.442695
      %v1535 = vpow.pop %v1534
      %v1536 = vmul.f32 %v1533, 1.442695
      %v1537 = vpow.pop %v1536
      %v1538 = vsel %vm1322, %v1535, 0.0
      %1539 = vadd.xlane.f32.xlu0 %v1538
      %v1540 = vpop.xlane.xlu0 %1539
      %v1541 = vsel %vm1326, %v1537, 0.0
      %1542 = vadd.xlane.f32.xlu0 %v1541
      %v1543 = vpop.xlane.xlu0 %1542
      %v1544 = vrcp.pop %v1540
      %v1545 = vmul.f32 %v1535, %v1544
      %v1546 = vrcp.pop %v1543
      %v1547 = vmul.f32 %v1537, %v1546
      %1548 = vrot.lane.b32.xlu0 %v1222, 56
      %v1549 = vpop.permute.xlu0 %1548
      %1550 = vrot.lane.b32.xlu0 %v1225, 56
      %v1551 = vpop.permute.xlu0 %1550
      %v1554 = vsel %vm1322, %v1545, 0
      %v1557 = vsel %vm1322, %v1547, 0
      %v1559 = vsel %vm1357, %v1551, 0
      %1561 = vmatprep.subr.mxu0 0.0
      %1562 = vmatpush1.msra.mxu0 %v1549
      %1563 = vmatprep.subr.mxu0 0.0
      %1564 = vmatpush1.msra.mxu0 %v1559
      %1565 = vmatprep.subr.mxu0 0.0
      %1566 = vmatpush1.msra.mxu0 0.0
      %1567 = vmatprep.subr.mxu0 0.0
      %1568 = vmatpush1.msra.mxu0 0.0
      %1569 = vmatprep.subr.mxu0 0.0
      %1570 = vmatpush1.msra.mxu0 0.0
      %1571 = vmatprep.subr.mxu0 0.0
      %1572 = vmatpush1.msra.mxu0 0.0
      %1573 = vmatprep.subr.mxu0 0.0
      %1574 = vmatpush1.msra.mxu0 0.0
      %1575 = vmatprep.subr.mxu0 0.0
      %1576 = vmatpush1.msra.mxu0 0.0
      %1577 = vmatprep.subr.mxu0 0.0
      %1578 = vmatpush1.msra.mxu0 0.0
      %1579 = vmatprep.subr.mxu0 0.0
      %1580 = vmatpush1.msra.mxu0 0.0
      %1581 = vmatprep.subr.mxu0 0.0
      %1582 = vmatpush1.msra.mxu0 0.0
      %1583 = vmatprep.subr.mxu0 0.0
      %1584 = vmatpush1.msra.mxu0 0.0
      %1585 = vmatprep.subr.mxu0 0.0
      %1586 = vmatpush1.msra.mxu0 0.0
      %1587 = vmatprep.subr.mxu0 0.0
      %1588 = vmatpush1.msra.mxu0 0.0
      %1589 = vmatprep.subr.mxu0 0.0
      %1590 = vmatpush1.msra.mxu0 0.0
      %1591 = vmatprep.subr.mxu0 0.0
      %1592 = vmatpush1.msra.mxu0 0.0
      %1593 = vmatprep.subr.mxu0 0.0
      %1594 = vmatpush1.msra.mxu0 0.0
      %1595 = vmatprep.subr.mxu0 0.0
      %1596 = vmatpush1.msra.mxu0 0.0
      %1597 = vmatprep.subr.mxu0 0.0
      %1598 = vmatpush1.msra.mxu0 0.0
      %1599 = vmatprep.subr.mxu0 0.0
      %1600 = vmatpush1.msra.mxu0 0.0
      %1601 = vmatprep.subr.mxu0 0.0
      %1602 = vmatpush1.msra.mxu0 0.0
      %1603 = vmatprep.subr.mxu0 0.0
      %1604 = vmatpush1.msra.mxu0 0.0
      %1605 = vmatprep.subr.mxu0 0.0
      %1606 = vmatpush1.msra.mxu0 0.0
      %1607 = vmatprep.subr.mxu0 0.0
      %1608 = vmatpush1.msra.mxu0 0.0
      %1609 = vmatprep.subr.mxu0 0.0
      %1610 = vmatpush1.msra.mxu0 0.0
      %1611 = vmatprep.subr.mxu0 0.0
      %1612 = vmatpush1.msra.mxu0 0.0
      %1613 = vmatprep.subr.mxu0 0.0
      %1614 = vmatpush1.msra.mxu0 0.0
      %1615 = vmatprep.subr.mxu0 0.0
      %1616 = vmatpush1.msra.mxu0 0.0
      %1617 = vmatprep.subr.mxu0 0.0
      %1618 = vmatpush1.msra.mxu0 0.0
      %1619 = vmatprep.subr.mxu0 0.0
      %1620 = vmatpush1.msra.mxu0 0.0
      %1621 = vmatprep.subr.mxu0 0.0
      %1622 = vmatpush1.msra.mxu0 0.0
      %1623 = vmatprep.subr.mxu0 0.0
      %1624 = vmatpush1.msra.mxu0 0.0
      %1625 = vmatprep.mubr.f32.mxu0 0.0
      %1626 = vmatmul.mubr.f32.gmra.mrb[0].mxu0 %v1554
      %v1627 = vpop.f32.mrb[0].mxu0
      %v1628 = vadd.f32 0.0, %v1627
      %v1629 = vpop.f32.mrb[0].mxu0
      %1630 = vmatprep.mubr.f32.mxu0 0.0
      %1631 = vmatmul.mubr.f32.gmra.mrb[0].mxu0 %v1557
      %v1632 = vpop.f32.mrb[0].mxu0
      %v1633 = vadd.f32 0.0, %v1632
      %v1634 = vpop.f32.mrb[0].mxu0
      %1635 = vdwg.mxu0
      %1636 = vrot.lane.b32.xlu0 %v1228, 112
      %v1637 = vpop.permute.xlu0 %1636
      %1638 = vrot.lane.b32.xlu0 %v1229, 112
      %v1639 = vpop.permute.xlu0 %1638
      %1640 = vrot.lane.b32.xlu0 %v1222, 80
      %v1641 = vpop.permute.xlu0 %1640
      %1642 = vrot.lane.b32.xlu0 %v1225, 80
      %v1643 = vpop.permute.xlu0 %1642
      %v1644 = vsel %vm1236, %v1637, 0
      %v1646 = vsel %vm1236, %v1639, 0
      %v1648 = vsel %vm1236, %v1641, 0
      %v1650 = vsel %vm1236, %v1643, 0
      %1652 = vmatprep.subr.mxu0 0.0
      %1653 = vmatpush1.xpose.msra.mxu0 %v1648
      %1654 = vmatprep.subr.mxu0 0.0
      %1655 = vmatpush1.xpose.msra.mxu0 %v1650
      %1656 = vmatprep.subr.mxu0 0.0
      %1657 = vmatpush1.xpose.msra.mxu0 0.0
      %1658 = vmatprep.subr.mxu0 0.0
      %1659 = vmatpush1.xpose.msra.mxu0 0.0
      %1660 = vmatprep.subr.mxu0 0.0
      %1661 = vmatpush1.xpose.msra.mxu0 0.0
      %1662 = vmatprep.subr.mxu0 0.0
      %1663 = vmatpush1.xpose.msra.mxu0 0.0
      %1664 = vmatprep.subr.mxu0 0.0
      %1665 = vmatpush1.xpose.msra.mxu0 0.0
      %1666 = vmatprep.subr.mxu0 0.0
      %1667 = vmatpush1.xpose.msra.mxu0 0.0
      %1668 = vmatprep.subr.mxu0 0.0
      %1669 = vmatpush1.xpose.msra.mxu0 0.0
      %1670 = vmatprep.subr.mxu0 0.0
      %1671 = vmatpush1.xpose.msra.mxu0 0.0
      %1672 = vmatprep.subr.mxu0 0.0
      %1673 = vmatpush1.xpose.msra.mxu0 0.0
      %1674 = vmatprep.subr.mxu0 0.0
      %1675 = vmatpush1.xpose.msra.mxu0 0.0
      %1676 = vmatprep.subr.mxu0 0.0
      %1677 = vmatpush1.xpose.msra.mxu0 0.0
      %1678 = vmatprep.subr.mxu0 0.0
      %1679 = vmatpush1.xpose.msra.mxu0 0.0
      %1680 = vmatprep.subr.mxu0 0.0
      %1681 = vmatpush1.xpose.msra.mxu0 0.0
      %1682 = vmatprep.subr.mxu0 0.0
      %1683 = vmatpush1.xpose.msra.mxu0 0.0
      %1684 = vmatprep.subr.mxu0 0.0
      %1685 = vmatpush1.xpose.msra.mxu0 0.0
      %1686 = vmatprep.subr.mxu0 0.0
      %1687 = vmatpush1.xpose.msra.mxu0 0.0
      %1688 = vmatprep.subr.mxu0 0.0
      %1689 = vmatpush1.xpose.msra.mxu0 0.0
      %1690 = vmatprep.subr.mxu0 0.0
      %1691 = vmatpush1.xpose.msra.mxu0 0.0
      %1692 = vmatprep.subr.mxu0 0.0
      %1693 = vmatpush1.xpose.msra.mxu0 0.0
      %1694 = vmatprep.subr.mxu0 0.0
      %1695 = vmatpush1.xpose.msra.mxu0 0.0
      %1696 = vmatprep.subr.mxu0 0.0
      %1697 = vmatpush1.xpose.msra.mxu0 0.0
      %1698 = vmatprep.subr.mxu0 0.0
      %1699 = vmatpush1.xpose.msra.mxu0 0.0
      %1700 = vmatprep.subr.mxu0 0.0
      %1701 = vmatpush1.xpose.msra.mxu0 0.0
      %1702 = vmatprep.subr.mxu0 0.0
      %1703 = vmatpush1.xpose.msra.mxu0 0.0
      %1704 = vmatprep.subr.mxu0 0.0
      %1705 = vmatpush1.xpose.msra.mxu0 0.0
      %1706 = vmatprep.subr.mxu0 0.0
      %1707 = vmatpush1.xpose.msra.mxu0 0.0
      %1708 = vmatprep.subr.mxu0 0.0
      %1709 = vmatpush1.xpose.msra.mxu0 0.0
      %1710 = vmatprep.subr.mxu0 0.0
      %1711 = vmatpush1.xpose.msra.mxu0 0.0
      %1712 = vmatprep.subr.mxu0 0.0
      %1713 = vmatpush1.xpose.msra.mxu0 0.0
      %1714 = vmatprep.subr.mxu0 0.0
      %1715 = vmatpush1.xpose.msra.mxu0 0.0
      %1716 = vmatprep.mubr.f32.mxu0 0.0
      %1717 = vmatmul.mubr.f32.gmra.mrb[0].mxu0 %v1644
      %v1718 = vpop.f32.mrb[0].mxu0
      %v1719 = vadd.f32 0.0, %v1718
      %v1720 = vpop.f32.mrb[0].mxu0
      %1721 = vmatprep.mubr.f32.mxu0 0.0
      %1722 = vmatmul.mubr.f32.gmra.mrb[0].mxu0 %v1646
      %v1723 = vpop.f32.mrb[0].mxu0
      %v1724 = vadd.f32 0.0, %v1723
      %v1725 = vpop.f32.mrb[0].mxu0
      %1726 = vdwg.mxu0
      %v1727 = vsel %vm1322, %v1719, -inf
      %1728 = vmax.xlane.f32.xlu0 %v1727
      %v1729 = vpop.xlane.xlu0 %1728
      %v1730 = vsel %vm1326, %v1724, -inf
      %1731 = vmax.xlane.f32.xlu0 %v1730
      %v1732 = vpop.xlane.xlu0 %1731
      %v1733 = vsub.f32 %v1719, %v1729
      %v1734 = vsub.f32 %v1724, %v1732
      %v1735 = vmul.f32 %v1733, 1.442695
      %v1736 = vpow.pop %v1735
      %v1737 = vmul.f32 %v1734, 1.442695
      %v1738 = vpow.pop %v1737
      %v1739 = vsel %vm1322, %v1736, 0.0
      %1740 = vadd.xlane.f32.xlu0 %v1739
      %v1741 = vpop.xlane.xlu0 %1740
      %v1742 = vsel %vm1326, %v1738, 0.0
      %1743 = vadd.xlane.f32.xlu0 %v1742
      %v1744 = vpop.xlane.xlu0 %1743
      %v1745 = vrcp.pop %v1741
      %v1746 = vmul.f32 %v1736, %v1745
      %v1747 = vrcp.pop %v1744
      %v1748 = vmul.f32 %v1738, %v1747
      %1749 = vrot.lane.b32.xlu0 %v1222, 48
      %v1750 = vpop.permute.xlu0 %1749
      %1751 = vrot.lane.b32.xlu0 %v1225, 48
      %v1752 = vpop.permute.xlu0 %1751
      %v1755 = vsel %vm1322, %v1746, 0
      %v1758 = vsel %vm1322, %v1748, 0
      %v1760 = vsel %vm1357, %v1752, 0
      %1762 = vmatprep.subr.mxu0 0.0
      %1763 = vmatpush1.msra.mxu0 %v1750
      %1764 = vmatprep.subr.mxu0 0.0
      %1765 = vmatpush1.msra.mxu0 %v1760
      %1766 = vmatprep.subr.mxu0 0.0
      %1767 = vmatpush1.msra.mxu0 0.0
      %1768 = vmatprep.subr.mxu0 0.0
      %1769 = vmatpush1.msra.mxu0 0.0
      %1770 = vmatprep.subr.mxu0 0.0
      %1771 = vmatpush1.msra.mxu0 0.0
      %1772 = vmatprep.subr.mxu0 0.0
      %1773 = vmatpush1.msra.mxu0 0.0
      %1774 = vmatprep.subr.mxu0 0.0
      %1775 = vmatpush1.msra.mxu0 0.0
      %1776 = vmatprep.subr.mxu0 0.0
      %1777 = vmatpush1.msra.mxu0 0.0
      %1778 = vmatprep.subr.mxu0 0.0
      %1779 = vmatpush1.msra.mxu0 0.0
      %1780 = vmatprep.subr.mxu0 0.0
      %1781 = vmatpush1.msra.mxu0 0.0
      %1782 = vmatprep.subr.mxu0 0.0
      %1783 = vmatpush1.msra.mxu0 0.0
      %1784 = vmatprep.subr.mxu0 0.0
      %1785 = vmatpush1.msra.mxu0 0.0
      %1786 = vmatprep.subr.mxu0 0.0
      %1787 = vmatpush1.msra.mxu0 0.0
      %1788 = vmatprep.subr.mxu0 0.0
      %1789 = vmatpush1.msra.mxu0 0.0
      %1790 = vmatprep.subr.mxu0 0.0
      %1791 = vmatpush1.msra.mxu0 0.0
      %1792 = vmatprep.subr.mxu0 0.0
      %1793 = vmatpush1.msra.mxu0 0.0
      %1794 = vmatprep.subr.mxu0 0.0
      %1795 = vmatpush1.msra.mxu0 0.0
      %1796 = vmatprep.subr.mxu0 0.0
      %1797 = vmatpush1.msra.mxu0 0.0
      %1798 = vmatprep.subr.mxu0 0.0
      %1799 = vmatpush1.msra.mxu0 0.0
      %1800 = vmatprep.subr.mxu0 0.0
      %1801 = vmatpush1.msra.mxu0 0.0
      %1802 = vmatprep.subr.mxu0 0.0
      %1803 = vmatpush1.msra.mxu0 0.0
      %1804 = vmatprep.subr.mxu0 0.0
      %1805 = vmatpush1.msra.mxu0 0.0
      %1806 = vmatprep.subr.mxu0 0.0
      %1807 = vmatpush1.msra.mxu0 0.0
      %1808 = vmatprep.subr.mxu0 0.0
      %1809 = vmatpush1.msra.mxu0 0.0
      %1810 = vmatprep.subr.mxu0 0.0
      %1811 = vmatpush1.msra.mxu0 0.0
      %1812 = vmatprep.subr.mxu0 0.0
      %1813 = vmatpush1.msra.mxu0 0.0
      %1814 = vmatprep.subr.mxu0 0.0
      %1815 = vmatpush1.msra.mxu0 0.0
      %1816 = vmatprep.subr.mxu0 0.0
      %1817 = vmatpush1.msra.mxu0 0.0
      %1818 = vmatprep.subr.mxu0 0.0
      %1819 = vmatpush1.msra.mxu0 0.0
      %1820 = vmatprep.subr.mxu0 0.0
      %1821 = vmatpush1.msra.mxu0 0.0
      %1822 = vmatprep.subr.mxu0 0.0
      %1823 = vmatpush1.msra.mxu0 0.0
      %1824 = vmatprep.subr.mxu0 0.0
      %1825 = vmatpush1.msra.mxu0 0.0
      %1826 = vmatprep.mubr.f32.mxu0 0.0
      %1827 = vmatmul.mubr.f32.gmra.mrb[0].mxu0 %v1755
      %v1828 = vpop.f32.mrb[0].mxu0
      %v1829 = vadd.f32 0.0, %v1828
      %v1830 = vpop.f32.mrb[0].mxu0
      %1831 = vmatprep.mubr.f32.mxu0 0.0
      %1832 = vmatmul.mubr.f32.gmra.mrb[0].mxu0 %v1758
      %v1833 = vpop.f32.mrb[0].mxu0
      %v1834 = vadd.f32 0.0, %v1833
      %v1835 = vpop.f32.mrb[0].mxu0
      %1836 = vdwg.mxu0
      %1837 = vrot.lane.b32.xlu0 %v1228, 104
      %v1838 = vpop.permute.xlu0 %1837
      %1839 = vrot.lane.b32.xlu0 %v1229, 104
      %v1840 = vpop.permute.xlu0 %1839
      %1841 = vrot.lane.b32.xlu0 %v1222, 72
      %v1842 = vpop.permute.xlu0 %1841
      %1843 = vrot.lane.b32.xlu0 %v1225, 72
      %v1844 = vpop.permute.xlu0 %1843
      %v1845 = vsel %vm1236, %v1838, 0
      %v1847 = vsel %vm1236, %v1840, 0
      %v1849 = vsel %vm1236, %v1842, 0
      %v1851 = vsel %vm1236, %v1844, 0
      %1853 = vmatprep.subr.mxu0 0.0
      %1854 = vmatpush1.xpose.msra.mxu0 %v1849
      %1855 = vmatprep.subr.mxu0 0.0
      %1856 = vmatpush1.xpose.msra.mxu0 %v1851
      %1857 = vmatprep.subr.mxu0 0.0
      %1858 = vmatpush1.xpose.msra.mxu0 0.0
      %1859 = vmatprep.subr.mxu0 0.0
      %1860 = vmatpush1.xpose.msra.mxu0 0.0
      %1861 = vmatprep.subr.mxu0 0.0
      %1862 = vmatpush1.xpose.msra.mxu0 0.0
      %1863 = vmatprep.subr.mxu0 0.0
      %1864 = vmatpush1.xpose.msra.mxu0 0.0
      %1865 = vmatprep.subr.mxu0 0.0
      %1866 = vmatpush1.xpose.msra.mxu0 0.0
      %1867 = vmatprep.subr.mxu0 0.0
      %1868 = vmatpush1.xpose.msra.mxu0 0.0
      %1869 = vmatprep.subr.mxu0 0.0
      %1870 = vmatpush1.xpose.msra.mxu0 0.0
      %1871 = vmatprep.subr.mxu0 0.0
      %1872 = vmatpush1.xpose.msra.mxu0 0.0
      %1873 = vmatprep.subr.mxu0 0.0
      %1874 = vmatpush1.xpose.msra.mxu0 0.0
      %1875 = vmatprep.subr.mxu0 0.0
      %1876 = vmatpush1.xpose.msra.mxu0 0.0
      %1877 = vmatprep.subr.mxu0 0.0
      %1878 = vmatpush1.xpose.msra.mxu0 0.0
      %1879 = vmatprep.subr.mxu0 0.0
      %1880 = vmatpush1.xpose.msra.mxu0 0.0
      %1881 = vmatprep.subr.mxu0 0.0
      %1882 = vmatpush1.xpose.msra.mxu0 0.0
      %1883 = vmatprep.subr.mxu0 0.0
      %1884 = vmatpush1.xpose.msra.mxu0 0.0
      %1885 = vmatprep.subr.mxu0 0.0
      %1886 = vmatpush1.xpose.msra.mxu0 0.0
      %1887 = vmatprep.subr.mxu0 0.0
      %1888 = vmatpush1.xpose.msra.mxu0 0.0
      %1889 = vmatprep.subr.mxu0 0.0
      %1890 = vmatpush1.xpose.msra.mxu0 0.0
      %1891 = vmatprep.subr.mxu0 0.0
      %1892 = vmatpush1.xpose.msra.mxu0 0.0
      %1893 = vmatprep.subr.mxu0 0.0
      %1894 = vmatpush1.xpose.msra.mxu0 0.0
      %1895 = vmatprep.subr.mxu0 0.0
      %1896 = vmatpush1.xpose.msra.mxu0 0.0
      %1897 = vmatprep.subr.mxu0 0.0
      %1898 = vmatpush1.xpose.msra.mxu0 0.0
      %1899 = vmatprep.subr.mxu0 0.0
      %1900 = vmatpush1.xpose.msra.mxu0 0.0
      %1901 = vmatprep.subr.mxu0 0.0
      %1902 = vmatpush1.xpose.msra.mxu0 0.0
      %1903 = vmatprep.subr.mxu0 0.0
      %1904 = vmatpush1.xpose.msra.mxu0 0.0
      %1905 = vmatprep.subr.mxu0 0.0
      %1906 = vmatpush1.xpose.msra.mxu0 0.0
      %1907 = vmatprep.subr.mxu0 0.0
      %1908 = vmatpush1.xpose.msra.mxu0 0.0
      %1909 = vmatprep.subr.mxu0 0.0
      %1910 = vmatpush1.xpose.msra.mxu0 0.0
      %1911 = vmatprep.subr.mxu0 0.0
      %1912 = vmatpush1.xpose.msra.mxu0 0.0
      %1913 = vmatprep.subr.mxu0 0.0
      %1914 = vmatpush1.xpose.msra.mxu0 0.0
      %1915 = vmatprep.subr.mxu0 0.0
      %1916 = vmatpush1.xpose.msra.mxu0 0.0
      %1917 = vmatprep.mubr.f32.mxu0 0.0
      %1918 = vmatmul.mubr.f32.gmra.mrb[0].mxu0 %v1845
      %v1919 = vpop.f32.mrb[0].mxu0
      %v1920 = vadd.f32 0.0, %v1919
      %v1921 = vpop.f32.mrb[0].mxu0
      %1922 = vmatprep.mubr.f32.mxu0 0.0
      %1923 = vmatmul.mubr.f32.gmra.mrb[0].mxu0 %v1847
      %v1924 = vpop.f32.mrb[0].mxu0
      %v1925 = vadd.f32 0.0, %v1924
      %v1926 = vpop.f32.mrb[0].mxu0
      %1927 = vdwg.mxu0
      %v1928 = vsel %vm1322, %v1920, -inf
      %1929 = vmax.xlane.f32.xlu0 %v1928
      %v1930 = vpop.xlane.xlu0 %1929
      %v1931 = vsel %vm1326, %v1925, -inf
      %1932 = vmax.xlane.f32.xlu0 %v1931
      %v1933 = vpop.xlane.xlu0 %1932
      %v1934 = vsub.f32 %v1920, %v1930
      %v1935 = vsub.f32 %v1925, %v1933
      %v1936 = vmul.f32 %v1934, 1.442695
      %v1937 = vpow.pop %v1936
      %v1938 = vmul.f32 %v1935, 1.442695
      %v1939 = vpow.pop %v1938
      %v1940 = vsel %vm1322, %v1937, 0.0
      %1941 = vadd.xlane.f32.xlu0 %v1940
      %v1942 = vpop.xlane.xlu0 %1941
      %v1943 = vsel %vm1326, %v1939, 0.0
      %1944 = vadd.xlane.f32.xlu0 %v1943
      %v1945 = vpop.xlane.xlu0 %1944
      %v1946 = vrcp.pop %v1942
      %v1947 = vmul.f32 %v1937, %v1946
      %v1948 = vrcp.pop %v1945
      %v1949 = vmul.f32 %v1939, %v1948
      %1950 = vrot.lane.b32.xlu0 %v1222, 40
      %v1951 = vpop.permute.xlu0 %1950
      %1952 = vrot.lane.b32.xlu0 %v1225, 40
      %v1953 = vpop.permute.xlu0 %1952
      %v1956 = vsel %vm1322, %v1947, 0
      %v1959 = vsel %vm1322, %v1949, 0
      %v1961 = vsel %vm1357, %v1953, 0
      %1963 = vmatprep.subr.mxu0 0.0
      %1964 = vmatpush1.msra.mxu0 %v1951
      %1965 = vmatprep.subr.mxu0 0.0
      %1966 = vmatpush1.msra.mxu0 %v1961
      %1967 = vmatprep.subr.mxu0 0.0
      %1968 = vmatpush1.msra.mxu0 0.0
      %1969 = vmatprep.subr.mxu0 0.0
      %1970 = vmatpush1.msra.mxu0 0.0
      %1971 = vmatprep.subr.mxu0 0.0
      %1972 = vmatpush1.msra.mxu0 0.0
      %1973 = vmatprep.subr.mxu0 0.0
      %1974 = vmatpush1.msra.mxu0 0.0
      %1975 = vmatprep.subr.mxu0 0.0
      %1976 = vmatpush1.msra.mxu0 0.0
      %1977 = vmatprep.subr.mxu0 0.0
      %1978 = vmatpush1.msra.mxu0 0.0
      %1979 = vmatprep.subr.mxu0 0.0
      %1980 = vmatpush1.msra.mxu0 0.0
      %1981 = vmatprep.subr.mxu0 0.0
      %1982 = vmatpush1.msra.mxu0 0.0
      %1983 = vmatprep.subr.mxu0 0.0
      %1984 = vmatpush1.msra.mxu0 0.0
      %1985 = vmatprep.subr.mxu0 0.0
      %1986 = vmatpush1.msra.mxu0 0.0
      %1987 = vmatprep.subr.mxu0 0.0
      %1988 = vmatpush1.msra.mxu0 0.0
      %1989 = vmatprep.subr.mxu0 0.0
      %1990 = vmatpush1.msra.mxu0 0.0
      %1991 = vmatprep.subr.mxu0 0.0
      %1992 = vmatpush1.msra.mxu0 0.0
      %1993 = vmatprep.subr.mxu0 0.0
      %1994 = vmatpush1.msra.mxu0 0.0
      %1995 = vmatprep.subr.mxu0 0.0
      %1996 = vmatpush1.msra.mxu0 0.0
      %1997 = vmatprep.subr.mxu0 0.0
      %1998 = vmatpush1.msra.mxu0 0.0
      %1999 = vmatprep.subr.mxu0 0.0
      %2000 = vmatpush1.msra.mxu0 0.0
      %2001 = vmatprep.subr.mxu0 0.0
      %2002 = vmatpush1.msra.mxu0 0.0
      %2003 = vmatprep.subr.mxu0 0.0
      %2004 = vmatpush1.msra.mxu0 0.0
      %2005 = vmatprep.subr.mxu0 0.0
      %2006 = vmatpush1.msra.mxu0 0.0
      %2007 = vmatprep.subr.mxu0 0.0
      %2008 = vmatpush1.msra.mxu0 0.0
      %2009 = vmatprep.subr.mxu0 0.0
      %2010 = vmatpush1.msra.mxu0 0.0
      %2011 = vmatprep.subr.mxu0 0.0
      %2012 = vmatpush1.msra.mxu0 0.0
      %2013 = vmatprep.subr.mxu0 0.0
      %2014 = vmatpush1.msra.mxu0 0.0
      %2015 = vmatprep.subr.mxu0 0.0
      %2016 = vmatpush1.msra.mxu0 0.0
      %2017 = vmatprep.subr.mxu0 0.0
      %2018 = vmatpush1.msra.mxu0 0.0
      %2019 = vmatprep.subr.mxu0 0.0
      %2020 = vmatpush1.msra.mxu0 0.0
      %2021 = vmatprep.subr.mxu0 0.0
      %2022 = vmatpush1.msra.mxu0 0.0
      %2023 = vmatprep.subr.mxu0 0.0
      %2024 = vmatpush1.msra.mxu0 0.0
      %2025 = vmatprep.subr.mxu0 0.0
      %2026 = vmatpush1.msra.mxu0 0.0
      %2027 = vmatprep.mubr.f32.mxu0 0.0
      %2028 = vmatmul.mubr.f32.gmra.mrb[0].mxu0 %v1956
      %v2029 = vpop.f32.mrb[0].mxu0
      %v2030 = vadd.f32 0.0, %v2029
      %v2031 = vpop.f32.mrb[0].mxu0
      %2032 = vmatprep.mubr.f32.mxu0 0.0
      %2033 = vmatmul.mubr.f32.gmra.mrb[0].mxu0 %v1959
      %v2034 = vpop.f32.mrb[0].mxu0
      %v2035 = vadd.f32 0.0, %v2034
      %v2036 = vpop.f32.mrb[0].mxu0
      %2037 = vdwg.mxu0
      %2040 = vrot.lane.b32.xlu0 %v1628, 8
      %v2041 = vpop.permute.xlu0 %2040
      %2042 = vrot.lane.b32.xlu0 %v1633, 8
      %v2043 = vpop.permute.xlu0 %2042
      %2048 = vrot.lane.b32.xlu0 %v1829, 16
      %v2049 = vpop.permute.xlu0 %2048
      %2050 = vrot.lane.b32.xlu0 %v1834, 16
      %v2051 = vpop.permute.xlu0 %2050
      %2056 = vrot.lane.b32.xlu0 %v2030, 24
      %v2057 = vpop.permute.xlu0 %2056
      %2058 = vrot.lane.b32.xlu0 %v2035, 24
      %v2059 = vpop.permute.xlu0 %2058
      %v2062 = vsel %vm1236, %v1427, %v2041
      %v2063 = vsel %vm1236, %v1432, %v2043
      %vm2064 = vcmask 130048
      %v2065 = vsel %vm2064, %v2062, %v2049
      %v2066 = vsel %vm2064, %v2063, %v2051
      %vm2067 = vcmask 195584
      %v2068 = vsel %vm2067, %v2065, %v2057
      %v2069 = vsel %vm2067, %v2066, %v2059
      %v2070 = vpack.c.bf16 %v2069, %v2068
      %v2071 = vld [vmem:[%s8] sm:$0xf]
      %v2072 = vld [vmem:[%s8 + $0x4] sm:$0xf]
      %v2073 = vld [vmem:[%s8 + $0x8] sm:$0xf]
      %v2074 = vld [vmem:[%s8 + $0xc] sm:$0xf]
      %v2075 = vld [vmem:[%s9] sm:$0x1]
      %v2077 = vlaneseq
      %v2078 = vshrl.u32 %v2077, 7
      %v2079 = vsub.s32 0, %v2078
      %v2080 = vrot.slane %v2075, %v2079
      %v2086 = vunpack.c.l.b16 %v2071
      %v2087 = vunpack.c.l.b16 %v2072
      %v2088 = vunpack.c.l.b16 %v2073
      %v2089 = vunpack.c.l.b16 %v2074
      %v2090 = vpack.c.b16 %v2087, %v2086
      %v2091 = vpack.c.b16 %v2089, %v2088
      %v2095 = vsel %vm1115, %v2070, 0
      %2097 = vmatprep.subr.bf16.mxu0 0
      %2098 = vmatpush1.bf16.msra.mxu0 %v2090
      %2099 = vmatprep.subr.bf16.mxu0 0
      %2100 = vmatpush1.bf16.msra.mxu0 %v2091
      %2101 = vmatprep.subr.bf16.mxu0 0
      %2102 = vmatpush1.bf16.msra.mxu0 0
      %2103 = vmatprep.subr.bf16.mxu0 0
      %2104 = vmatpush1.bf16.msra.mxu0 0
      %2105 = vmatprep.subr.bf16.mxu0 0
      %2106 = vmatpush1.bf16.msra.mxu0 0
      %2107 = vmatprep.subr.bf16.mxu0 0
      %2108 = vmatpush1.bf16.msra.mxu0 0
      %2109 = vmatprep.subr.bf16.mxu0 0
      %2110 = vmatpush1.bf16.msra.mxu0 0
      %2111 = vmatprep.subr.bf16.mxu0 0
      %2112 = vmatpush1.bf16.msra.mxu0 0
      %2113 = vmatprep.subr.bf16.mxu0 0
      %2114 = vmatpush1.bf16.msra.mxu0 0
      %2115 = vmatprep.subr.bf16.mxu0 0
      %2116 = vmatpush1.bf16.msra.mxu0 0
      %2117 = vmatprep.subr.bf16.mxu0 0
      %2118 = vmatpush1.bf16.msra.mxu0 0
      %2119 = vmatprep.subr.bf16.mxu0 0
      %2120 = vmatpush1.bf16.msra.mxu0 0
      %2121 = vmatprep.subr.bf16.mxu0 0
      %2122 = vmatpush1.bf16.msra.mxu0 0
      %2123 = vmatprep.subr.bf16.mxu0 0
      %2124 = vmatpush1.bf16.msra.mxu0 0
      %2125 = vmatprep.subr.bf16.mxu0 0
      %2126 = vmatpush1.bf16.msra.mxu0 0
      %2127 = vmatprep.subr.bf16.mxu0 0
      %2128 = vmatpush1.bf16.msra.mxu0 0
      %2129 = vmatprep.mubr.bf16.mxu0 0
      %2130 = vmatmul.mubr.bf16.gmra.mrb[0].mxu0 %v2095
      %v2131 = vpop.f32.mrb[0].mxu0
      %v2132 = vadd.f32 %v2080, %v2131
      %v2133 = vpop.f32.mrb[0].mxu0
      %v2134 = vpop.f32.mrb[0].mxu0
      %v2135 = vadd.f32 %v2080, %v2134
      %v2136 = vpop.f32.mrb[0].mxu0
      %2137 = vdwg.mxu0
      %v2138 = vadd.f32 %v1111, %v2132
      %v2139 = vadd.f32 %v1112, %v2135
      %v2140 = vld [vmem:[%s10] sm:$0x1]
      %v2141 = vld [vmem:[%s11] sm:$0x1]
      %v2142 = vsel %vm1115, %v2138, 0.0
      %2143 = vadd.xlane.f32.xlu0 %v2142
      %v2144 = vpop.xlane.xlu0 %2143
      %v2145 = vsel %vm1119, %v2139, 0.0
      %2146 = vadd.xlane.f32.xlu0 %v2145
      %v2147 = vpop.xlane.xlu0 %2146
      %v2148 = vmul.f32 %v2144, %v1123
      %v2149 = vmul.f32 %v2147, %v1123
      %v2150 = vsub.f32 %v2138, %v2148
      %v2151 = vsub.f32 %v2139, %v2149
      %v2152 = vmul.f32 %v2150, %v2150
      %v2153 = vmul.f32 %v2151, %v2151
      %v2154 = vsel %vm1115, %v2152, 0.0
      %2155 = vadd.xlane.f32.xlu0 %v2154
      %v2156 = vpop.xlane.xlu0 %2155
      %v2157 = vsel %vm1119, %v2153, 0.0
      %2158 = vadd.xlane.f32.xlu0 %v2157
      %v2159 = vpop.xlane.xlu0 %2158
      %v2160 = vmul.f32 %v2156, %v1123
      %v2161 = vmul.f32 %v2159, %v1123
      %v2162 = vadd.f32 %v2160, 1e-06
      %v2163 = vadd.f32 %v2161, 1e-06
      %v2164 = vrsqrt.pop %v2162
      %v2165 = vrsqrt.pop %v2163
      %v2166 = vmul.f32 %v2150, %v2164
      %v2167 = vmul.f32 %v2151, %v2165
      %v2169 = vlaneseq
      %v2170 = vshrl.u32 %v2169, 7
      %v2171 = vsub.s32 0, %v2170
      %v2172 = vrot.slane %v2140, %v2171
      %v2174 = vmul.f32 %v2166, %v2172
      %v2175 = vmul.f32 %v2167, %v2172
      %v2177 = vlaneseq
      %v2178 = vshrl.u32 %v2177, 7
      %v2179 = vsub.s32 0, %v2178
      %v2180 = vrot.slane %v2141, %v2179
      %v2182 = vadd.f32 %v2174, %v2180
      %v2183 = vadd.f32 %v2175, %v2180
      %v2184 = vpack.c.bf16 %v2183, %v2182
      %v2185 = vld [vmem:[%s12] sm:$0xf]
      %v2186 = vld [vmem:[%s12 + $0x4] sm:$0xf]
      %v2187 = vld [vmem:[%s12 + $0x8] sm:$0xf]
      %v2188 = vld [vmem:[%s12 + $0xc] sm:$0xf]
      %v2189 = vld [vmem:[%s13] sm:$0x1]
      %v2191 = vlaneseq
      %v2192 = vshrl.u32 %v2191, 7
      %v2193 = vsub.s32 0, %v2192
      %v2194 = vrot.slane %v2189, %v2193
      %v2200 = vunpack.c.l.b16 %v2185
      %v2201 = vunpack.c.l.b16 %v2186
      %v2202 = vunpack.c.l.b16 %v2187
      %v2203 = vunpack.c.l.b16 %v2188
      %v2204 = vpack.c.b16 %v2201, %v2200
      %v2205 = vpack.c.b16 %v2203, %v2202
      %v2209 = vsel %vm1115, %v2184, 0
      %2211 = vmatprep.subr.bf16.mxu0 0
      %2212 = vmatpush1.bf16.msra.mxu0 %v2204
      %2213 = vmatprep.subr.bf16.mxu0 0
      %2214 = vmatpush1.bf16.msra.mxu0 %v2205
      %2215 = vmatprep.subr.bf16.mxu0 0
      %2216 = vmatpush1.bf16.msra.mxu0 0
      %2217 = vmatprep.subr.bf16.mxu0 0
      %2218 = vmatpush1.bf16.msra.mxu0 0
      %2219 = vmatprep.subr.bf16.mxu0 0
      %2220 = vmatpush1.bf16.msra.mxu0 0
      %2221 = vmatprep.subr.bf16.mxu0 0
      %2222 = vmatpush1.bf16.msra.mxu0 0
      %2223 = vmatprep.subr.bf16.mxu0 0
      %2224 = vmatpush1.bf16.msra.mxu0 0
      %2225 = vmatprep.subr.bf16.mxu0 0
      %2226 = vmatpush1.bf16.msra.mxu0 0
      %2227 = vmatprep.subr.bf16.mxu0 0
      %2228 = vmatpush1.bf16.msra.mxu0 0
      %2229 = vmatprep.subr.bf16.mxu0 0
      %2230 = vmatpush1.bf16.msra.mxu0 0
      %2231 = vmatprep.subr.bf16.mxu0 0
      %2232 = vmatpush1.bf16.msra.mxu0 0
      %2233 = vmatprep.subr.bf16.mxu0 0
      %2234 = vmatpush1.bf16.msra.mxu0 0
      %2235 = vmatprep.subr.bf16.mxu0 0
      %2236 = vmatpush1.bf16.msra.mxu0 0
      %2237 = vmatprep.subr.bf16.mxu0 0
      %2238 = vmatpush1.bf16.msra.mxu0 0
      %2239 = vmatprep.subr.bf16.mxu0 0
      %2240 = vmatpush1.bf16.msra.mxu0 0
      %2241 = vmatprep.subr.bf16.mxu0 0
      %2242 = vmatpush1.bf16.msra.mxu0 0
      %2243 = vmatprep.mubr.bf16.mxu0 0
      %2244 = vmatmul.mubr.bf16.gmra.mrb[0].mxu0 %v2209
      %v2245 = vpop.f32.mrb[0].mxu0
      %v2246 = vadd.f32 %v2194, %v2245
      %v2247 = vpop.f32.mrb[0].mxu0
      %v2248 = vpop.f32.mrb[0].mxu0
      %v2249 = vadd.f32 %v2194, %v2248
      %v2250 = vpop.f32.mrb[0].mxu0
      %2251 = vdwg.mxu0
      %v2252 = vmul.f32 %v2246, 0.5
      %v2253 = vmul.f32 %v2249, 0.5
      %v2254 = vmul.f32 %v2246, 0.044715
      %v2255 = vmul.f32 %v2249, 0.044715
      %v2256 = vmul.f32 %v2254, %v2246
      %v2257 = vmul.f32 %v2255, %v2249
      %v2258 = vmul.f32 %v2256, %v2246
      %v2259 = vmul.f32 %v2257, %v2249
      %v2260 = vadd.f32 %v2246, %v2258
      %v2261 = vadd.f32 %v2249, %v2259
      %v2262 = vmul.f32 %v2260, 0.7978846
      %v2263 = vmul.f32 %v2261, 0.7978846
      %v2264 = vtanh.pop %v2262
      %v2265 = vtanh.pop %v2263
      %v2266 = vadd.f32 %v2264, 1.0
      %v2267 = vadd.f32 %v2265, 1.0
      %v2268 = vmul.f32 %v2252, %v2266
      %v2269 = vmul.f32 %v2253, %v2267
      %v2270 = vpack.c.bf16 %v2269, %v2268
      %v2271 = vld [vmem:[%s14] sm:$0xf]
      %v2272 = vld [vmem:[%s14 + $0x4] sm:$0xf]
      %v2273 = vld [vmem:[%s14 + $0x8] sm:$0xf]
      %v2274 = vld [vmem:[%s14 + $0xc] sm:$0xf]
      %v2275 = vld [vmem:[%s14 + $0x10] sm:$0xf]
      %v2276 = vld [vmem:[%s14 + $0x14] sm:$0xf]
      %v2277 = vld [vmem:[%s14 + $0x18] sm:$0xf]
      %v2278 = vld [vmem:[%s14 + $0x1c] sm:$0xf]
      %v2279 = vld [vmem:[%s14 + $0x20] sm:$0xf]
      %v2280 = vld [vmem:[%s14 + $0x24] sm:$0xf]
      %v2281 = vld [vmem:[%s14 + $0x28] sm:$0xf]
      %v2282 = vld [vmem:[%s14 + $0x2c] sm:$0xf]
      %v2283 = vld [vmem:[%s14 + $0x30] sm:$0xf]
      %v2284 = vld [vmem:[%s14 + $0x34] sm:$0xf]
      %v2285 = vld [vmem:[%s14 + $0x38] sm:$0xf]
      %v2286 = vld [vmem:[%s14 + $0x3c] sm:$0xf]
      %v2287 = vld [vmem:[%s15] sm:$0x1]
      %v2289 = vlaneseq
      %v2290 = vshrl.u32 %v2289, 7
      %v2291 = vsub.s32 0, %v2290
      %v2292 = vrot.slane %v2287, %v2291
      %v2310 = vunpack.c.l.b16 %v2271
      %v2311 = vunpack.c.l.b16 %v2272
      %v2312 = vunpack.c.l.b16 %v2273
      %v2313 = vunpack.c.l.b16 %v2274
      %v2314 = vunpack.c.l.b16 %v2275
      %v2315 = vunpack.c.l.b16 %v2276
      %v2316 = vunpack.c.l.b16 %v2277
      %v2317 = vunpack.c.l.b16 %v2278
      %v2318 = vunpack.c.l.b16 %v2279
      %v2319 = vunpack.c.l.b16 %v2280
      %v2320 = vunpack.c.l.b16 %v2281
      %v2321 = vunpack.c.l.b16 %v2282
      %v2322 = vunpack.c.l.b16 %v2283
      %v2323 = vunpack.c.l.b16 %v2284
      %v2324 = vunpack.c.l.b16 %v2285
      %v2325 = vunpack.c.l.b16 %v2286
      %v2326 = vpack.c.b16 %v2311, %v2310
      %v2327 = vpack.c.b16 %v2313, %v2312
      %v2328 = vpack.c.b16 %v2315, %v2314
      %v2329 = vpack.c.b16 %v2317, %v2316
      %v2330 = vpack.c.b16 %v2319, %v2318
      %v2331 = vpack.c.b16 %v2321, %v2320
      %v2332 = vpack.c.b16 %v2323, %v2322
      %v2333 = vpack.c.b16 %v2325, %v2324
      %2342 = vmatprep.subr.bf16.mxu0 0
      %2343 = vmatpush1.bf16.msra.mxu0 %v2326
      %2344 = vmatprep.subr.bf16.mxu0 0
      %2345 = vmatpush1.bf16.msra.mxu0 %v2327
      %2346 = vmatprep.subr.bf16.mxu0 0
      %2347 = vmatpush1.bf16.msra.mxu0 %v2328
      %2348 = vmatprep.subr.bf16.mxu0 0
      %2349 = vmatpush1.bf16.msra.mxu0 %v2329
      %2350 = vmatprep.subr.bf16.mxu0 0
      %2351 = vmatpush1.bf16.msra.mxu0 %v2330
      %2352 = vmatprep.subr.bf16.mxu0 0
      %2353 = vmatpush1.bf16.msra.mxu0 %v2331
      %2354 = vmatprep.subr.bf16.mxu0 0
      %2355 = vmatpush1.bf16.msra.mxu0 %v2332
      %2356 = vmatprep.subr.bf16.mxu0 0
      %2357 = vmatpush1.bf16.msra.mxu0 %v2333
      %2358 = vmatprep.subr.bf16.mxu0 0
      %2359 = vmatpush1.bf16.msra.mxu0 0
      %2360 = vmatprep.subr.bf16.mxu0 0
      %2361 = vmatpush1.bf16.msra.mxu0 0
      %2362 = vmatprep.subr.bf16.mxu0 0
      %2363 = vmatpush1.bf16.msra.mxu0 0
      %2364 = vmatprep.subr.bf16.mxu0 0
      %2365 = vmatpush1.bf16.msra.mxu0 0
      %2366 = vmatprep.subr.bf16.mxu0 0
      %2367 = vmatpush1.bf16.msra.mxu0 0
      %2368 = vmatprep.subr.bf16.mxu0 0
      %2369 = vmatpush1.bf16.msra.mxu0 0
      %2370 = vmatprep.subr.bf16.mxu0 0
      %2371 = vmatpush1.bf16.msra.mxu0 0
      %2372 = vmatprep.subr.bf16.mxu0 0
      %2373 = vmatpush1.bf16.msra.mxu0 0
      %2374 = vmatprep.mubr.bf16.mxu0 0
      %2375 = vmatmul.mubr.bf16.gmra.mrb[0].mxu0 %v2270
      %v2376 = vpop.f32.mrb[0].mxu0
      %v2377 = vadd.f32 %v2292, %v2376
      %v2378 = vpop.f32.mrb[0].mxu0
      %v2379 = vpop.f32.mrb[0].mxu0
      %v2380 = vadd.f32 %v2292, %v2379
      %v2381 = vpop.f32.mrb[0].mxu0
      %2382 = vdwg.mxu0
      %v2383 = vadd.f32 %v2138, %v2377
      %v2384 = vadd.f32 %v2139, %v2380
      %s2385 = scalar_lea.vmem %s4, 1
      %v2386 = vld [vmem:[%s2385] sm:$0x1]
      %s2387 = scalar_lea.vmem %s5, 1
      %v2388 = vld [vmem:[%s2387] sm:$0x1]
      %v2389 = vsel %vm1115, %v2383, 0.0
      %2390 = vadd.xlane.f32.xlu0 %v2389
      %v2391 = vpop.xlane.xlu0 %2390
      %v2392 = vsel %vm1119, %v2384, 0.0
      %2393 = vadd.xlane.f32.xlu0 %v2392
      %v2394 = vpop.xlane.xlu0 %2393
      %v2395 = vmul.f32 %v2391, %v1123
      %v2396 = vmul.f32 %v2394, %v1123
      %v2397 = vsub.f32 %v2383, %v2395
      %v2398 = vsub.f32 %v2384, %v2396
      %v2399 = vmul.f32 %v2397, %v2397
      %v2400 = vmul.f32 %v2398, %v2398
      %v2401 = vsel %vm1115, %v2399, 0.0
      %2402 = vadd.xlane.f32.xlu0 %v2401
      %v2403 = vpop.xlane.xlu0 %2402
      %v2404 = vsel %vm1119, %v2400, 0.0
      %2405 = vadd.xlane.f32.xlu0 %v2404
      %v2406 = vpop.xlane.xlu0 %2405
      %v2407 = vmul.f32 %v2403, %v1123
      %v2408 = vmul.f32 %v2406, %v1123
      %v2409 = vadd.f32 %v2407, 1e-06
      %v2410 = vadd.f32 %v2408, 1e-06
      %v2411 = vrsqrt.pop %v2409
      %v2412 = vrsqrt.pop %v2410
      %v2413 = vmul.f32 %v2397, %v2411
      %v2414 = vmul.f32 %v2398, %v2412
      %v2416 = vlaneseq
      %v2417 = vshrl.u32 %v2416, 7
      %v2418 = vsub.s32 0, %v2417
      %v2419 = vrot.slane %v2386, %v2418
      %v2421 = vmul.f32 %v2413, %v2419
      %v2422 = vmul.f32 %v2414, %v2419
      %v2424 = vlaneseq
      %v2425 = vshrl.u32 %v2424, 7
      %v2426 = vsub.s32 0, %v2425
      %v2427 = vrot.slane %v2388, %v2426
      %v2429 = vadd.f32 %v2421, %v2427
      %v2430 = vadd.f32 %v2422, %v2427
      %v2431 = vpack.c.bf16 %v2430, %v2429
      %s2432 = scalar_lea.vmem %s6, 16
      %v2433 = vld [vmem:[%s2432] sm:$0xf]
      %v2434 = vld [vmem:[%s2432 + $0x4] sm:$0xf]
      %v2435 = vld [vmem:[%s2432 + $0x8] sm:$0xf]
      %v2436 = vld [vmem:[%s2432 + $0xc] sm:$0xf]
      %s2437 = scalar_lea.vmem %s7, 1
      %v2438 = vld [vmem:[%s2437] sm:$0x1]
      %v2440 = vlaneseq
      %v2441 = vshrl.u32 %v2440, 7
      %v2442 = vsub.s32 0, %v2441
      %v2443 = vrot.slane %v2438, %v2442
      %v2449 = vunpack.c.l.b16 %v2433
      %v2450 = vunpack.c.l.b16 %v2434
      %v2451 = vunpack.c.l.b16 %v2435
      %v2452 = vunpack.c.l.b16 %v2436
      %v2453 = vpack.c.b16 %v2450, %v2449
      %v2454 = vpack.c.b16 %v2452, %v2451
      %v2458 = vsel %vm1115, %v2431, 0
      %2460 = vmatprep.subr.bf16.mxu0 0
      %2461 = vmatpush1.bf16.msra.mxu0 %v2453
      %2462 = vmatprep.subr.bf16.mxu0 0
      %2463 = vmatpush1.bf16.msra.mxu0 %v2454
      %2464 = vmatprep.subr.bf16.mxu0 0
      %2465 = vmatpush1.bf16.msra.mxu0 0
      %2466 = vmatprep.subr.bf16.mxu0 0
      %2467 = vmatpush1.bf16.msra.mxu0 0
      %2468 = vmatprep.subr.bf16.mxu0 0
      %2469 = vmatpush1.bf16.msra.mxu0 0
      %2470 = vmatprep.subr.bf16.mxu0 0
      %2471 = vmatpush1.bf16.msra.mxu0 0
      %2472 = vmatprep.subr.bf16.mxu0 0
      %2473 = vmatpush1.bf16.msra.mxu0 0
      %2474 = vmatprep.subr.bf16.mxu0 0
      %2475 = vmatpush1.bf16.msra.mxu0 0
      %2476 = vmatprep.subr.bf16.mxu0 0
      %2477 = vmatpush1.bf16.msra.mxu0 0
      %2478 = vmatprep.subr.bf16.mxu0 0
      %2479 = vmatpush1.bf16.msra.mxu0 0
      %2480 = vmatprep.subr.bf16.mxu0 0
      %2481 = vmatpush1.bf16.msra.mxu0 0
      %2482 = vmatprep.subr.bf16.mxu0 0
      %2483 = vmatpush1.bf16.msra.mxu0 0
      %2484 = vmatprep.subr.bf16.mxu0 0
      %2485 = vmatpush1.bf16.msra.mxu0 0
      %2486 = vmatprep.subr.bf16.mxu0 0
      %2487 = vmatpush1.bf16.msra.mxu0 0
      %2488 = vmatprep.subr.bf16.mxu0 0
      %2489 = vmatpush1.bf16.msra.mxu0 0
      %2490 = vmatprep.subr.bf16.mxu0 0
      %2491 = vmatpush1.bf16.msra.mxu0 0
      %2492 = vmatprep.mubr.bf16.mxu0 0
      %2493 = vmatmul.mubr.bf16.gmra.mrb[0].mxu0 %v2458
      %v2494 = vpop.f32.mrb[0].mxu0
      %v2495 = vadd.f32 %v2443, %v2494
      %v2496 = vpop.f32.mrb[0].mxu0
      %v2497 = vpop.f32.mrb[0].mxu0
      %v2498 = vadd.f32 %v2443, %v2497
      %v2499 = vpop.f32.mrb[0].mxu0
      %2500 = vdwg.mxu0
      %v2501 = vmul.f32 %v2495, 0.35355338
      %v2502 = vmul.f32 %v2498, 0.35355338
      %2505 = vrot.lane.b32.xlu0 %v2495, 96
      %v2506 = vpop.permute.xlu0 %2505
      %2507 = vrot.lane.b32.xlu0 %v2498, 96
      %v2508 = vpop.permute.xlu0 %2507
      %v2510 = vsel %vm1236, %v2501, 0
      %v2513 = vsel %vm1236, %v2502, 0
      %v2515 = vsel %vm1236, %v2506, 0
      %v2517 = vsel %vm1236, %v2508, 0
      %2519 = vmatprep.subr.mxu0 0.0
      %2520 = vmatpush1.xpose.msra.mxu0 %v2515
      %2521 = vmatprep.subr.mxu0 0.0
      %2522 = vmatpush1.xpose.msra.mxu0 %v2517
      %2523 = vmatprep.subr.mxu0 0.0
      %2524 = vmatpush1.xpose.msra.mxu0 0.0
      %2525 = vmatprep.subr.mxu0 0.0
      %2526 = vmatpush1.xpose.msra.mxu0 0.0
      %2527 = vmatprep.subr.mxu0 0.0
      %2528 = vmatpush1.xpose.msra.mxu0 0.0
      %2529 = vmatprep.subr.mxu0 0.0
      %2530 = vmatpush1.xpose.msra.mxu0 0.0
      %2531 = vmatprep.subr.mxu0 0.0
      %2532 = vmatpush1.xpose.msra.mxu0 0.0
      %2533 = vmatprep.subr.mxu0 0.0
      %2534 = vmatpush1.xpose.msra.mxu0 0.0
      %2535 = vmatprep.subr.mxu0 0.0
      %2536 = vmatpush1.xpose.msra.mxu0 0.0
      %2537 = vmatprep.subr.mxu0 0.0
      %2538 = vmatpush1.xpose.msra.mxu0 0.0
      %2539 = vmatprep.subr.mxu0 0.0
      %2540 = vmatpush1.xpose.msra.mxu0 0.0
      %2541 = vmatprep.subr.mxu0 0.0
      %2542 = vmatpush1.xpose.msra.mxu0 0.0
      %2543 = vmatprep.subr.mxu0 0.0
      %2544 = vmatpush1.xpose.msra.mxu0 0.0
      %2545 = vmatprep.subr.mxu0 0.0
      %2546 = vmatpush1.xpose.msra.mxu0 0.0
      %2547 = vmatprep.subr.mxu0 0.0
      %2548 = vmatpush1.xpose.msra.mxu0 0.0
      %2549 = vmatprep.subr.mxu0 0.0
      %2550 = vmatpush1.xpose.msra.mxu0 0.0
      %2551 = vmatprep.subr.mxu0 0.0
      %2552 = vmatpush1.xpose.msra.mxu0 0.0
      %2553 = vmatprep.subr.mxu0 0.0
      %2554 = vmatpush1.xpose.msra.mxu0 0.0
      %2555 = vmatprep.subr.mxu0 0.0
      %2556 = vmatpush1.xpose.msra.mxu0 0.0
      %2557 = vmatprep.subr.mxu0 0.0
      %2558 = vmatpush1.xpose.msra.mxu0 0.0
      %2559 = vmatprep.subr.mxu0 0.0
      %2560 = vmatpush1.xpose.msra.mxu0 0.0
      %2561 = vmatprep.subr.mxu0 0.0
      %2562 = vmatpush1.xpose.msra.mxu0 0.0
      %2563 = vmatprep.subr.mxu0 0.0
      %2564 = vmatpush1.xpose.msra.mxu0 0.0
      %2565 = vmatprep.subr.mxu0 0.0
      %2566 = vmatpush1.xpose.msra.mxu0 0.0
      %2567 = vmatprep.subr.mxu0 0.0
      %2568 = vmatpush1.xpose.msra.mxu0 0.0
      %2569 = vmatprep.subr.mxu0 0.0
      %2570 = vmatpush1.xpose.msra.mxu0 0.0
      %2571 = vmatprep.subr.mxu0 0.0
      %2572 = vmatpush1.xpose.msra.mxu0 0.0
      %2573 = vmatprep.subr.mxu0 0.0
      %2574 = vmatpush1.xpose.msra.mxu0 0.0
      %2575 = vmatprep.subr.mxu0 0.0
      %2576 = vmatpush1.xpose.msra.mxu0 0.0
      %2577 = vmatprep.subr.mxu0 0.0
      %2578 = vmatpush1.xpose.msra.mxu0 0.0
      %2579 = vmatprep.subr.mxu0 0.0
      %2580 = vmatpush1.xpose.msra.mxu0 0.0
      %2581 = vmatprep.subr.mxu0 0.0
      %2582 = vmatpush1.xpose.msra.mxu0 0.0
      %2583 = vmatprep.mubr.f32.mxu0 0.0
      %2584 = vmatmul.mubr.f32.gmra.mrb[0].mxu0 %v2510
      %v2585 = vpop.f32.mrb[0].mxu0
      %v2586 = vadd.f32 0.0, %v2585
      %v2587 = vpop.f32.mrb[0].mxu0
      %2588 = vmatprep.mubr.f32.mxu0 0.0
      %2589 = vmatmul.mubr.f32.gmra.mrb[0].mxu0 %v2513
      %v2590 = vpop.f32.mrb[0].mxu0
      %v2591 = vadd.f32 0.0, %v2590
      %v2592 = vpop.f32.mrb[0].mxu0
      %2593 = vdwg.mxu0
      %v2594 = vsel %vm1322, %v2586, -inf
      %2595 = vmax.xlane.f32.xlu0 %v2594
      %v2596 = vpop.xlane.xlu0 %2595
      %v2597 = vsel %vm1326, %v2591, -inf
      %2598 = vmax.xlane.f32.xlu0 %v2597
      %v2599 = vpop.xlane.xlu0 %2598
      %v2600 = vsub.f32 %v2586, %v2596
      %v2601 = vsub.f32 %v2591, %v2599
      %v2602 = vmul.f32 %v2600, 1.442695
      %v2603 = vpow.pop %v2602
      %v2604 = vmul.f32 %v2601, 1.442695
      %v2605 = vpow.pop %v2604
      %v2606 = vsel %vm1322, %v2603, 0.0
      %2607 = vadd.xlane.f32.xlu0 %v2606
      %v2608 = vpop.xlane.xlu0 %2607
      %v2609 = vsel %vm1326, %v2605, 0.0
      %2610 = vadd.xlane.f32.xlu0 %v2609
      %v2611 = vpop.xlane.xlu0 %2610
      %v2612 = vrcp.pop %v2608
      %v2613 = vmul.f32 %v2603, %v2612
      %v2614 = vrcp.pop %v2611
      %v2615 = vmul.f32 %v2605, %v2614
      %2616 = vrot.lane.b32.xlu0 %v2495, 64
      %v2617 = vpop.permute.xlu0 %2616
      %2618 = vrot.lane.b32.xlu0 %v2498, 64
      %v2619 = vpop.permute.xlu0 %2618
      %v2622 = vsel %vm1322, %v2613, 0
      %v2625 = vsel %vm1322, %v2615, 0
      %v2627 = vsel %vm1357, %v2619, 0
      %2629 = vmatprep.subr.mxu0 0.0
      %2630 = vmatpush1.msra.mxu0 %v2617
      %2631 = vmatprep.subr.mxu0 0.0
      %2632 = vmatpush1.msra.mxu0 %v2627
      %2633 = vmatprep.subr.mxu0 0.0
      %2634 = vmatpush1.msra.mxu0 0.0
      %2635 = vmatprep.subr.mxu0 0.0
      %2636 = vmatpush1.msra.mxu0 0.0
      %2637 = vmatprep.subr.mxu0 0.0
      %2638 = vmatpush1.msra.mxu0 0.0
      %2639 = vmatprep.subr.mxu0 0.0
      %2640 = vmatpush1.msra.mxu0 0.0
      %2641 = vmatprep.subr.mxu0 0.0
      %2642 = vmatpush1.msra.mxu0 0.0
      %2643 = vmatprep.subr.mxu0 0.0
      %2644 = vmatpush1.msra.mxu0 0.0
      %2645 = vmatprep.subr.mxu0 0.0
      %2646 = vmatpush1.msra.mxu0 0.0
      %2647 = vmatprep.subr.mxu0 0.0
      %2648 = vmatpush1.msra.mxu0 0.0
      %2649 = vmatprep.subr.mxu0 0.0
      %2650 = vmatpush1.msra.mxu0 0.0
      %2651 = vmatprep.subr.mxu0 0.0
      %2652 = vmatpush1.msra.mxu0 0.0
      %2653 = vmatprep.subr.mxu0 0.0
      %2654 = vmatpush1.msra.mxu0 0.0
      %2655 = vmatprep.subr.mxu0 0.0
      %2656 = vmatpush1.msra.mxu0 0.0
      %2657 = vmatprep.subr.mxu0 0.0
      %2658 = vmatpush1.msra.mxu0 0.0
      %2659 = vmatprep.subr.mxu0 0.0
      %2660 = vmatpush1.msra.mxu0 0.0
      %2661 = vmatprep.subr.mxu0 0.0
      %2662 = vmatpush1.msra.mxu0 0.0
      %2663 = vmatprep.subr.mxu0 0.0
      %2664 = vmatpush1.msra.mxu0 0.0
      %2665 = vmatprep.subr.mxu0 0.0
      %2666 = vmatpush1.msra.mxu0 0.0
      %2667 = vmatprep.subr.mxu0 0.0
      %2668 = vmatpush1.msra.mxu0 0.0
      %2669 = vmatprep.subr.mxu0 0.0
      %2670 = vmatpush1.msra.mxu0 0.0
      %2671 = vmatprep.subr.mxu0 0.0
      %2672 = vmatpush1.msra.mxu0 0.0
      %2673 = vmatprep.subr.mxu0 0.0
      %2674 = vmatpush1.msra.mxu0 0.0
      %2675 = vmatprep.subr.mxu0 0.0
      %2676 = vmatpush1.msra.mxu0 0.0
      %2677 = vmatprep.subr.mxu0 0.0
      %2678 = vmatpush1.msra.mxu0 0.0
      %2679 = vmatprep.subr.mxu0 0.0
      %2680 = vmatpush1.msra.mxu0 0.0
      %2681 = vmatprep.subr.mxu0 0.0
      %2682 = vmatpush1.msra.mxu0 0.0
      %2683 = vmatprep.subr.mxu0 0.0
      %2684 = vmatpush1.msra.mxu0 0.0
      %2685 = vmatprep.subr.mxu0 0.0
      %2686 = vmatpush1.msra.mxu0 0.0
      %2687 = vmatprep.subr.mxu0 0.0
      %2688 = vmatpush1.msra.mxu0 0.0
      %2689 = vmatprep.subr.mxu0 0.0
      %2690 = vmatpush1.msra.mxu0 0.0
      %2691 = vmatprep.subr.mxu0 0.0
      %2692 = vmatpush1.msra.mxu0 0.0
      %2693 = vmatprep.mubr.f32.mxu0 0.0
      %2694 = vmatmul.mubr.f32.gmra.mrb[0].mxu0 %v2622
      %v2695 = vpop.f32.mrb[0].mxu0
      %v2696 = vadd.f32 0.0, %v2695
      %v2697 = vpop.f32.mrb[0].mxu0
      %2698 = vmatprep.mubr.f32.mxu0 0.0
      %2699 = vmatmul.mubr.f32.gmra.mrb[0].mxu0 %v2625
      %v2700 = vpop.f32.mrb[0].mxu0
      %v2701 = vadd.f32 0.0, %v2700
      %v2702 = vpop.f32.mrb[0].mxu0
      %2703 = vdwg.mxu0
      %2704 = vrot.lane.b32.xlu0 %v2501, 120
      %v2705 = vpop.permute.xlu0 %2704
      %2706 = vrot.lane.b32.xlu0 %v2502, 120
      %v2707 = vpop.permute.xlu0 %2706
      %2708 = vrot.lane.b32.xlu0 %v2495, 88
      %v2709 = vpop.permute.xlu0 %2708
      %2710 = vrot.lane.b32.xlu0 %v2498, 88
      %v2711 = vpop.permute.xlu0 %2710
      %v2712 = vsel %vm1236, %v2705, 0
      %v2714 = vsel %vm1236, %v2707, 0
      %v2716 = vsel %vm1236, %v2709, 0
      %v2718 = vsel %vm1236, %v2711, 0
      %2720 = vmatprep.subr.mxu0 0.0
      %2721 = vmatpush1.xpose.msra.mxu0 %v2716
      %2722 = vmatprep.subr.mxu0 0.0
      %2723 = vmatpush1.xpose.msra.mxu0 %v2718
      %2724 = vmatprep.subr.mxu0 0.0
      %2725 = vmatpush1.xpose.msra.mxu0 0.0
      %2726 = vmatprep.subr.mxu0 0.0
      %2727 = vmatpush1.xpose.msra.mxu0 0.0
      %2728 = vmatprep.subr.mxu0 0.0
      %2729 = vmatpush1.xpose.msra.mxu0 0.0
      %2730 = vmatprep.subr.mxu0 0.0
      %2731 = vmatpush1.xpose.msra.mxu0 0.0
      %2732 = vmatprep.subr.mxu0 0.0
      %2733 = vmatpush1.xpose.msra.mxu0 0.0
      %2734 = vmatprep.subr.mxu0 0.0
      %2735 = vmatpush1.xpose.msra.mxu0 0.0
      %2736 = vmatprep.subr.mxu0 0.0
      %2737 = vmatpush1.xpose.msra.mxu0 0.0
      %2738 = vmatprep.subr.mxu0 0.0
      %2739 = vmatpush1.xpose.msra.mxu0 0.0
      %2740 = vmatprep.subr.mxu0 0.0
      %2741 = vmatpush1.xpose.msra.mxu0 0.0
      %2742 = vmatprep.subr.mxu0 0.0
      %2743 = vmatpush1.xpose.msra.mxu0 0.0
      %2744 = vmatprep.subr.mxu0 0.0
      %2745 = vmatpush1.xpose.msra.mxu0 0.0
      %2746 = vmatprep.subr.mxu0 0.0
      %2747 = vmatpush1.xpose.msra.mxu0 0.0
      %2748 = vmatprep.subr.mxu0 0.0
      %2749 = vmatpush1.xpose.msra.mxu0 0.0
      %2750 = vmatprep.subr.mxu0 0.0
      %2751 = vmatpush1.xpose.msra.mxu0 0.0
      %2752 = vmatprep.subr.mxu0 0.0
      %2753 = vmatpush1.xpose.msra.mxu0 0.0
      %2754 = vmatprep.subr.mxu0 0.0
      %2755 = vmatpush1.xpose.msra.mxu0 0.0
      %2756 = vmatprep.subr.mxu0 0.0
      %2757 = vmatpush1.xpose.msra.mxu0 0.0
      %2758 = vmatprep.subr.mxu0 0.0
      %2759 = vmatpush1.xpose.msra.mxu0 0.0
      %2760 = vmatprep.subr.mxu0 0.0
      %2761 = vmatpush1.xpose.msra.mxu0 0.0
      %2762 = vmatprep.subr.mxu0 0.0
      %2763 = vmatpush1.xpose.msra.mxu0 0.0
      %2764 = vmatprep.subr.mxu0 0.0
      %2765 = vmatpush1.xpose.msra.mxu0 0.0
      %2766 = vmatprep.subr.mxu0 0.0
      %2767 = vmatpush1.xpose.msra.mxu0 0.0
      %2768 = vmatprep.subr.mxu0 0.0
      %2769 = vmatpush1.xpose.msra.mxu0 0.0
      %2770 = vmatprep.subr.mxu0 0.0
      %2771 = vmatpush1.xpose.msra.mxu0 0.0
      %2772 = vmatprep.subr.mxu0 0.0
      %2773 = vmatpush1.xpose.msra.mxu0 0.0
      %2774 = vmatprep.subr.mxu0 0.0
      %2775 = vmatpush1.xpose.msra.mxu0 0.0
      %2776 = vmatprep.subr.mxu0 0.0
      %2777 = vmatpush1.xpose.msra.mxu0 0.0
      %2778 = vmatprep.subr.mxu0 0.0
      %2779 = vmatpush1.xpose.msra.mxu0 0.0
      %2780 = vmatprep.subr.mxu0 0.0
      %2781 = vmatpush1.xpose.msra.mxu0 0.0
      %2782 = vmatprep.subr.mxu0 0.0
      %2783 = vmatpush1.xpose.msra.mxu0 0.0
      %2784 = vmatprep.mubr.f32.mxu0 0.0
      %2785 = vmatmul.mubr.f32.gmra.mrb[0].mxu0 %v2712
      %v2786 = vpop.f32.mrb[0].mxu0
      %v2787 = vadd.f32 0.0, %v2786
      %v2788 = vpop.f32.mrb[0].mxu0
      %2789 = vmatprep.mubr.f32.mxu0 0.0
      %2790 = vmatmul.mubr.f32.gmra.mrb[0].mxu0 %v2714
      %v2791 = vpop.f32.mrb[0].mxu0
      %v2792 = vadd.f32 0.0, %v2791
      %v2793 = vpop.f32.mrb[0].mxu0
      %2794 = vdwg.mxu0
      %v2795 = vsel %vm1322, %v2787, -inf
      %2796 = vmax.xlane.f32.xlu0 %v2795
      %v2797 = vpop.xlane.xlu0 %2796
      %v2798 = vsel %vm1326, %v2792, -inf
      %2799 = vmax.xlane.f32.xlu0 %v2798
      %v2800 = vpop.xlane.xlu0 %2799
      %v2801 = vsub.f32 %v2787, %v2797
      %v2802 = vsub.f32 %v2792, %v2800
      %v2803 = vmul.f32 %v2801, 1.442695
      %v2804 = vpow.pop %v2803
      %v2805 = vmul.f32 %v2802, 1.442695
      %v2806 = vpow.pop %v2805
      %v2807 = vsel %vm1322, %v2804, 0.0
      %2808 = vadd.xlane.f32.xlu0 %v2807
      %v2809 = vpop.xlane.xlu0 %2808
      %v2810 = vsel %vm1326, %v2806, 0.0
      %2811 = vadd.xlane.f32.xlu0 %v2810
      %v2812 = vpop.xlane.xlu0 %2811
      %v2813 = vrcp.pop %v2809
      %v2814 = vmul.f32 %v2804, %v2813
      %v2815 = vrcp.pop %v2812
      %v2816 = vmul.f32 %v2806, %v2815
      %2817 = vrot.lane.b32.xlu0 %v2495, 56
      %v2818 = vpop.permute.xlu0 %2817
      %2819 = vrot.lane.b32.xlu0 %v2498, 56
      %v2820 = vpop.permute.xlu0 %2819
      %v2823 = vsel %vm1322, %v2814, 0
      %v2826 = vsel %vm1322, %v2816, 0
      %v2828 = vsel %vm1357, %v2820, 0
      %2830 = vmatprep.subr.mxu0 0.0
      %2831 = vmatpush1.msra.mxu0 %v2818
      %2832 = vmatprep.subr.mxu0 0.0
      %2833 = vmatpush1.msra.mxu0 %v2828
      %2834 = vmatprep.subr.mxu0 0.0
      %2835 = vmatpush1.msra.mxu0 0.0
      %2836 = vmatprep.subr.mxu0 0.0
      %2837 = vmatpush1.msra.mxu0 0.0
      %2838 = vmatprep.subr.mxu0 0.0
      %2839 = vmatpush1.msra.mxu0 0.0
      %2840 = vmatprep.subr.mxu0 0.0
      %2841 = vmatpush1.msra.mxu0 0.0
      %2842 = vmatprep.subr.mxu0 0.0
      %2843 = vmatpush1.msra.mxu0 0.0
      %2844 = vmatprep.subr.mxu0 0.0
      %2845 = vmatpush1.msra.mxu0 0.0
      %2846 = vmatprep.subr.mxu0 0.0
      %2847 = vmatpush1.msra.mxu0 0.0
      %2848 = vmatprep.subr.mxu0 0.0
      %2849 = vmatpush1.msra.mxu0 0.0
      %2850 = vmatprep.subr.mxu0 0.0
      %2851 = vmatpush1.msra.mxu0 0.0
      %2852 = vmatprep.subr.mxu0 0.0
      %2853 = vmatpush1.msra.mxu0 0.0
      %2854 = vmatprep.subr.mxu0 0.0
      %2855 = vmatpush1.msra.mxu0 0.0
      %2856 = vmatprep.subr.mxu0 0.0
      %2857 = vmatpush1.msra.mxu0 0.0
      %2858 = vmatprep.subr.mxu0 0.0
      %2859 = vmatpush1.msra.mxu0 0.0
      %2860 = vmatprep.subr.mxu0 0.0
      %2861 = vmatpush1.msra.mxu0 0.0
      %2862 = vmatprep.subr.mxu0 0.0
      %2863 = vmatpush1.msra.mxu0 0.0
      %2864 = vmatprep.subr.mxu0 0.0
      %2865 = vmatpush1.msra.mxu0 0.0
      %2866 = vmatprep.subr.mxu0 0.0
      %2867 = vmatpush1.msra.mxu0 0.0
      %2868 = vmatprep.subr.mxu0 0.0
      %2869 = vmatpush1.msra.mxu0 0.0
      %2870 = vmatprep.subr.mxu0 0.0
      %2871 = vmatpush1.msra.mxu0 0.0
      %2872 = vmatprep.subr.mxu0 0.0
      %2873 = vmatpush1.msra.mxu0 0.0
      %2874 = vmatprep.subr.mxu0 0.0
      %2875 = vmatpush1.msra.mxu0 0.0
      %2876 = vmatprep.subr.mxu0 0.0
      %2877 = vmatpush1.msra.mxu0 0.0
      %2878 = vmatprep.subr.mxu0 0.0
      %2879 = vmatpush1.msra.mxu0 0.0
      %2880 = vmatprep.subr.mxu0 0.0
      %2881 = vmatpush1.msra.mxu0 0.0
      %2882 = vmatprep.subr.mxu0 0.0
      %2883 = vmatpush1.msra.mxu0 0.0
      %2884 = vmatprep.subr.mxu0 0.0
      %2885 = vmatpush1.msra.mxu0 0.0
      %2886 = vmatprep.subr.mxu0 0.0
      %2887 = vmatpush1.msra.mxu0 0.0
      %2888 = vmatprep.subr.mxu0 0.0
      %2889 = vmatpush1.msra.mxu0 0.0
      %2890 = vmatprep.subr.mxu0 0.0
      %2891 = vmatpush1.msra.mxu0 0.0
      %2892 = vmatprep.subr.mxu0 0.0
      %2893 = vmatpush1.msra.mxu0 0.0
      %2894 = vmatprep.mubr.f32.mxu0 0.0
      %2895 = vmatmul.mubr.f32.gmra.mrb[0].mxu0 %v2823
      %v2896 = vpop.f32.mrb[0].mxu0
      %v2897 = vadd.f32 0.0, %v2896
      %v2898 = vpop.f32.mrb[0].mxu0
      %2899 = vmatprep.mubr.f32.mxu0 0.0
      %2900 = vmatmul.mubr.f32.gmra.mrb[0].mxu0 %v2826
      %v2901 = vpop.f32.mrb[0].mxu0
      %v2902 = vadd.f32 0.0, %v2901
      %v2903 = vpop.f32.mrb[0].mxu0
      %2904 = vdwg.mxu0
      %2905 = vrot.lane.b32.xlu0 %v2501, 112
      %v2906 = vpop.permute.xlu0 %2905
      %2907 = vrot.lane.b32.xlu0 %v2502, 112
      %v2908 = vpop.permute.xlu0 %2907
      %2909 = vrot.lane.b32.xlu0 %v2495, 80
      %v2910 = vpop.permute.xlu0 %2909
      %2911 = vrot.lane.b32.xlu0 %v2498, 80
      %v2912 = vpop.permute.xlu0 %2911
      %v2913 = vsel %vm1236, %v2906, 0
      %v2915 = vsel %vm1236, %v2908, 0
      %v2917 = vsel %vm1236, %v2910, 0
      %v2919 = vsel %vm1236, %v2912, 0
      %2921 = vmatprep.subr.mxu0 0.0
      %2922 = vmatpush1.xpose.msra.mxu0 %v2917
      %2923 = vmatprep.subr.mxu0 0.0
      %2924 = vmatpush1.xpose.msra.mxu0 %v2919
      %2925 = vmatprep.subr.mxu0 0.0
      %2926 = vmatpush1.xpose.msra.mxu0 0.0
      %2927 = vmatprep.subr.mxu0 0.0
      %2928 = vmatpush1.xpose.msra.mxu0 0.0
      %2929 = vmatprep.subr.mxu0 0.0
      %2930 = vmatpush1.xpose.msra.mxu0 0.0
      %2931 = vmatprep.subr.mxu0 0.0
      %2932 = vmatpush1.xpose.msra.mxu0 0.0
      %2933 = vmatprep.subr.mxu0 0.0
      %2934 = vmatpush1.xpose.msra.mxu0 0.0
      %2935 = vmatprep.subr.mxu0 0.0
      %2936 = vmatpush1.xpose.msra.mxu0 0.0
      %2937 = vmatprep.subr.mxu0 0.0
      %2938 = vmatpush1.xpose.msra.mxu0 0.0
      %2939 = vmatprep.subr.mxu0 0.0
      %2940 = vmatpush1.xpose.msra.mxu0 0.0
      %2941 = vmatprep.subr.mxu0 0.0
      %2942 = vmatpush1.xpose.msra.mxu0 0.0
      %2943 = vmatprep.subr.mxu0 0.0
      %2944 = vmatpush1.xpose.msra.mxu0 0.0
      %2945 = vmatprep.subr.mxu0 0.0
      %2946 = vmatpush1.xpose.msra.mxu0 0.0
      %2947 = vmatprep.subr.mxu0 0.0
      %2948 = vmatpush1.xpose.msra.mxu0 0.0
      %2949 = vmatprep.subr.mxu0 0.0
      %2950 = vmatpush1.xpose.msra.mxu0 0.0
      %2951 = vmatprep.subr.mxu0 0.0
      %2952 = vmatpush1.xpose.msra.mxu0 0.0
      %2953 = vmatprep.subr.mxu0 0.0
      %2954 = vmatpush1.xpose.msra.mxu0 0.0
      %2955 = vmatprep.subr.mxu0 0.0
      %2956 = vmatpush1.xpose.msra.mxu0 0.0
      %2957 = vmatprep.subr.mxu0 0.0
      %2958 = vmatpush1.xpose.msra.mxu0 0.0
      %2959 = vmatprep.subr.mxu0 0.0
      %2960 = vmatpush1.xpose.msra.mxu0 0.0
      %2961 = vmatprep.subr.mxu0 0.0
      %2962 = vmatpush1.xpose.msra.mxu0 0.0
      %2963 = vmatprep.subr.mxu0 0.0
      %2964 = vmatpush1.xpose.msra.mxu0 0.0
      %2965 = vmatprep.subr.mxu0 0.0
      %2966 = vmatpush1.xpose.msra.mxu0 0.0
      %2967 = vmatprep.subr.mxu0 0.0
      %2968 = vmatpush1.xpose.msra.mxu0 0.0
      %2969 = vmatprep.subr.mxu0 0.0
      %2970 = vmatpush1.xpose.msra.mxu0 0.0
      %2971 = vmatprep.subr.mxu0 0.0
      %2972 = vmatpush1.xpose.msra.mxu0 0.0
      %2973 = vmatprep.subr.mxu0 0.0
      %2974 = vmatpush1.xpose.msra.mxu0 0.0
      %2975 = vmatprep.subr.mxu0 0.0
      %2976 = vmatpush1.xpose.msra.mxu0 0.0
      %2977 = vmatprep.subr.mxu0 0.0
      %2978 = vmatpush1.xpose.msra.mxu0 0.0
      %2979 = vmatprep.subr.mxu0 0.0
      %2980 = vmatpush1.xpose.msra.mxu0 0.0
      %2981 = vmatprep.subr.mxu0 0.0
      %2982 = vmatpush1.xpose.msra.mxu0 0.0
      %2983 = vmatprep.subr.mxu0 0.0
      %2984 = vmatpush1.xpose.msra.mxu0 0.0
      %2985 = vmatprep.mubr.f32.mxu0 0.0
      %2986 = vmatmul.mubr.f32.gmra.mrb[0].mxu0 %v2913
      %v2987 = vpop.f32.mrb[0].mxu0
      %v2988 = vadd.f32 0.0, %v2987
      %v2989 = vpop.f32.mrb[0].mxu0
      %2990 = vmatprep.mubr.f32.mxu0 0.0
      %2991 = vmatmul.mubr.f32.gmra.mrb[0].mxu0 %v2915
      %v2992 = vpop.f32.mrb[0].mxu0
      %v2993 = vadd.f32 0.0, %v2992
      %v2994 = vpop.f32.mrb[0].mxu0
      %2995 = vdwg.mxu0
      %v2996 = vsel %vm1322, %v2988, -inf
      %2997 = vmax.xlane.f32.xlu0 %v2996
      %v2998 = vpop.xlane.xlu0 %2997
      %v2999 = vsel %vm1326, %v2993, -inf
      %3000 = vmax.xlane.f32.xlu0 %v2999
      %v3001 = vpop.xlane.xlu0 %3000
      %v3002 = vsub.f32 %v2988, %v2998
      %v3003 = vsub.f32 %v2993, %v3001
      %v3004 = vmul.f32 %v3002, 1.442695
      %v3005 = vpow.pop %v3004
      %v3006 = vmul.f32 %v3003, 1.442695
      %v3007 = vpow.pop %v3006
      %v3008 = vsel %vm1322, %v3005, 0.0
      %3009 = vadd.xlane.f32.xlu0 %v3008
      %v3010 = vpop.xlane.xlu0 %3009
      %v3011 = vsel %vm1326, %v3007, 0.0
      %3012 = vadd.xlane.f32.xlu0 %v3011
      %v3013 = vpop.xlane.xlu0 %3012
      %v3014 = vrcp.pop %v3010
      %v3015 = vmul.f32 %v3005, %v3014
      %v3016 = vrcp.pop %v3013
      %v3017 = vmul.f32 %v3007, %v3016
      %3018 = vrot.lane.b32.xlu0 %v2495, 48
      %v3019 = vpop.permute.xlu0 %3018
      %3020 = vrot.lane.b32.xlu0 %v2498, 48
      %v3021 = vpop.permute.xlu0 %3020
      %v3024 = vsel %vm1322, %v3015, 0
      %v3027 = vsel %vm1322, %v3017, 0
      %v3029 = vsel %vm1357, %v3021, 0
      %3031 = vmatprep.subr.mxu0 0.0
      %3032 = vmatpush1.msra.mxu0 %v3019
      %3033 = vmatprep.subr.mxu0 0.0
      %3034 = vmatpush1.msra.mxu0 %v3029
      %3035 = vmatprep.subr.mxu0 0.0
      %3036 = vmatpush1.msra.mxu0 0.0
      %3037 = vmatprep.subr.mxu0 0.0
      %3038 = vmatpush1.msra.mxu0 0.0
      %3039 = vmatprep.subr.mxu0 0.0
      %3040 = vmatpush1.msra.mxu0 0.0
      %3041 = vmatprep.subr.mxu0 0.0
      %3042 = vmatpush1.msra.mxu0 0.0
      %3043 = vmatprep.subr.mxu0 0.0
      %3044 = vmatpush1.msra.mxu0 0.0
      %3045 = vmatprep.subr.mxu0 0.0
      %3046 = vmatpush1.msra.mxu0 0.0
      %3047 = vmatprep.subr.mxu0 0.0
      %3048 = vmatpush1.msra.mxu0 0.0
      %3049 = vmatprep.subr.mxu0 0.0
      %3050 = vmatpush1.msra.mxu0 0.0
      %3051 = vmatprep.subr.mxu0 0.0
      %3052 = vmatpush1.msra.mxu0 0.0
      %3053 = vmatprep.subr.mxu0 0.0
      %3054 = vmatpush1.msra.mxu0 0.0
      %3055 = vmatprep.subr.mxu0 0.0
      %3056 = vmatpush1.msra.mxu0 0.0
      %3057 = vmatprep.subr.mxu0 0.0
      %3058 = vmatpush1.msra.mxu0 0.0
      %3059 = vmatprep.subr.mxu0 0.0
      %3060 = vmatpush1.msra.mxu0 0.0
      %3061 = vmatprep.subr.mxu0 0.0
      %3062 = vmatpush1.msra.mxu0 0.0
      %3063 = vmatprep.subr.mxu0 0.0
      %3064 = vmatpush1.msra.mxu0 0.0
      %3065 = vmatprep.subr.mxu0 0.0
      %3066 = vmatpush1.msra.mxu0 0.0
      %3067 = vmatprep.subr.mxu0 0.0
      %3068 = vmatpush1.msra.mxu0 0.0
      %3069 = vmatprep.subr.mxu0 0.0
      %3070 = vmatpush1.msra.mxu0 0.0
      %3071 = vmatprep.subr.mxu0 0.0
      %3072 = vmatpush1.msra.mxu0 0.0
      %3073 = vmatprep.subr.mxu0 0.0
      %3074 = vmatpush1.msra.mxu0 0.0
      %3075 = vmatprep.subr.mxu0 0.0
      %3076 = vmatpush1.msra.mxu0 0.0
      %3077 = vmatprep.subr.mxu0 0.0
      %3078 = vmatpush1.msra.mxu0 0.0
      %3079 = vmatprep.subr.mxu0 0.0
      %3080 = vmatpush1.msra.mxu0 0.0
      %3081 = vmatprep.subr.mxu0 0.0
      %3082 = vmatpush1.msra.mxu0 0.0
      %3083 = vmatprep.subr.mxu0 0.0
      %3084 = vmatpush1.msra.mxu0 0.0
      %3085 = vmatprep.subr.mxu0 0.0
      %3086 = vmatpush1.msra.mxu0 0.0
      %3087 = vmatprep.subr.mxu0 0.0
      %3088 = vmatpush1.msra.mxu0 0.0
      %3089 = vmatprep.subr.mxu0 0.0
      %3090 = vmatpush1.msra.mxu0 0.0
      %3091 = vmatprep.subr.mxu0 0.0
      %3092 = vmatpush1.msra.mxu0 0.0
      %3093 = vmatprep.subr.mxu0 0.0
      %3094 = vmatpush1.msra.mxu0 0.0
      %3095 = vmatprep.mubr.f32.mxu0 0.0
      %3096 = vmatmul.mubr.f32.gmra.mrb[0].mxu0 %v3024
      %v3097 = vpop.f32.mrb[0].mxu0
      %v3098 = vadd.f32 0.0, %v3097
      %v3099 = vpop.f32.mrb[0].mxu0
      %3100 = vmatprep.mubr.f32.mxu0 0.0
      %3101 = vmatmul.mubr.f32.gmra.mrb[0].mxu0 %v3027
      %v3102 = vpop.f32.mrb[0].mxu0
      %v3103 = vadd.f32 0.0, %v3102
      %v3104 = vpop.f32.mrb[0].mxu0
      %3105 = vdwg.mxu0
      %3106 = vrot.lane.b32.xlu0 %v2501, 104
      %v3107 = vpop.permute.xlu0 %3106
      %3108 = vrot.lane.b32.xlu0 %v2502, 104
      %v3109 = vpop.permute.xlu0 %3108
      %3110 = vrot.lane.b32.xlu0 %v2495, 72
      %v3111 = vpop.permute.xlu0 %3110
      %3112 = vrot.lane.b32.xlu0 %v2498, 72
      %v3113 = vpop.permute.xlu0 %3112
      %v3114 = vsel %vm1236, %v3107, 0
      %v3116 = vsel %vm1236, %v3109, 0
      %v3118 = vsel %vm1236, %v3111, 0
      %v3120 = vsel %vm1236, %v3113, 0
      %3122 = vmatprep.subr.mxu0 0.0
      %3123 = vmatpush1.xpose.msra.mxu0 %v3118
      %3124 = vmatprep.subr.mxu0 0.0
      %3125 = vmatpush1.xpose.msra.mxu0 %v3120
      %3126 = vmatprep.subr.mxu0 0.0
      %3127 = vmatpush1.xpose.msra.mxu0 0.0
      %3128 = vmatprep.subr.mxu0 0.0
      %3129 = vmatpush1.xpose.msra.mxu0 0.0
      %3130 = vmatprep.subr.mxu0 0.0
      %3131 = vmatpush1.xpose.msra.mxu0 0.0
      %3132 = vmatprep.subr.mxu0 0.0
      %3133 = vmatpush1.xpose.msra.mxu0 0.0
      %3134 = vmatprep.subr.mxu0 0.0
      %3135 = vmatpush1.xpose.msra.mxu0 0.0
      %3136 = vmatprep.subr.mxu0 0.0
      %3137 = vmatpush1.xpose.msra.mxu0 0.0
      %3138 = vmatprep.subr.mxu0 0.0
      %3139 = vmatpush1.xpose.msra.mxu0 0.0
      %3140 = vmatprep.subr.mxu0 0.0
      %3141 = vmatpush1.xpose.msra.mxu0 0.0
      %3142 = vmatprep.subr.mxu0 0.0
      %3143 = vmatpush1.xpose.msra.mxu0 0.0
      %3144 = vmatprep.subr.mxu0 0.0
      %3145 = vmatpush1.xpose.msra.mxu0 0.0
      %3146 = vmatprep.subr.mxu0 0.0
      %3147 = vmatpush1.xpose.msra.mxu0 0.0
      %3148 = vmatprep.subr.mxu0 0.0
      %3149 = vmatpush1.xpose.msra.mxu0 0.0
      %3150 = vmatprep.subr.mxu0 0.0
      %3151 = vmatpush1.xpose.msra.mxu0 0.0
      %3152 = vmatprep.subr.mxu0 0.0
      %3153 = vmatpush1.xpose.msra.mxu0 0.0
      %3154 = vmatprep.subr.mxu0 0.0
      %3155 = vmatpush1.xpose.msra.mxu0 0.0
      %3156 = vmatprep.subr.mxu0 0.0
      %3157 = vmatpush1.xpose.msra.mxu0 0.0
      %3158 = vmatprep.subr.mxu0 0.0
      %3159 = vmatpush1.xpose.msra.mxu0 0.0
      %3160 = vmatprep.subr.mxu0 0.0
      %3161 = vmatpush1.xpose.msra.mxu0 0.0
      %3162 = vmatprep.subr.mxu0 0.0
      %3163 = vmatpush1.xpose.msra.mxu0 0.0
      %3164 = vmatprep.subr.mxu0 0.0
      %3165 = vmatpush1.xpose.msra.mxu0 0.0
      %3166 = vmatprep.subr.mxu0 0.0
      %3167 = vmatpush1.xpose.msra.mxu0 0.0
      %3168 = vmatprep.subr.mxu0 0.0
      %3169 = vmatpush1.xpose.msra.mxu0 0.0
      %3170 = vmatprep.subr.mxu0 0.0
      %3171 = vmatpush1.xpose.msra.mxu0 0.0
      %3172 = vmatprep.subr.mxu0 0.0
      %3173 = vmatpush1.xpose.msra.mxu0 0.0
      %3174 = vmatprep.subr.mxu0 0.0
      %3175 = vmatpush1.xpose.msra.mxu0 0.0
      %3176 = vmatprep.subr.mxu0 0.0
      %3177 = vmatpush1.xpose.msra.mxu0 0.0
      %3178 = vmatprep.subr.mxu0 0.0
      %3179 = vmatpush1.xpose.msra.mxu0 0.0
      %3180 = vmatprep.subr.mxu0 0.0
      %3181 = vmatpush1.xpose.msra.mxu0 0.0
      %3182 = vmatprep.subr.mxu0 0.0
      %3183 = vmatpush1.xpose.msra.mxu0 0.0
      %3184 = vmatprep.subr.mxu0 0.0
      %3185 = vmatpush1.xpose.msra.mxu0 0.0
      %3186 = vmatprep.mubr.f32.mxu0 0.0
      %3187 = vmatmul.mubr.f32.gmra.mrb[0].mxu0 %v3114
      %v3188 = vpop.f32.mrb[0].mxu0
      %v3189 = vadd.f32 0.0, %v3188
      %v3190 = vpop.f32.mrb[0].mxu0
      %3191 = vmatprep.mubr.f32.mxu0 0.0
      %3192 = vmatmul.mubr.f32.gmra.mrb[0].mxu0 %v3116
      %v3193 = vpop.f32.mrb[0].mxu0
      %v3194 = vadd.f32 0.0, %v3193
      %v3195 = vpop.f32.mrb[0].mxu0
      %3196 = vdwg.mxu0
      %v3197 = vsel %vm1322, %v3189, -inf
      %3198 = vmax.xlane.f32.xlu0 %v3197
      %v3199 = vpop.xlane.xlu0 %3198
      %v3200 = vsel %vm1326, %v3194, -inf
      %3201 = vmax.xlane.f32.xlu0 %v3200
      %v3202 = vpop.xlane.xlu0 %3201
      %v3203 = vsub.f32 %v3189, %v3199
      %v3204 = vsub.f32 %v3194, %v3202
      %v3205 = vmul.f32 %v3203, 1.442695
      %v3206 = vpow.pop %v3205
      %v3207 = vmul.f32 %v3204, 1.442695
      %v3208 = vpow.pop %v3207
      %v3209 = vsel %vm1322, %v3206, 0.0
      %3210 = vadd.xlane.f32.xlu0 %v3209
      %v3211 = vpop.xlane.xlu0 %3210
      %v3212 = vsel %vm1326, %v3208, 0.0
      %3213 = vadd.xlane.f32.xlu0 %v3212
      %v3214 = vpop.xlane.xlu0 %3213
      %v3215 = vrcp.pop %v3211
      %v3216 = vmul.f32 %v3206, %v3215
      %v3217 = vrcp.pop %v3214
      %v3218 = vmul.f32 %v3208, %v3217
      %3219 = vrot.lane.b32.xlu0 %v2495, 40
      %v3220 = vpop.permute.xlu0 %3219
      %3221 = vrot.lane.b32.xlu0 %v2498, 40
      %v3222 = vpop.permute.xlu0 %3221
      %v3225 = vsel %vm1322, %v3216, 0
      %v3228 = vsel %vm1322, %v3218, 0
      %v3230 = vsel %vm1357, %v3222, 0
      %3232 = vmatprep.subr.mxu0 0.0
      %3233 = vmatpush1.msra.mxu0 %v3220
      %3234 = vmatprep.subr.mxu0 0.0
      %3235 = vmatpush1.msra.mxu0 %v3230
      %3236 = vmatprep.subr.mxu0 0.0
      %3237 = vmatpush1.msra.mxu0 0.0
      %3238 = vmatprep.subr.mxu0 0.0
      %3239 = vmatpush1.msra.mxu0 0.0
      %3240 = vmatprep.subr.mxu0 0.0
      %3241 = vmatpush1.msra.mxu0 0.0
      %3242 = vmatprep.subr.mxu0 0.0
      %3243 = vmatpush1.msra.mxu0 0.0
      %3244 = vmatprep.subr.mxu0 0.0
      %3245 = vmatpush1.msra.mxu0 0.0
      %3246 = vmatprep.subr.mxu0 0.0
      %3247 = vmatpush1.msra.mxu0 0.0
      %3248 = vmatprep.subr.mxu0 0.0
      %3249 = vmatpush1.msra.mxu0 0.0
      %3250 = vmatprep.subr.mxu0 0.0
      %3251 = vmatpush1.msra.mxu0 0.0
      %3252 = vmatprep.subr.mxu0 0.0
      %3253 = vmatpush1.msra.mxu0 0.0
      %3254 = vmatprep.subr.mxu0 0.0
      %3255 = vmatpush1.msra.mxu0 0.0
      %3256 = vmatprep.subr.mxu0 0.0
      %3257 = vmatpush1.msra.mxu0 0.0
      %3258 = vmatprep.subr.mxu0 0.0
      %3259 = vmatpush1.msra.mxu0 0.0
      %3260 = vmatprep.subr.mxu0 0.0
      %3261 = vmatpush1.msra.mxu0 0.0
      %3262 = vmatprep.subr.mxu0 0.0
      %3263 = vmatpush1.msra.mxu0 0.0
      %3264 = vmatprep.subr.mxu0 0.0
      %3265 = vmatpush1.msra.mxu0 0.0
      %3266 = vmatprep.subr.mxu0 0.0
      %3267 = vmatpush1.msra.mxu0 0.0
      %3268 = vmatprep.subr.mxu0 0.0
      %3269 = vmatpush1.msra.mxu0 0.0
      %3270 = vmatprep.subr.mxu0 0.0
      %3271 = vmatpush1.msra.mxu0 0.0
      %3272 = vmatprep.subr.mxu0 0.0
      %3273 = vmatpush1.msra.mxu0 0.0
      %3274 = vmatprep.subr.mxu0 0.0
      %3275 = vmatpush1.msra.mxu0 0.0
      %3276 = vmatprep.subr.mxu0 0.0
      %3277 = vmatpush1.msra.mxu0 0.0
      %3278 = vmatprep.subr.mxu0 0.0
      %3279 = vmatpush1.msra.mxu0 0.0
      %3280 = vmatprep.subr.mxu0 0.0
      %3281 = vmatpush1.msra.mxu0 0.0
      %3282 = vmatprep.subr.mxu0 0.0
      %3283 = vmatpush1.msra.mxu0 0.0
      %3284 = vmatprep.subr.mxu0 0.0
      %3285 = vmatpush1.msra.mxu0 0.0
      %3286 = vmatprep.subr.mxu0 0.0
      %3287 = vmatpush1.msra.mxu0 0.0
      %3288 = vmatprep.subr.mxu0 0.0
      %3289 = vmatpush1.msra.mxu0 0.0
      %3290 = vmatprep.subr.mxu0 0.0
      %3291 = vmatpush1.msra.mxu0 0.0
      %3292 = vmatprep.subr.mxu0 0.0
      %3293 = vmatpush1.msra.mxu0 0.0
      %3294 = vmatprep.subr.mxu0 0.0
      %3295 = vmatpush1.msra.mxu0 0.0
      %3296 = vmatprep.mubr.f32.mxu0 0.0
      %3297 = vmatmul.mubr.f32.gmra.mrb[0].mxu0 %v3225
      %v3298 = vpop.f32.mrb[0].mxu0
      %v3299 = vadd.f32 0.0, %v3298
      %v3300 = vpop.f32.mrb[0].mxu0
      %3301 = vmatprep.mubr.f32.mxu0 0.0
      %3302 = vmatmul.mubr.f32.gmra.mrb[0].mxu0 %v3228
      %v3303 = vpop.f32.mrb[0].mxu0
      %v3304 = vadd.f32 0.0, %v3303
      %v3305 = vpop.f32.mrb[0].mxu0
      %3306 = vdwg.mxu0
      %3309 = vrot.lane.b32.xlu0 %v2897, 8
      %v3310 = vpop.permute.xlu0 %3309
      %3311 = vrot.lane.b32.xlu0 %v2902, 8
      %v3312 = vpop.permute.xlu0 %3311
      %3317 = vrot.lane.b32.xlu0 %v3098, 16
      %v3318 = vpop.permute.xlu0 %3317
      %3319 = vrot.lane.b32.xlu0 %v3103, 16
      %v3320 = vpop.permute.xlu0 %3319
      %3325 = vrot.lane.b32.xlu0 %v3299, 24
      %v3326 = vpop.permute.xlu0 %3325
      %3327 = vrot.lane.b32.xlu0 %v3304, 24
      %v3328 = vpop.permute.xlu0 %3327
      %v3331 = vsel %vm1236, %v2696, %v3310
      %v3332 = vsel %vm1236, %v2701, %v3312
      %v3333 = vsel %vm2064, %v3331, %v3318
      %v3334 = vsel %vm2064, %v3332, %v3320
      %v3335 = vsel %vm2067, %v3333, %v3326
      %v3336 = vsel %vm2067, %v3334, %v3328
      %v3337 = vpack.c.bf16 %v3336, %v3335
      %s3338 = scalar_lea.vmem %s8, 16
      %v3339 = vld [vmem:[%s3338] sm:$0xf]
      %v3340 = vld [vmem:[%s3338 + $0x4] sm:$0xf]
      %v3341 = vld [vmem:[%s3338 + $0x8] sm:$0xf]
      %v3342 = vld [vmem:[%s3338 + $0xc] sm:$0xf]
      %s3343 = scalar_lea.vmem %s9, 1
      %v3344 = vld [vmem:[%s3343] sm:$0x1]
      %v3346 = vlaneseq
      %v3347 = vshrl.u32 %v3346, 7
      %v3348 = vsub.s32 0, %v3347
      %v3349 = vrot.slane %v3344, %v3348
      %v3355 = vunpack.c.l.b16 %v3339
      %v3356 = vunpack.c.l.b16 %v3340
      %v3357 = vunpack.c.l.b16 %v3341
      %v3358 = vunpack.c.l.b16 %v3342
      %v3359 = vpack.c.b16 %v3356, %v3355
      %v3360 = vpack.c.b16 %v3358, %v3357
      %v3364 = vsel %vm1115, %v3337, 0
      %3366 = vmatprep.subr.bf16.mxu0 0
      %3367 = vmatpush1.bf16.msra.mxu0 %v3359
      %3368 = vmatprep.subr.bf16.mxu0 0
      %3369 = vmatpush1.bf16.msra.mxu0 %v3360
      %3370 = vmatprep.subr.bf16.mxu0 0
      %3371 = vmatpush1.bf16.msra.mxu0 0
      %3372 = vmatprep.subr.bf16.mxu0 0
      %3373 = vmatpush1.bf16.msra.mxu0 0
      %3374 = vmatprep.subr.bf16.mxu0 0
      %3375 = vmatpush1.bf16.msra.mxu0 0
      %3376 = vmatprep.subr.bf16.mxu0 0
      %3377 = vmatpush1.bf16.msra.mxu0 0
      %3378 = vmatprep.subr.bf16.mxu0 0
      %3379 = vmatpush1.bf16.msra.mxu0 0
      %3380 = vmatprep.subr.bf16.mxu0 0
      %3381 = vmatpush1.bf16.msra.mxu0 0
      %3382 = vmatprep.subr.bf16.mxu0 0
      %3383 = vmatpush1.bf16.msra.mxu0 0
      %3384 = vmatprep.subr.bf16.mxu0 0
      %3385 = vmatpush1.bf16.msra.mxu0 0
      %3386 = vmatprep.subr.bf16.mxu0 0
      %3387 = vmatpush1.bf16.msra.mxu0 0
      %3388 = vmatprep.subr.bf16.mxu0 0
      %3389 = vmatpush1.bf16.msra.mxu0 0
      %3390 = vmatprep.subr.bf16.mxu0 0
      %3391 = vmatpush1.bf16.msra.mxu0 0
      %3392 = vmatprep.subr.bf16.mxu0 0
      %3393 = vmatpush1.bf16.msra.mxu0 0
      %3394 = vmatprep.subr.bf16.mxu0 0
      %3395 = vmatpush1.bf16.msra.mxu0 0
      %3396 = vmatprep.subr.bf16.mxu0 0
      %3397 = vmatpush1.bf16.msra.mxu0 0
      %3398 = vmatprep.mubr.bf16.mxu0 0
      %3399 = vmatmul.mubr.bf16.gmra.mrb[0].mxu0 %v3364
      %v3400 = vpop.f32.mrb[0].mxu0
      %v3401 = vadd.f32 %v3349, %v3400
      %v3402 = vpop.f32.mrb[0].mxu0
      %v3403 = vpop.f32.mrb[0].mxu0
      %v3404 = vadd.f32 %v3349, %v3403
      %v3405 = vpop.f32.mrb[0].mxu0
      %3406 = vdwg.mxu0
      %v3407 = vadd.f32 %v2383, %v3401
      %v3408 = vadd.f32 %v2384, %v3404
      %s3409 = scalar_lea.vmem %s10, 1
      %v3410 = vld [vmem:[%s3409] sm:$0x1]
      %s3411 = scalar_lea.vmem %s11, 1
      %v3412 = vld [vmem:[%s3411] sm:$0x1]
      %v3413 = vsel %vm1115, %v3407, 0.0
      %3414 = vadd.xlane.f32.xlu0 %v3413
      %v3415 = vpop.xlane.xlu0 %3414
      %v3416 = vsel %vm1119, %v3408, 0.0
      %3417 = vadd.xlane.f32.xlu0 %v3416
      %v3418 = vpop.xlane.xlu0 %3417
      %v3419 = vmul.f32 %v3415, %v1123
      %v3420 = vmul.f32 %v3418, %v1123
      %v3421 = vsub.f32 %v3407, %v3419
      %v3422 = vsub.f32 %v3408, %v3420
      %v3423 = vmul.f32 %v3421, %v3421
      %v3424 = vmul.f32 %v3422, %v3422
      %v3425 = vsel %vm1115, %v3423, 0.0
      %3426 = vadd.xlane.f32.xlu0 %v3425
      %v3427 = vpop.xlane.xlu0 %3426
      %v3428 = vsel %vm1119, %v3424, 0.0
      %3429 = vadd.xlane.f32.xlu0 %v3428
      %v3430 = vpop.xlane.xlu0 %3429
      %v3431 = vmul.f32 %v3427, %v1123
      %v3432 = vmul.f32 %v3430, %v1123
      %v3433 = vadd.f32 %v3431, 1e-06
      %v3434 = vadd.f32 %v3432, 1e-06
      %v3435 = vrsqrt.pop %v3433
      %v3436 = vrsqrt.pop %v3434
      %v3437 = vmul.f32 %v3421, %v3435
      %v3438 = vmul.f32 %v3422, %v3436
      %v3440 = vlaneseq
      %v3441 = vshrl.u32 %v3440, 7
      %v3442 = vsub.s32 0, %v3441
      %v3443 = vrot.slane %v3410, %v3442
      %v3445 = vmul.f32 %v3437, %v3443
      %v3446 = vmul.f32 %v3438, %v3443
      %v3448 = vlaneseq
      %v3449 = vshrl.u32 %v3448, 7
      %v3450 = vsub.s32 0, %v3449
      %v3451 = vrot.slane %v3412, %v3450
      %v3453 = vadd.f32 %v3445, %v3451
      %v3454 = vadd.f32 %v3446, %v3451
      %v3455 = vpack.c.bf16 %v3454, %v3453
      %s3456 = scalar_lea.vmem %s12, 16
      %v3457 = vld [vmem:[%s3456] sm:$0xf]
      %v3458 = vld [vmem:[%s3456 + $0x4] sm:$0xf]
      %v3459 = vld [vmem:[%s3456 + $0x8] sm:$0xf]
      %v3460 = vld [vmem:[%s3456 + $0xc] sm:$0xf]
      %s3461 = scalar_lea.vmem %s13, 1
      %v3462 = vld [vmem:[%s3461] sm:$0x1]
      %v3464 = vlaneseq
      %v3465 = vshrl.u32 %v3464, 7
      %v3466 = vsub.s32 0, %v3465
      %v3467 = vrot.slane %v3462, %v3466
      %v3473 = vunpack.c.l.b16 %v3457
      %v3474 = vunpack.c.l.b16 %v3458
      %v3475 = vunpack.c.l.b16 %v3459
      %v3476 = vunpack.c.l.b16 %v3460
      %v3477 = vpack.c.b16 %v3474, %v3473
      %v3478 = vpack.c.b16 %v3476, %v3475
      %v3482 = vsel %vm1115, %v3455, 0
      %3484 = vmatprep.subr.bf16.mxu0 0
      %3485 = vmatpush1.bf16.msra.mxu0 %v3477
      %3486 = vmatprep.subr.bf16.mxu0 0
      %3487 = vmatpush1.bf16.msra.mxu0 %v3478
      %3488 = vmatprep.subr.bf16.mxu0 0
      %3489 = vmatpush1.bf16.msra.mxu0 0
      %3490 = vmatprep.subr.bf16.mxu0 0
      %3491 = vmatpush1.bf16.msra.mxu0 0
      %3492 = vmatprep.subr.bf16.mxu0 0
      %3493 = vmatpush1.bf16.msra.mxu0 0
      %3494 = vmatprep.subr.bf16.mxu0 0
      %3495 = vmatpush1.bf16.msra.mxu0 0
      %3496 = vmatprep.subr.bf16.mxu0 0
      %3497 = vmatpush1.bf16.msra.mxu0 0
      %3498 = vmatprep.subr.bf16.mxu0 0
      %3499 = vmatpush1.bf16.msra.mxu0 0
      %3500 = vmatprep.subr.bf16.mxu0 0
      %3501 = vmatpush1.bf16.msra.mxu0 0
      %3502 = vmatprep.subr.bf16.mxu0 0
      %3503 = vmatpush1.bf16.msra.mxu0 0
      %3504 = vmatprep.subr.bf16.mxu0 0
      %3505 = vmatpush1.bf16.msra.mxu0 0
      %3506 = vmatprep.subr.bf16.mxu0 0
      %3507 = vmatpush1.bf16.msra.mxu0 0
      %3508 = vmatprep.subr.bf16.mxu0 0
      %3509 = vmatpush1.bf16.msra.mxu0 0
      %3510 = vmatprep.subr.bf16.mxu0 0
      %3511 = vmatpush1.bf16.msra.mxu0 0
      %3512 = vmatprep.subr.bf16.mxu0 0
      %3513 = vmatpush1.bf16.msra.mxu0 0
      %3514 = vmatprep.subr.bf16.mxu0 0
      %3515 = vmatpush1.bf16.msra.mxu0 0
      %3516 = vmatprep.mubr.bf16.mxu0 0
      %3517 = vmatmul.mubr.bf16.gmra.mrb[0].mxu0 %v3482
      %v3518 = vpop.f32.mrb[0].mxu0
      %v3519 = vadd.f32 %v3467, %v3518
      %v3520 = vpop.f32.mrb[0].mxu0
      %v3521 = vpop.f32.mrb[0].mxu0
      %v3522 = vadd.f32 %v3467, %v3521
      %v3523 = vpop.f32.mrb[0].mxu0
      %3524 = vdwg.mxu0
      %v3525 = vmul.f32 %v3519, 0.5
      %v3526 = vmul.f32 %v3522, 0.5
      %v3527 = vmul.f32 %v3519, 0.044715
      %v3528 = vmul.f32 %v3522, 0.044715
      %v3529 = vmul.f32 %v3527, %v3519
      %v3530 = vmul.f32 %v3528, %v3522
      %v3531 = vmul.f32 %v3529, %v3519
      %v3532 = vmul.f32 %v3530, %v3522
      %v3533 = vadd.f32 %v3519, %v3531
      %v3534 = vadd.f32 %v3522, %v3532
      %v3535 = vmul.f32 %v3533, 0.7978846
      %v3536 = vmul.f32 %v3534, 0.7978846
      %v3537 = vtanh.pop %v3535
      %v3538 = vtanh.pop %v3536
      %v3539 = vadd.f32 %v3537, 1.0
      %v3540 = vadd.f32 %v3538, 1.0
      %v3541 = vmul.f32 %v3525, %v3539
      %v3542 = vmul.f32 %v3526, %v3540
      %v3543 = vpack.c.bf16 %v3542, %v3541
      %s3544 = scalar_lea.vmem %s14, 64
      %v3545 = vld [vmem:[%s3544] sm:$0xf]
      %v3546 = vld [vmem:[%s3544 + $0x4] sm:$0xf]
      %v3547 = vld [vmem:[%s3544 + $0x8] sm:$0xf]
      %v3548 = vld [vmem:[%s3544 + $0xc] sm:$0xf]
      %v3549 = vld [vmem:[%s3544 + $0x10] sm:$0xf]
      %v3550 = vld [vmem:[%s3544 + $0x14] sm:$0xf]
      %v3551 = vld [vmem:[%s3544 + $0x18] sm:$0xf]
      %v3552 = vld [vmem:[%s3544 + $0x1c] sm:$0xf]
      %v3553 = vld [vmem:[%s3544 + $0x20] sm:$0xf]
      %v3554 = vld [vmem:[%s3544 + $0x24] sm:$0xf]
      %v3555 = vld [vmem:[%s3544 + $0x28] sm:$0xf]
      %v3556 = vld [vmem:[%s3544 + $0x2c] sm:$0xf]
      %v3557 = vld [vmem:[%s3544 + $0x30] sm:$0xf]
      %v3558 = vld [vmem:[%s3544 + $0x34] sm:$0xf]
      %v3559 = vld [vmem:[%s3544 + $0x38] sm:$0xf]
      %v3560 = vld [vmem:[%s3544 + $0x3c] sm:$0xf]
      %s3561 = scalar_lea.vmem %s15, 1
      %v3562 = vld [vmem:[%s3561] sm:$0x1]
      %v3564 = vlaneseq
      %v3565 = vshrl.u32 %v3564, 7
      %v3566 = vsub.s32 0, %v3565
      %v3567 = vrot.slane %v3562, %v3566
      %v3585 = vunpack.c.l.b16 %v3545
      %v3586 = vunpack.c.l.b16 %v3546
      %v3587 = vunpack.c.l.b16 %v3547
      %v3588 = vunpack.c.l.b16 %v3548
      %v3589 = vunpack.c.l.b16 %v3549
      %v3590 = vunpack.c.l.b16 %v3550
      %v3591 = vunpack.c.l.b16 %v3551
      %v3592 = vunpack.c.l.b16 %v3552
      %v3593 = vunpack.c.l.b16 %v3553
      %v3594 = vunpack.c.l.b16 %v3554
      %v3595 = vunpack.c.l.b16 %v3555
      %v3596 = vunpack.c.l.b16 %v3556
      %v3597 = vunpack.c.l.b16 %v3557
      %v3598 = vunpack.c.l.b16 %v3558
      %v3599 = vunpack.c.l.b16 %v3559
      %v3600 = vunpack.c.l.b16 %v3560
      %v3601 = vpack.c.b16 %v3586, %v3585
      %v3602 = vpack.c.b16 %v3588, %v3587
      %v3603 = vpack.c.b16 %v3590, %v3589
      %v3604 = vpack.c.b16 %v3592, %v3591
      %v3605 = vpack.c.b16 %v3594, %v3593
      %v3606 = vpack.c.b16 %v3596, %v3595
      %v3607 = vpack.c.b16 %v3598, %v3597
      %v3608 = vpack.c.b16 %v3600, %v3599
      %3617 = vmatprep.subr.bf16.mxu0 0
      %3618 = vmatpush1.bf16.msra.mxu0 %v3601
      %3619 = vmatprep.subr.bf16.mxu0 0
      %3620 = vmatpush1.bf16.msra.mxu0 %v3602
      %3621 = vmatprep.subr.bf16.mxu0 0
      %3622 = vmatpush1.bf16.msra.mxu0 %v3603
      %3623 = vmatprep.subr.bf16.mxu0 0
      %3624 = vmatpush1.bf16.msra.mxu0 %v3604
      %3625 = vmatprep.subr.bf16.mxu0 0
      %3626 = vmatpush1.bf16.msra.mxu0 %v3605
      %3627 = vmatprep.subr.bf16.mxu0 0
      %3628 = vmatpush1.bf16.msra.mxu0 %v3606
      %3629 = vmatprep.subr.bf16.mxu0 0
      %3630 = vmatpush1.bf16.msra.mxu0 %v3607
      %3631 = vmatprep.subr.bf16.mxu0 0
      %3632 = vmatpush1.bf16.msra.mxu0 %v3608
      %3633 = vmatprep.subr.bf16.mxu0 0
      %3634 = vmatpush1.bf16.msra.mxu0 0
      %3635 = vmatprep.subr.bf16.mxu0 0
      %3636 = vmatpush1.bf16.msra.mxu0 0
      %3637 = vmatprep.subr.bf16.mxu0 0
      %3638 = vmatpush1.bf16.msra.mxu0 0
      %3639 = vmatprep.subr.bf16.mxu0 0
      %3640 = vmatpush1.bf16.msra.mxu0 0
      %3641 = vmatprep.subr.bf16.mxu0 0
      %3642 = vmatpush1.bf16.msra.mxu0 0
      %3643 = vmatprep.subr.bf16.mxu0 0
      %3644 = vmatpush1.bf16.msra.mxu0 0
      %3645 = vmatprep.subr.bf16.mxu0 0
      %3646 = vmatpush1.bf16.msra.mxu0 0
      %3647 = vmatprep.subr.bf16.mxu0 0
      %3648 = vmatpush1.bf16.msra.mxu0 0
      %3649 = vmatprep.mubr.bf16.mxu0 0
      %3650 = vmatmul.mubr.bf16.gmra.mrb[0].mxu0 %v3543
      %v3651 = vpop.f32.mrb[0].mxu0
      %v3652 = vadd.f32 %v3567, %v3651
      %v3653 = vpop.f32.mrb[0].mxu0
      %v3654 = vpop.f32.mrb[0].mxu0
      %v3655 = vadd.f32 %v3567, %v3654
      %v3656 = vpop.f32.mrb[0].mxu0
      %3657 = vdwg.mxu0
      %v3658 = vadd.f32 %v3407, %v3652
      %v3659 = vadd.f32 %v3408, %v3655
      %v3660 = vld [vmem:[%s16] sm:$0x1]
      %v3661 = vld [vmem:[%s17] sm:$0x1]
      %v3662 = vsel %vm1115, %v3658, 0.0
      %3663 = vadd.xlane.f32.xlu0 %v3662
      %v3664 = vpop.xlane.xlu0 %3663
      %v3665 = vsel %vm1119, %v3659, 0.0
      %3666 = vadd.xlane.f32.xlu0 %v3665
      %v3667 = vpop.xlane.xlu0 %3666
      %v3668 = vmul.f32 %v3664, %v1123
      %v3669 = vmul.f32 %v3667, %v1123
      %v3670 = vsub.f32 %v3658, %v3668
      %v3671 = vsub.f32 %v3659, %v3669
      %v3672 = vmul.f32 %v3670, %v3670
      %v3673 = vmul.f32 %v3671, %v3671
      %v3674 = vsel %vm1115, %v3672, 0.0
      %3675 = vadd.xlane.f32.xlu0 %v3674
      %v3676 = vpop.xlane.xlu0 %3675
      %v3677 = vsel %vm1119, %v3673, 0.0
      %3678 = vadd.xlane.f32.xlu0 %v3677
      %v3679 = vpop.xlane.xlu0 %3678
      %v3680 = vmul.f32 %v3676, %v1123
      %v3681 = vmul.f32 %v3679, %v1123
      %v3682 = vadd.f32 %v3680, 1e-06
      %v3683 = vadd.f32 %v3681, 1e-06
      %v3684 = vrsqrt.pop %v3682
      %v3685 = vrsqrt.pop %v3683
      %v3686 = vmul.f32 %v3670, %v3684
      %v3687 = vmul.f32 %v3671, %v3685
      %v3689 = vlaneseq
      %v3690 = vshrl.u32 %v3689, 7
      %v3691 = vsub.s32 0, %v3690
      %v3692 = vrot.slane %v3660, %v3691
      %v3694 = vmul.f32 %v3686, %v3692
      %v3695 = vmul.f32 %v3687, %v3692
      %v3697 = vlaneseq
      %v3698 = vshrl.u32 %v3697, 7
      %v3699 = vsub.s32 0, %v3698
      %v3700 = vrot.slane %v3661, %v3699
      %v3702 = vadd.f32 %v3694, %v3700
      %v3703 = vadd.f32 %v3695, %v3700
      %3704 = vst.msk [vmem:[%s575] sm:$0xff] %vm1115, %v3702
      %3705 = vst.msk [vmem:[%s575 + $0x8] sm:$0xf] %vm1119, %v3703
      %p3706 = scmp.lt.s32.totalorder %s29, 1
      %s3707 = scalar_select %p3706, %s29, 1
      %s3708 = smul.addr %s3707, 2
      %s3709 = smul.addr %s3708, 8
      %s3710 = scalar_lea.vmem %s18, %s3709
      // Predicated region
      $region93: #{model_forward.4} parent=91 // pred_check
        %p3711 = pneg %p430
      $region94: #{model_forward.4} parent=91 // pred_check_branch
        %3713 = sbr.rel (%p3711) target = $region96
      $region95: #{model_forward.4} parent=91 // pred_region
        _
      $region96: #{model_forward.4} parent=91 // pred_fallthru
        _
    $region92: #{model_forward.4} parent=5 // pred_fallthru
      _
    %p3714 = scmp.le.s32.totalorder 2, %s24
    // Predicated region
    $region97: #{model_forward.4} parent=5 // pred_check
      %p3715 = pneg %p3714
    $region98: #{model_forward.4} parent=5 // pred_check_branch
      %3717 = sbr.rel (%p3715) target = $region100
    $region99: #{model_forward.4} parent=5 // pred_region
      %s3718 = ssub.s32 %s24, 2
      // Predicated region
      $region101: #{model_forward.4} parent=99 // pred_check
        %p3719 = pneg %p436
      $region102: #{model_forward.4} parent=99 // pred_check_branch
        %3721 = sbr.rel (%p3719) target = $region104
      $region103: #{model_forward.4} parent=99 // pred_region
        %p3722 = scmp.lt.s32.totalorder %s30, 1
        %s3723 = scalar_select %p3722, %s30, 1
        %s3724 = smul.addr %s3723, 2
        %s3725 = smul.addr %s3724, 8
        %s3726 = scalar_lea.vmem %s18, %s3725
      $region104: #{model_forward.4} parent=99 // pred_fallthru
        _
    $region100: #{model_forward.4} parent=5 // pred_fallthru
      _
  $region6: #{model_forward.4} parent=0 // loop_footer
    %s28 = sadd.s32 1, %s24
  $region7: #{model_forward.4} parent=0 // loop_footer_branch
    %23 = sbr.rel target = $region3
  $region8: #{model_forward.4} parent=0 // loop_exit
    _

// kernel: model_forward.7
$region0: #{model_forward.7}
  #allocation0 [shape = 'u32[]', space=smem, size = 0x4, offset = 0x4, fixed_abs, tag = 'smem constant byte address 0x4 - core index']
  #allocation1 [shape = 'u32[144,128]{1,0:T(1,128)}', space=vmem, size = 0x12000, scoped, tag = 'internal scratch']
  %s0 = inlined_call_operand.vmem [shape: f32[34,192], index: 0, kind: input, shape index: {}]
  %s1 = inlined_call_operand.vmem [shape: f32[34,4], index: 1, kind: input, shape index: {}]
  %s2 = inlined_call_operand.vmem [shape: f32[1,192], index: 2, kind: input, shape index: {}]
  %s3 = inlined_call_operand.vmem [shape: f32[1,192], index: 3, kind: input, shape index: {}]
  %s4 = inlined_call_operand.vmem [shape: f32[34,3], index: 4, kind: output, shape index: {}]
  %s5 = sld [smem:[#allocation0]]
  $region26: #{model_forward.7} parent=0
    _
  %s7 = ssub.s32 1, %s5
  %s8 = scalar_select 0, %s7, %s5
  // Predicated region
  $region2: #{model_forward.7} parent=0 // pred_check
    _
  $region3: #{model_forward.7} parent=0 // pred_check_branch
    %10 = sbr.rel (0) target = $region5
  $region4: #{model_forward.7} parent=0 // pred_region
    _
  $region5: #{model_forward.7} parent=0 // pred_fallthru
    _
  // Predicated region
  $region6: #{model_forward.7} parent=0 // pred_check
    _
  $region7: #{model_forward.7} parent=0 // pred_check_branch
    %12 = sbr.rel (0) target = $region9
  $region8: #{model_forward.7} parent=0 // pred_region
    _
  $region9: #{model_forward.7} parent=0 // pred_fallthru
    _
  // Predicated region
  $region10: #{model_forward.7} parent=0 // pred_check
    _
  $region11: #{model_forward.7} parent=0 // pred_check_branch
    %14 = sbr.rel (0) target = $region13
  $region12: #{model_forward.7} parent=0 // pred_region
    _
  $region13: #{model_forward.7} parent=0 // pred_fallthru
    _
  // Predicated region
  $region14: #{model_forward.7} parent=0 // pred_check
    _
  $region15: #{model_forward.7} parent=0 // pred_check_branch
    %16 = sbr.rel (0) target = $region17
  $region16: #{model_forward.7} parent=0 // pred_region
    _
  $region17: #{model_forward.7} parent=0 // pred_fallthru
    _
  %v17 = vld [vmem:[%s0] sm:$0xff]
  %v18 = vld [vmem:[%s0 + $0x8] sm:$0xff]
  %v19 = vld [vmem:[%s0 + $0x10] sm:$0xff]
  %v20 = vld [vmem:[%s0 + $0x18] sm:$0xff]
  %v21 = vld [vmem:[%s0 + $0x20] sm:$0xff]
  %v22 = vld [vmem:[%s0 + $0x28] sm:$0xff]
  %v23 = vld [vmem:[%s0 + $0x30] sm:$0xff]
  %v24 = vld [vmem:[%s0 + $0x38] sm:$0xff]
  %v25 = vld [vmem:[%s0 + $0x40] sm:$0x3]
  %v26 = vld [vmem:[%s0 + $0x48] sm:$0x3]
  %vm27 = vcmask 523264
  %v28 = vsel %vm27, %v18, -inf
  %v29 = vmax.f32 %v17, %v28
  %30 = vmax.xlane.f32.xlu0 %v29
  %v31 = vpop.xlane.xlu0 %30
  %v32 = vsel %vm27, %v20, -inf
  %v33 = vmax.f32 %v19, %v32
  %34 = vmax.xlane.f32.xlu0 %v33
  %v35 = vpop.xlane.xlu0 %34
  %v36 = vsel %vm27, %v22, -inf
  %v37 = vmax.f32 %v21, %v36
  %38 = vmax.xlane.f32.xlu0 %v37
  %v39 = vpop.xlane.xlu0 %38
  %v40 = vsel %vm27, %v24, -inf
  %v41 = vmax.f32 %v23, %v40
  %42 = vmax.xlane.f32.xlu0 %v41
  %v43 = vpop.xlane.xlu0 %42
  %vm44 = vcmask 1041408
  %v45 = vsel %vm44, %v25, -inf
  %vm46 = vcmask 517120
  %v47 = vsel %vm46, %v26, -inf
  %v48 = vmax.f32 %v45, %v47
  %49 = vmax.xlane.f32.xlu0 %v48
  %v50 = vpop.xlane.xlu0 %49
  %vm51 = vcmp.ge.f32.partialorder %v17, %v31
  %vm52 = vcmp.ge.f32.partialorder %v18, %v31
  %vm53 = vcmp.ge.f32.partialorder %v19, %v35
  %vm54 = vcmp.ge.f32.partialorder %v20, %v35
  %vm55 = vcmp.ge.f32.partialorder %v21, %v39
  %vm56 = vcmp.ge.f32.partialorder %v22, %v39
  %vm57 = vcmp.ge.f32.partialorder %v23, %v43
  %vm58 = vcmp.ge.f32.partialorder %v24, %v43
  %vm59 = vcmp.ge.f32.partialorder %v25, %v50
  %vm60 = vcmp.ge.f32.partialorder %v26, %v50
  %v61 = vld [vmem:[%s3] sm:$0x3]
  %v63 = vlaneseq
  %v64 = vshrl.u32 %v63, 7
  %v65 = vsub.s32 0, %v64
  %v66 = vrot.slane %v61, %v65
  %v67 = vlaneseq
  %v68 = vshrl.u32 %v67, 7
  %v69 = vsub.s32 1, %v68
  %v70 = vrot.slane %v61, %v69
  %v73 = vsel %vm51, %v66, 1e+09
  %v74 = vsel %vm52, %v70, 1e+09
  %v75 = vsel %vm53, %v66, 1e+09
  %v76 = vsel %vm54, %v70, 1e+09
  %v77 = vsel %vm55, %v66, 1e+09
  %v78 = vsel %vm56, %v70, 1e+09
  %v79 = vsel %vm57, %v66, 1e+09
  %v80 = vsel %vm58, %v70, 1e+09
  %v81 = vsel %vm59, %v66, 1e+09
  %v82 = vsel %vm60, %v70, 1e+09
  %v83 = vsel %vm27, %v74, inf
  %v84 = vmin.f32 %v73, %v83
  %85 = vmin.xlane.f32.xlu0 %v84
  %v86 = vpop.xlane.xlu0 %85
  %v87 = vsel %vm27, %v76, inf
  %v88 = vmin.f32 %v75, %v87
  %89 = vmin.xlane.f32.xlu0 %v88
  %v90 = vpop.xlane.xlu0 %89
  %v91 = vsel %vm27, %v78, inf
  %v92 = vmin.f32 %v77, %v91
  %93 = vmin.xlane.f32.xlu0 %v92
  %v94 = vpop.xlane.xlu0 %93
  %v95 = vsel %vm27, %v80, inf
  %v96 = vmin.f32 %v79, %v95
  %97 = vmin.xlane.f32.xlu0 %v96
  %v98 = vpop.xlane.xlu0 %97
  %v99 = vsel %vm44, %v81, inf
  %v100 = vsel %vm46, %v82, inf
  %v101 = vmin.f32 %v99, %v100
  %102 = vmin.xlane.f32.xlu0 %v101
  %v103 = vpop.xlane.xlu0 %102
  %v104 = vld [vmem:[%s2] sm:$0x3]
  %v106 = vlaneseq
  %v107 = vshrl.u32 %v106, 7
  %v108 = vsub.s32 0, %v107
  %v109 = vrot.slane %v104, %v108
  %v110 = vlaneseq
  %v111 = vshrl.u32 %v110, 7
  %v112 = vsub.s32 1, %v111
  %v113 = vrot.slane %v104, %v112
  %v116 = vsel %vm51, %v109, 1e+09
  %v117 = vsel %vm52, %v113, 1e+09
  %v118 = vsel %vm53, %v109, 1e+09
  %v119 = vsel %vm54, %v113, 1e+09
  %v120 = vsel %vm55, %v109, 1e+09
  %v121 = vsel %vm56, %v113, 1e+09
  %v122 = vsel %vm57, %v109, 1e+09
  %v123 = vsel %vm58, %v113, 1e+09
  %v124 = vsel %vm59, %v109, 1e+09
  %v125 = vsel %vm60, %v113, 1e+09
  %v126 = vsel %vm27, %v117, inf
  %v127 = vmin.f32 %v116, %v126
  %128 = vmin.xlane.f32.xlu0 %v127
  %v129 = vpop.xlane.xlu0 %128
  %v130 = vsel %vm27, %v119, inf
  %v131 = vmin.f32 %v118, %v130
  %132 = vmin.xlane.f32.xlu0 %v131
  %v133 = vpop.xlane.xlu0 %132
  %v134 = vsel %vm27, %v121, inf
  %v135 = vmin.f32 %v120, %v134
  %136 = vmin.xlane.f32.xlu0 %v135
  %v137 = vpop.xlane.xlu0 %136
  %v138 = vsel %vm27, %v123, inf
  %v139 = vmin.f32 %v122, %v138
  %140 = vmin.xlane.f32.xlu0 %v139
  %v141 = vpop.xlane.xlu0 %140
  %v142 = vsel %vm44, %v124, inf
  %v143 = vsel %vm46, %v125, inf
  %v144 = vmin.f32 %v142, %v143
  %145 = vmin.xlane.f32.xlu0 %v144
  %v146 = vpop.xlane.xlu0 %145
  %v147 = vld [vmem:[%s1] sm:$0xff]
  %v148 = vld [vmem:[%s1 + $0x8] sm:$0xff]
  %v149 = vld [vmem:[%s1 + $0x10] sm:$0xff]
  %v150 = vld [vmem:[%s1 + $0x18] sm:$0xff]
  %v151 = vld [vmem:[%s1 + $0x20] sm:$0x3]
  %v152 = vmul.f32 %v86, 0.083333336
  %v153 = vmul.f32 %v90, 0.083333336
  %v154 = vmul.f32 %v94, 0.083333336
  %v155 = vmul.f32 %v98, 0.083333336
  %v156 = vmul.f32 %v103, 0.083333336
  %162 = vrot.lane.b32.xlu0 %v147, 2
  %v163 = vpop.permute.xlu0 %162
  %164 = vrot.lane.b32.xlu0 %v148, 2
  %v165 = vpop.permute.xlu0 %164
  %166 = vrot.lane.b32.xlu0 %v149, 2
  %v167 = vpop.permute.xlu0 %166
  %168 = vrot.lane.b32.xlu0 %v150, 2
  %v169 = vpop.permute.xlu0 %168
  %170 = vrot.lane.b32.xlu0 %v151, 2
  %v171 = vpop.permute.xlu0 %170
  %v177 = vsub.f32 %v147, %v163
  %v178 = vsub.f32 %v148, %v165
  %v179 = vsub.f32 %v149, %v167
  %v180 = vsub.f32 %v150, %v169
  %v181 = vsub.f32 %v151, %v171
  %v182 = vmul.f32 %v152, %v177
  %v183 = vmul.f32 %v153, %v178
  %v184 = vmul.f32 %v154, %v179
  %v185 = vmul.f32 %v155, %v180
  %v186 = vmul.f32 %v156, %v181
  %v187 = vadd.f32 %v182, %v163
  %v188 = vadd.f32 %v183, %v165
  %v189 = vadd.f32 %v184, %v167
  %v190 = vadd.f32 %v185, %v169
  %v191 = vadd.f32 %v186, %v171
  %v192 = vmul.f32 %v129, 0.0625
  %v193 = vmul.f32 %v133, 0.0625
  %v194 = vmul.f32 %v137, 0.0625
  %v195 = vmul.f32 %v141, 0.0625
  %v196 = vmul.f32 %v146, 0.0625
  %v197 = vmul.f32 %v192, %v177
  %v198 = vmul.f32 %v193, %v178
  %v199 = vmul.f32 %v194, %v179
  %v200 = vmul.f32 %v195, %v180
  %v201 = vmul.f32 %v196, %v181
  %v202 = vadd.f32 %v197, %v163
  %v203 = vadd.f32 %v198, %v165
  %v204 = vadd.f32 %v199, %v167
  %v205 = vadd.f32 %v200, %v169
  %v206 = vadd.f32 %v201, %v171
  %212 = vrot.lane.b32.xlu0 %v187, 126
  %v213 = vpop.permute.xlu0 %212
  %214 = vrot.lane.b32.xlu0 %v188, 126
  %v215 = vpop.permute.xlu0 %214
  %216 = vrot.lane.b32.xlu0 %v189, 126
  %v217 = vpop.permute.xlu0 %216
  %218 = vrot.lane.b32.xlu0 %v190, 126
  %v219 = vpop.permute.xlu0 %218
  %220 = vrot.lane.b32.xlu0 %v191, 126
  %v221 = vpop.permute.xlu0 %220
  %232 = vrot.lane.b32.xlu0 %v202, 126
  %v233 = vpop.permute.xlu0 %232
  %234 = vrot.lane.b32.xlu0 %v203, 126
  %v235 = vpop.permute.xlu0 %234
  %236 = vrot.lane.b32.xlu0 %v204, 126
  %v237 = vpop.permute.xlu0 %236
  %238 = vrot.lane.b32.xlu0 %v205, 126
  %v239 = vpop.permute.xlu0 %238
  %240 = vrot.lane.b32.xlu0 %v206, 126
  %v241 = vpop.permute.xlu0 %240
  %vm247 = vcmask 7168
  %v248 = vsel %vm247, %v213, %v233
  %v249 = vsel %vm247, %v215, %v235
  %v250 = vsel %vm247, %v217, %v237
  %v251 = vsel %vm247, %v219, %v239
  %v252 = vsel %vm247, %v221, %v241
  %vm253 = vcmask 15360
  %v254 = vsel %vm253, %v248, %v31
  %v255 = vsel %vm253, %v249, %v35
  %v256 = vsel %vm253, %v250, %v39
  %v257 = vsel %vm253, %v251, %v43
  %v258 = vsel %vm253, %v252, %v50
  %vm259 = vcmask 23552
  %260 = vst.msk [vmem:[%s4] sm:$0xff] %vm259, %v254
  %261 = vst.msk [vmem:[%s4 + $0x8] sm:$0xff] %vm259, %v255
  %262 = vst.msk [vmem:[%s4 + $0x10] sm:$0xff] %vm259, %v256
  %263 = vst.msk [vmem:[%s4 + $0x18] sm:$0xff] %vm259, %v257
  %vm264 = vcmask 17408
  %265 = vst.msk [vmem:[%s4 + $0x20] sm:$0x3] %vm264, %v258
  // Predicated region
  $region18: #{model_forward.7} parent=0 // pred_check
    _
  $region19: #{model_forward.7} parent=0 // pred_check_branch
    %267 = sbr.rel (0) target = $region21
  $region20: #{model_forward.7} parent=0 // pred_region
    _
  $region21: #{model_forward.7} parent=0 // pred_fallthru
    _
  // Predicated region
  $region22: #{model_forward.7} parent=0 // pred_check
    _
  $region23: #{model_forward.7} parent=0 // pred_check_branch
    %269 = sbr.rel (0) target = $region25
  $region24: #{model_forward.7} parent=0 // pred_region
    _
  $region25: #{model_forward.7} parent=0 // pred_fallthru
    _

</llo_original>
